<compile_context>
chip_gen: v7x
topology: tpu7x:2x2x1
jax: 0.10.0
libtpu: 0.0.40
codegen_flags: <defaults>
</compile_context>

<pallas_src>
import numpy as np
import jax
import jax.numpy as jnp
from jax.experimental import pallas as pl
from jax.experimental.pallas import tpu as pltpu


# ------------------------------ Pallas kernel ------------------------------ #

def _net_kernel(x_ref, w1_ref, b1_ref, w2_ref, b2_ref, wf1_ref, bf1_ref,
                wf2_ref, bf2_ref, out_ref, h1_s):
    f32, bf16 = jnp.float32, jnp.bfloat16
    tb = out_ref.shape[0]

    # ---- conv1 + 2x2 max-pool: ONE MXU issue --------------------------------
    # LHS rows = (pooled output row p, image n); K = 6 input rows * 28 = 168.
    # Weight lanes = (row-parity, col-parity, pooled-col, channel), so both
    # pool reductions are 256-aligned lane maxes (no selection matmuls).
    xk = x_ref[...].reshape(12 * tb, 168)                        # bf16, free
    y1 = jnp.dot(xk, w1_ref[...], preferred_element_type=f32)    # (12*tb,1024)
    m1 = jnp.maximum(jnp.maximum(y1[:, 0:256], y1[:, 256:512]),
                     jnp.maximum(y1[:, 512:768], y1[:, 768:1024]))
    h1 = jnp.maximum(m1 + b1_ref[...], 0.0).astype(bf16)         # (12*tb, 256)

    # Stash pooled conv1 activations as (p//2, p%2, n, 256): conv2's 6 row
    # taps become contiguous, tb-aligned leading-dim slices of this scratch.
    h1_s[...] = h1.reshape(6, 2, tb, 256)

    # ---- conv2 + 2x2 max-pool: ONE MXU issue (K = 6*256 = 1536) -------------
    bands = []
    for j in range(6):                      # tap row j of the 6-row window
        band = h1_s[pl.ds(j // 2, 4), j % 2]                     # (4, tb, 256)
        bands.append(band.reshape(4 * tb, 256))
    lhs2 = jnp.concatenate(bands, axis=-1)                       # (4*tb, 1536)
    y2 = jnp.dot(lhs2, w2_ref[...], preferred_element_type=f32)  # (4*tb, 512)
    m2 = jnp.maximum(jnp.maximum(y2[:, 0:128], y2[:, 128:256]),
                     jnp.maximum(y2[:, 256:384], y2[:, 384:512]))
    h2 = jnp.maximum(m2 + b2_ref[...], 0.0).astype(bf16)         # (4*tb, 128)

    # ---- flatten + fc1 + ReLU + fc2: TWO MXU issues --------------------------
    # h2 rows are (spatial row hh, image n); pick each hh (free leading-dim
    # index) and lane-concat at 128-aligned boundaries -> (tb, 512).
    h2r = h2.reshape(4, tb, 128)
    fcin = jnp.concatenate([h2r[0], h2r[1], h2r[2], h2r[3]], axis=-1)
    a1 = jnp.dot(fcin, wf1_ref[...], preferred_element_type=f32) + bf1_ref[...]
    hf = jnp.maximum(a1, 0.0).astype(bf16)                       # (tb, 128)
    out = jnp.dot(hf, wf2_ref[...], preferred_element_type=f32) + bf2_ref[...]
    out_ref[...] = out.astype(out_ref.dtype)                     # (tb, 128)


# --------------------- host-side weight re-arrangement --------------------- #

def _pack_constants(params):
    """One-time host prep: the kw/kh contractions, both 2x2 max-pools, the
    channel packing and the x.view(-1, 320) flatten are all folded into the
    weight matrices, so the kernel is just 4 matmuls + lane maxes."""
    f32 = np.float32
    w1 = np.asarray(params["conv1_w"], f32)      # (10, 1, 5, 5)
    b1 = np.asarray(params["conv1_b"], f32)
    w2 = np.asarray(params["conv2_w"], f32)      # (20, 10, 5, 5)
    b2 = np.asarray(params["conv2_b"], f32)
    fw1 = np.asarray(params["fc1_w"], f32)       # (50, 320)
    fb1 = np.asarray(params["fc1_b"], f32)
    fw2 = np.asarray(params["fc2_w"], f32)       # (10, 50)
    fb2 = np.asarray(params["fc2_b"], f32)

    # conv1: rows = j*28 + iw (j = input row inside the 6-row window of pooled
    # output row p); cols = rpo*512 + half*256 + owp*16 + oc for conv output
    # (oh = 2p + rpo, ow = 2*owp + half, oc).
    w1k = np.zeros((168, 1024), f32)
    for rpo in range(2):
        for half in range(2):
            for owp in range(12):
                col = rpo * 512 + half * 256 + owp * 16
                for kh in range(5):
                    for kw in range(5):
                        row = (rpo + kh) * 28 + 2 * owp + half + kw
                        w1k[row, col:col + 10] = w1[:, 0, kh, kw]
    b1p = np.zeros((1, 256), f32)
    for owp in range(12):
        b1p[0, owp * 16:owp * 16 + 10] = b1

    # conv2: rows = j*256 + c*16 + ci (j = conv1-pooled row within the 6-row
    # window of pooled conv2 row p2, c = conv1-pooled col, ci = conv1 channel);
    # cols = (rpo2*2 + half2)*128 + ow2p*32 + oc2.
    w2k = np.zeros((1536, 512), f32)
    for rpo2 in range(2):
        for half2 in range(2):
            for ow2p in range(4):
                col = (rpo2 * 2 + half2) * 128 + ow2p * 32
                for kh in range(5):
                    for kw in range(5):
                        for ci in range(10):
                            row = ((rpo2 + kh) * 256
                                   + (2 * ow2p + half2 + kw) * 16 + ci)
                            w2k[row, col:col + 20] = w2[:, ci, kh, kw]
    b2p = np.zeros((1, 128), f32)
    for ow2p in range(4):
        b2p[0, ow2p * 32:ow2p * 32 + 20] = b2

    # fc1 with the PyTorch channel-major flatten folded in.  The kernel's FC
    # input lane layout is hh*128 + ww*32 + c; PyTorch index is c*16 + hh*4 + ww.
    wf1 = np.zeros((512, 128), f32)
    for hh in range(4):
        for ww in range(4):
            for c in range(20):
                wf1[hh * 128 + ww * 32 + c, :50] = fw1[:, c * 16 + hh * 4 + ww]
    bf1p = np.zeros((1, 128), f32)
    bf1p[0, :50] = fb1

    wf2 = np.zeros((128, 128), f32)
    wf2[:50, :10] = fw2.T
    bf2p = np.zeros((1, 128), f32)
    bf2p[0, :10] = fb2

    bf16 = jnp.bfloat16
    return (jnp.asarray(w1k, bf16), jnp.asarray(b1p),
            jnp.asarray(w2k, bf16), jnp.asarray(b2p),
            jnp.asarray(wf1, bf16), jnp.asarray(bf1p),
            jnp.asarray(wf2, bf16), jnp.asarray(bf2p))


# --------------------------------- wrapper --------------------------------- #

def build_forward(params, block_batch=16):
    """Returns a jitted forward(x_nchw) -> (N, 10) logits using one fused
    Pallas kernel gridded over batch tiles of `block_batch` images.
    block_batch=16 targets v5e (M multiples of 128 at conv1); sweep to 32 on
    v6e/v7x when batches are large enough to keep the grid >= 2 steps."""
    tb = block_batch
    assert tb % 8 == 0, "block_batch must be a multiple of 8"
    w1k, b1p, w2k, b2p, wf1, bf1p, wf2, bf2p = _pack_constants(params)

    @jax.jit
    def forward(x_nchw):
        n = x_nchw.shape[0]
        npad = ((n + tb - 1) // tb) * tb
        x = x_nchw.reshape(n, 28, 28).astype(jnp.float32)
        x = jnp.pad(x, ((0, npad - n), (0, 0), (0, 0))).astype(jnp.bfloat16)
        # Cheap one-time tap packing on the raw input (XLA side):
        #   xk[p, n, j*28 + iw] = x[n, 2p + j, iw]   p in 0..11, j in 0..5
        # -> inside the kernel conv1+pool is a single aligned matmul, no
        #    unaligned sublane slices and no per-tap casts.
        xk = jnp.stack([x[:, 2 * p:2 * p + 6, :].reshape(npad, 168)
                        for p in range(12)], axis=0)          # (12, npad, 168)

        out = pl.pallas_call(
            _net_kernel,
            out_shape=jax.ShapeDtypeStruct((npad, 128), jnp.float32),
            grid=(npad // tb,),
            in_specs=[
                pl.BlockSpec((12, tb, 168), lambda i: (0, i, 0)),   # x taps
                pl.BlockSpec((168, 1024), lambda i: (0, 0)),        # conv1 W
                pl.BlockSpec((1, 256), lambda i: (0, 0)),           # conv1 b
                pl.BlockSpec((1536, 512), lambda i: (0, 0)),        # conv2 W
                pl.BlockSpec((1, 128), lambda i: (0, 0)),           # conv2 b
                pl.BlockSpec((512, 128), lambda i: (0, 0)),         # fc1 W
                pl.BlockSpec((1, 128), lambda i: (0, 0)),           # fc1 b
                pl.BlockSpec((128, 128), lambda i: (0, 0)),         # fc2 W
                pl.BlockSpec((1, 128), lambda i: (0, 0)),           # fc2 b
            ],
            out_specs=pl.BlockSpec((tb, 128), lambda i: (i, 0)),
            scratch_shapes=[pltpu.VMEM((6, 2, tb, 256), jnp.bfloat16)],
            compiler_params=pltpu.CompilerParams(
                dimension_semantics=("parallel",)),
        )(xk, w1k, b1p, w2k, b2p, wf1, bf1p, wf2, bf2p)
        return out[:n, :10]            # lane-dense (tb,128) store, slice logits

    return forward


# ----------------------------- params / reference -------------------------- #

def init_params(key):
    # Deterministic PyTorch-style uniform(-1/sqrt(fan_in), 1/sqrt(fan_in)).
    def uniform(k, shape, fan_in):
        bound = 1.0 / float(fan_in) ** 0.5
        return jax.random.uniform(k, shape, jnp.float32, -bound, bound)

    ks = jax.random.split(key, 8)
    return {
        "conv1_w": uniform(ks[0], (10, 1, 5, 5), 1 * 5 * 5),
        "conv1_b": uniform(ks[1], (10,), 1 * 5 * 5),
        "conv2_w": uniform(ks[2], (20, 10, 5, 5), 10 * 5 * 5),
        "conv2_b": uniform(ks[3], (20,), 10 * 5 * 5),
        "fc1_w": uniform(ks[4], (50, 320), 320),
        "fc1_b": uniform(ks[5], (50,), 320),
        "fc2_w": uniform(ks[6], (10, 50), 50),
        "fc2_b": uniform(ks[7], (10,), 50),
    }


def reference_forward(params, x):
    # Pure-JAX f32 reference for correctness checking.
    y = jax.lax.conv_general_dilated(
        x, params["conv1_w"], (1, 1), "VALID",
        dimension_numbers=("NCHW", "OIHW", "NCHW"))
    y = y + params["conv1_b"][None, :, None, None]
    y = jax.lax.reduce_window(y, -jnp.inf, jax.lax.max,
                              (1, 1, 2, 2), (1, 1, 2, 2), "VALID")
    y = jnp.maximum(y, 0.0)
    y = jax.lax.conv_general_dilated(
        y, params["conv2_w"], (1, 1), "VALID",
        dimension_numbers=("NCHW", "OIHW", "NCHW"))
    y = y + params["conv2_b"][None, :, None, None]
    y = jax.lax.reduce_window(y, -jnp.inf, jax.lax.max,
                              (1, 1, 2, 2), (1, 1, 2, 2), "VALID")
    y = jnp.maximum(y, 0.0)
    y = y.reshape(y.shape[0], 320)
    y = jnp.maximum(y @ params["fc1_w"].T + params["fc1_b"], 0.0)
    return y @ params["fc2_w"].T + params["fc2_b"]


if __name__ == "__main__":
    key = jax.random.PRNGKey(0)
    pkey, xkey = jax.random.split(key)
    params = init_params(pkey)

    # N > TB and not a multiple of TB: exercises multiple grid steps (so both
    # v7x TensorCores get work) and the batch-padding path.
    x = jax.random.normal(xkey, (20, 1, 28, 28), jnp.float32)

    forward = build_forward(params, block_batch=16)
    out = jax.block_until_ready(forward(x))
    assert out.shape == (20, 10) and out.dtype == jnp.float32

    ref = jax.block_until_ready(reference_forward(params, x))
    # bf16 MXU operands / activations (f32 accumulation) -> loosened tolerance.
    err = float(jnp.max(jnp.abs(out - ref)))
    assert jnp.allclose(out, ref, atol=3e-2, rtol=3e-2), (
        f"mismatch vs reference: max abs err {err}")

    print("KERNEL_OK")
</pallas_src>

<mosaic_0001>
module attributes {stable_mosaic.version = 11 : i64} {
  func.func @_net_kernel(%arg0: i32, %arg1: memref<12x16x168xbf16, #tpu.memory_space<vmem>>, %arg2: memref<168x1024xbf16, #tpu.memory_space<vmem>>, %arg3: memref<1x256xf32, #tpu.memory_space<vmem>>, %arg4: memref<1536x512xbf16, #tpu.memory_space<vmem>>, %arg5: memref<1x128xf32, #tpu.memory_space<vmem>>, %arg6: memref<512x128xbf16, #tpu.memory_space<vmem>>, %arg7: memref<1x128xf32, #tpu.memory_space<vmem>>, %arg8: memref<128x128xbf16, #tpu.memory_space<vmem>>, %arg9: memref<1x128xf32, #tpu.memory_space<vmem>>, %arg10: memref<16x128xf32, #tpu.memory_space<vmem>>, %arg11: memref<6x2x16x256xbf16, #tpu.memory_space<vmem>>) attributes {dimension_semantics = [#tpu.dimension_semantics<parallel>], iteration_bounds = array<i64: 2>, scalar_prefetch = 0 : i64, scratch_operands = 1 : i64, tpu.core_type = #tpu.core_type<tc>, window_params = [{transform_indices = @transform_0, window_bounds = array<i64: 12, 16, 168>}, {pipeline_mode = #tpu.pipeline_mode<synchronous>, transform_indices = @transform_1, window_bounds = array<i64: 168, 1024>}, {pipeline_mode = #tpu.pipeline_mode<synchronous>, transform_indices = @transform_2, window_bounds = array<i64: 1, 256>}, {pipeline_mode = #tpu.pipeline_mode<synchronous>, transform_indices = @transform_3, window_bounds = array<i64: 1536, 512>}, {pipeline_mode = #tpu.pipeline_mode<synchronous>, transform_indices = @transform_4, window_bounds = array<i64: 1, 128>}, {pipeline_mode = #tpu.pipeline_mode<synchronous>, transform_indices = @transform_5, window_bounds = array<i64: 512, 128>}, {pipeline_mode = #tpu.pipeline_mode<synchronous>, transform_indices = @transform_6, window_bounds = array<i64: 1, 128>}, {pipeline_mode = #tpu.pipeline_mode<synchronous>, transform_indices = @transform_7, window_bounds = array<i64: 128, 128>}, {pipeline_mode = #tpu.pipeline_mode<synchronous>, transform_indices = @transform_8, window_bounds = array<i64: 1, 128>}, {transform_indices = @transform_9, window_bounds = array<i64: 16, 128>}]} {
    %c0 = arith.constant 0 : index
    %c0_0 = arith.constant 0 : index
    %c0_1 = arith.constant 0 : index
    %0 = vector.load %arg1[%c0, %c0_0, %c0_1] : memref<12x16x168xbf16, #tpu.memory_space<vmem>>, vector<12x16x168xbf16>
    %1 = vector.shape_cast %0 : vector<12x16x168xbf16> to vector<192x168xbf16>
    %c0_2 = arith.constant 0 : index
    %c0_3 = arith.constant 0 : index
    %2 = vector.load %arg2[%c0_2, %c0_3] : memref<168x1024xbf16, #tpu.memory_space<vmem>>, vector<168x1024xbf16>
    %cst = arith.constant dense<0.000000e+00> : vector<192x1024xf32>
    %3 = tpu.matmul %1, %2, %cst {dimension_numbers = #tpu.dot_dimension_numbers<[1], [0], [0], [1], [0, 0, 1, 1], [], []>} : vector<192x168xbf16>, vector<168x1024xbf16>, vector<192x1024xf32> -> vector<192x1024xf32>
    %4 = vector.extract_strided_slice %3 {offsets = [0, 0], sizes = [192, 256], strides = [1, 1]} : vector<192x1024xf32> to vector<192x256xf32>
    %5 = vector.extract_strided_slice %3 {offsets = [0, 256], sizes = [192, 256], strides = [1, 1]} : vector<192x1024xf32> to vector<192x256xf32>
    %6 = arith.maximumf %4, %5 : vector<192x256xf32>
    %7 = vector.extract_strided_slice %3 {offsets = [0, 512], sizes = [192, 256], strides = [1, 1]} : vector<192x1024xf32> to vector<192x256xf32>
    %8 = vector.extract_strided_slice %3 {offsets = [0, 768], sizes = [192, 256], strides = [1, 1]} : vector<192x1024xf32> to vector<192x256xf32>
    %9 = arith.maximumf %7, %8 : vector<192x256xf32>
    %10 = arith.maximumf %6, %9 : vector<192x256xf32>
    %c0_4 = arith.constant 0 : index
    %c0_5 = arith.constant 0 : index
    %11 = vector.load %arg3[%c0_4, %c0_5] : memref<1x256xf32, #tpu.memory_space<vmem>>, vector<1x256xf32>
    %12 = vector.broadcast %11 : vector<1x256xf32> to vector<192x256xf32>
    %13 = arith.addf %10, %12 : vector<192x256xf32>
    %cst_6 = arith.constant 0.000000e+00 : f32
    %14 = vector.broadcast %cst_6 : f32 to vector<192x256xf32>
    %15 = arith.maximumf %13, %14 : vector<192x256xf32>
    %16 = arith.truncf %15 : vector<192x256xf32> to vector<192x256xbf16>
    %17 = vector.shape_cast %16 : vector<192x256xbf16> to vector<6x2x16x256xbf16>
    %c0_7 = arith.constant 0 : index
    %c0_8 = arith.constant 0 : index
    %c0_9 = arith.constant 0 : index
    %c0_10 = arith.constant 0 : index
    %18 = vector.load %arg11[%c0_7, %c0_8, %c0_9, %c0_10] : memref<6x2x16x256xbf16, #tpu.memory_space<vmem>>, vector<6x2x16x256xbf16>
    tpu.vector_store %arg11[%c0_7, %c0_8, %c0_9, %c0_10], %17 {strides = array<i32>} : memref<6x2x16x256xbf16, #tpu.memory_space<vmem>>, vector<6x2x16x256xbf16>,
    %c0_11 = arith.constant 0 : index
    %c0_12 = arith.constant 0 : index
    %c0_13 = arith.constant 0 : index
    %c0_14 = arith.constant 0 : index
    %19 = vector.load %arg11[%c0_11, %c0_12, %c0_13, %c0_14] : memref<6x2x16x256xbf16, #tpu.memory_space<vmem>>, vector<4x1x16x256xbf16>
    %20 = vector.shape_cast %19 : vector<4x1x16x256xbf16> to vector<4x16x256xbf16>
    %21 = vector.shape_cast %20 : vector<4x16x256xbf16> to vector<64x256xbf16>
    %c0_15 = arith.constant 0 : index
    %c1 = arith.constant 1 : index
    %c0_16 = arith.constant 0 : index
    %c0_17 = arith.constant 0 : index
    %22 = vector.load %arg11[%c0_15, %c1, %c0_16, %c0_17] : memref<6x2x16x256xbf16, #tpu.memory_space<vmem>>, vector<4x1x16x256xbf16>
    %23 = vector.shape_cast %22 : vector<4x1x16x256xbf16> to vector<4x16x256xbf16>
    %24 = vector.shape_cast %23 : vector<4x16x256xbf16> to vector<64x256xbf16>
    %c1_18 = arith.constant 1 : index
    %c0_19 = arith.constant 0 : index
    %c0_20 = arith.constant 0 : index
    %c0_21 = arith.constant 0 : index
    %25 = vector.load %arg11[%c1_18, %c0_19, %c0_20, %c0_21] : memref<6x2x16x256xbf16, #tpu.memory_space<vmem>>, vector<4x1x16x256xbf16>
    %26 = vector.shape_cast %25 : vector<4x1x16x256xbf16> to vector<4x16x256xbf16>
    %27 = vector.shape_cast %26 : vector<4x16x256xbf16> to vector<64x256xbf16>
    %c1_22 = arith.constant 1 : index
    %c1_23 = arith.constant 1 : index
    %c0_24 = arith.constant 0 : index
    %c0_25 = arith.constant 0 : index
    %28 = vector.load %arg11[%c1_22, %c1_23, %c0_24, %c0_25] : memref<6x2x16x256xbf16, #tpu.memory_space<vmem>>, vector<4x1x16x256xbf16>
    %29 = vector.shape_cast %28 : vector<4x1x16x256xbf16> to vector<4x16x256xbf16>
    %30 = vector.shape_cast %29 : vector<4x16x256xbf16> to vector<64x256xbf16>
    %c2 = arith.constant 2 : index
    %c0_26 = arith.constant 0 : index
    %c0_27 = arith.constant 0 : index
    %c0_28 = arith.constant 0 : index
    %31 = vector.load %arg11[%c2, %c0_26, %c0_27, %c0_28] : memref<6x2x16x256xbf16, #tpu.memory_space<vmem>>, vector<4x1x16x256xbf16>
    %32 = vector.shape_cast %31 : vector<4x1x16x256xbf16> to vector<4x16x256xbf16>
    %33 = vector.shape_cast %32 : vector<4x16x256xbf16> to vector<64x256xbf16>
    %c2_29 = arith.constant 2 : index
    %c1_30 = arith.constant 1 : index
    %c0_31 = arith.constant 0 : index
    %c0_32 = arith.constant 0 : index
    %34 = vector.load %arg11[%c2_29, %c1_30, %c0_31, %c0_32] : memref<6x2x16x256xbf16, #tpu.memory_space<vmem>>, vector<4x1x16x256xbf16>
    %35 = vector.shape_cast %34 : vector<4x1x16x256xbf16> to vector<4x16x256xbf16>
    %36 = vector.shape_cast %35 : vector<4x16x256xbf16> to vector<64x256xbf16>
    %37 = tpu.concatenate %21, %24, %27, %30, %33, %36 in 1 : vector<64x256xbf16>, vector<64x256xbf16>, vector<64x256xbf16>, vector<64x256xbf16>, vector<64x256xbf16>, vector<64x256xbf16> -> vector<64x1536xbf16>
    %c0_33 = arith.constant 0 : index
    %c0_34 = arith.constant 0 : index
    %38 = vector.load %arg4[%c0_33, %c0_34] : memref<1536x512xbf16, #tpu.memory_space<vmem>>, vector<1536x512xbf16>
    %cst_35 = arith.constant dense<0.000000e+00> : vector<64x512xf32>
    %39 = tpu.matmul %37, %38, %cst_35 {dimension_numbers = #tpu.dot_dimension_numbers<[1], [0], [0], [1], [0, 0, 1, 1], [], []>} : vector<64x1536xbf16>, vector<1536x512xbf16>, vector<64x512xf32> -> vector<64x512xf32>
    %40 = vector.extract_strided_slice %39 {offsets = [0, 0], sizes = [64, 128], strides = [1, 1]} : vector<64x512xf32> to vector<64x128xf32>
    %41 = vector.extract_strided_slice %39 {offsets = [0, 128], sizes = [64, 128], strides = [1, 1]} : vector<64x512xf32> to vector<64x128xf32>
    %42 = arith.maximumf %40, %41 : vector<64x128xf32>
    %43 = vector.extract_strided_slice %39 {offsets = [0, 256], sizes = [64, 128], strides = [1, 1]} : vector<64x512xf32> to vector<64x128xf32>
    %44 = vector.extract_strided_slice %39 {offsets = [0, 384], sizes = [64, 128], strides = [1, 1]} : vector<64x512xf32> to vector<64x128xf32>
    %45 = arith.maximumf %43, %44 : vector<64x128xf32>
    %46 = arith.maximumf %42, %45 : vector<64x128xf32>
    %c0_36 = arith.constant 0 : index
    %c0_37 = arith.constant 0 : index
    %47 = vector.load %arg5[%c0_36, %c0_37] : memref<1x128xf32, #tpu.memory_space<vmem>>, vector<1x128xf32>
    %48 = vector.broadcast %47 : vector<1x128xf32> to vector<64x128xf32>
    %49 = arith.addf %46, %48 : vector<64x128xf32>
    %cst_38 = arith.constant 0.000000e+00 : f32
    %50 = vector.broadcast %cst_38 : f32 to vector<64x128xf32>
    %51 = arith.maximumf %49, %50 : vector<64x128xf32>
    %52 = arith.truncf %51 : vector<64x128xf32> to vector<64x128xbf16>
    %53 = vector.shape_cast %52 : vector<64x128xbf16> to vector<4x16x128xbf16>
    %54 = vector.extract_strided_slice %53 {offsets = [0, 0, 0], sizes = [1, 16, 128], strides = [1, 1, 1]} : vector<4x16x128xbf16> to vector<1x16x128xbf16>
    %55 = vector.shape_cast %54 : vector<1x16x128xbf16> to vector<16x128xbf16>
    %56 = vector.extract_strided_slice %53 {offsets = [1, 0, 0], sizes = [1, 16, 128], strides = [1, 1, 1]} : vector<4x16x128xbf16> to vector<1x16x128xbf16>
    %57 = vector.shape_cast %56 : vector<1x16x128xbf16> to vector<16x128xbf16>
    %58 = vector.extract_strided_slice %53 {offsets = [2, 0, 0], sizes = [1, 16, 128], strides = [1, 1, 1]} : vector<4x16x128xbf16> to vector<1x16x128xbf16>
    %59 = vector.shape_cast %58 : vector<1x16x128xbf16> to vector<16x128xbf16>
    %60 = vector.extract_strided_slice %53 {offsets = [3, 0, 0], sizes = [1, 16, 128], strides = [1, 1, 1]} : vector<4x16x128xbf16> to vector<1x16x128xbf16>
    %61 = vector.shape_cast %60 : vector<1x16x128xbf16> to vector<16x128xbf16>
    %62 = tpu.concatenate %55, %57, %59, %61 in 1 : vector<16x128xbf16>, vector<16x128xbf16>, vector<16x128xbf16>, vector<16x128xbf16> -> vector<16x512xbf16>
    %c0_39 = arith.constant 0 : index
    %c0_40 = arith.constant 0 : index
    %63 = vector.load %arg6[%c0_39, %c0_40] : memref<512x128xbf16, #tpu.memory_space<vmem>>, vector<512x128xbf16>
    %cst_41 = arith.constant dense<0.000000e+00> : vector<16x128xf32>
    %64 = tpu.matmul %62, %63, %cst_41 {dimension_numbers = #tpu.dot_dimension_numbers<[1], [0], [0], [1], [0, 0, 1, 1], [], []>} : vector<16x512xbf16>, vector<512x128xbf16>, vector<16x128xf32> -> vector<16x128xf32>
    %c0_42 = arith.constant 0 : index
    %c0_43 = arith.constant 0 : index
    %65 = vector.load %arg7[%c0_42, %c0_43] : memref<1x128xf32, #tpu.memory_space<vmem>>, vector<1x128xf32>
    %66 = vector.broadcast %65 : vector<1x128xf32> to vector<16x128xf32>
    %67 = arith.addf %64, %66 : vector<16x128xf32>
    %cst_44 = arith.constant 0.000000e+00 : f32
    %68 = vector.broadcast %cst_44 : f32 to vector<16x128xf32>
    %69 = arith.maximumf %67, %68 : vector<16x128xf32>
    %70 = arith.truncf %69 : vector<16x128xf32> to vector<16x128xbf16>
    %c0_45 = arith.constant 0 : index
    %c0_46 = arith.constant 0 : index
    %71 = vector.load %arg8[%c0_45, %c0_46] : memref<128x128xbf16, #tpu.memory_space<vmem>>, vector<128x128xbf16>
    %cst_47 = arith.constant dense<0.000000e+00> : vector<16x128xf32>
    %72 = tpu.matmul %70, %71, %cst_47 {dimension_numbers = #tpu.dot_dimension_numbers<[1], [0], [0], [1], [0, 0, 1, 1], [], []>} : vector<16x128xbf16>, vector<128x128xbf16>, vector<16x128xf32> -> vector<16x128xf32>
    %c0_48 = arith.constant 0 : index
    %c0_49 = arith.constant 0 : index
    %73 = vector.load %arg9[%c0_48, %c0_49] : memref<1x128xf32, #tpu.memory_space<vmem>>, vector<1x128xf32>
    %74 = vector.broadcast %73 : vector<1x128xf32> to vector<16x128xf32>
    %75 = arith.addf %72, %74 : vector<16x128xf32>
    %c0_50 = arith.constant 0 : index
    %c0_51 = arith.constant 0 : index
    %76 = vector.load %arg10[%c0_50, %c0_51] : memref<16x128xf32, #tpu.memory_space<vmem>>, vector<16x128xf32>
    tpu.vector_store %arg10[%c0_50, %c0_51], %75 {strides = array<i32>} : memref<16x128xf32, #tpu.memory_space<vmem>>, vector<16x128xf32>,
    return
  }
  func.func @transform_0(%arg0: i32) -> (i32, i32, i32) {
    %c0_i32 = arith.constant 0 : i32
    %c0_i32_0 = arith.constant 0 : i32
    %c0_i32_1 = arith.constant 0 : i32
    return %c0_i32, %arg0, %c0_i32_0 : i32, i32, i32
  }
  func.func @transform_1(%arg0: i32) -> (i32, i32) {
    %c0_i32 = arith.constant 0 : i32
    %c0_i32_0 = arith.constant 0 : i32
    %c0_i32_1 = arith.constant 0 : i32
    return %c0_i32, %c0_i32_0 : i32, i32
  }
  func.func @transform_2(%arg0: i32) -> (i32, i32) {
    %c0_i32 = arith.constant 0 : i32
    %c0_i32_0 = arith.constant 0 : i32
    %c0_i32_1 = arith.constant 0 : i32
    return %c0_i32, %c0_i32_0 : i32, i32
  }
  func.func @transform_3(%arg0: i32) -> (i32, i32) {
    %c0_i32 = arith.constant 0 : i32
    %c0_i32_0 = arith.constant 0 : i32
    %c0_i32_1 = arith.constant 0 : i32
    return %c0_i32, %c0_i32_0 : i32, i32
  }
  func.func @transform_4(%arg0: i32) -> (i32, i32) {
    %c0_i32 = arith.constant 0 : i32
    %c0_i32_0 = arith.constant 0 : i32
    %c0_i32_1 = arith.constant 0 : i32
    return %c0_i32, %c0_i32_0 : i32, i32
  }
  func.func @transform_5(%arg0: i32) -> (i32, i32) {
    %c0_i32 = arith.constant 0 : i32
    %c0_i32_0 = arith.constant 0 : i32
    %c0_i32_1 = arith.constant 0 : i32
    return %c0_i32, %c0_i32_0 : i32, i32
  }
  func.func @transform_6(%arg0: i32) -> (i32, i32) {
    %c0_i32 = arith.constant 0 : i32
    %c0_i32_0 = arith.constant 0 : i32
    %c0_i32_1 = arith.constant 0 : i32
    return %c0_i32, %c0_i32_0 : i32, i32
  }
  func.func @transform_7(%arg0: i32) -> (i32, i32) {
    %c0_i32 = arith.constant 0 : i32
    %c0_i32_0 = arith.constant 0 : i32
    %c0_i32_1 = arith.constant 0 : i32
    return %c0_i32, %c0_i32_0 : i32, i32
  }
  func.func @transform_8(%arg0: i32) -> (i32, i32) {
    %c0_i32 = arith.constant 0 : i32
    %c0_i32_0 = arith.constant 0 : i32
    %c0_i32_1 = arith.constant 0 : i32
    return %c0_i32, %c0_i32_0 : i32, i32
  }
  func.func @transform_9(%arg0: i32) -> (i32, i32) {
    %c0_i32 = arith.constant 0 : i32
    %c0_i32_0 = arith.constant 0 : i32
    return %arg0, %c0_i32 : i32, i32
  }
}

</mosaic_0001>

<llo_original>
// kernel: forward.1
$region0: #{forward.1}
  #allocation0 [shape = 'u32[]', space=smem, size = 0x4, offset = 0x4, fixed_abs, tag = 'smem constant byte address 0x4 - core index']
  #allocation1 [shape = 'u32[144,128]{1,0:T(1,128)}', space=vmem, size = 0x12000, scoped, tag = 'internal scratch']
  #allocation2 [shape = 'bf16[6,2,16,256]{3,2,1,0:T(16,128)(2,1)}', space=vmem, size = 0x18000, scoped, tag = 'scratch operand']
  %s0 = inlined_call_operand.vmem [shape: bf16[12,32,168], index: 0, kind: input, shape index: {}]
  %s1 = inlined_call_operand.vmem [shape: bf16[168,1024], index: 1, kind: input, shape index: {}]
  %s2 = inlined_call_operand.vmem [shape: f32[1,256], index: 2, kind: input, shape index: {}]
  %s3 = inlined_call_operand.vmem [shape: bf16[1536,512], index: 3, kind: input, shape index: {}]
  %s4 = inlined_call_operand.vmem [shape: f32[1,128], index: 4, kind: input, shape index: {}]
  %s5 = inlined_call_operand.vmem [shape: bf16[512,128], index: 5, kind: input, shape index: {}]
  %s6 = inlined_call_operand.vmem [shape: f32[1,128], index: 6, kind: input, shape index: {}]
  %s7 = inlined_call_operand.vmem [shape: bf16[128,128], index: 7, kind: input, shape index: {}]
  %s8 = inlined_call_operand.vmem [shape: f32[1,128], index: 8, kind: input, shape index: {}]
  %s9 = inlined_call_operand.vmem [shape: f32[32,128], index: 9, kind: output, shape index: {}]
  %s10 = sld [smem:[#allocation0]]
  $region107: #{forward.1} parent=0
    _
  %s12 = ssub.s32 1, %s10
  %s13 = scalar_select 0, %s12, %s10
  $region1: #{forward.1} parent=0
    #allocation3 [shape = 'u8[196608]{0}', space=vmem, size = 0x30000, scoped, tag = 'input window, operand 0']
    loop: start=0, step=1, limit=4
    $region2: #{forward.1} parent=1 // loop_pre_header
      _
    $region3: #{forward.1} parent=1 // loop_header
      %s15 = sphi 0, %s19
      %p16 = scmp.ge.s32.totalorder %s15, 4
      %s25 = sphi 0, %s27
      %s28 = sphi 0, %s25
      %s29 = sphi 0, %s28
      %s45 = sphi 0, %s29
      %s49 = sphi 0, %s49
      %s51 = sphi 0, %s49
      %s52 = sphi 0, %s51
      %s66 = sphi 0, %s52
      %s70 = sphi 0, %s70
      %s72 = sphi 0, %s70
      %s73 = sphi 0, %s72
      %s87 = sphi 0, %s73
      %s91 = sphi 0, %s91
      %s93 = sphi 0, %s91
      %s94 = sphi 0, %s93
      %s108 = sphi 0, %s94
      %s112 = sphi 0, %s112
      %s114 = sphi 0, %s112
      %s115 = sphi 0, %s114
      %s129 = sphi 0, %s115
      %s133 = sphi 0, %s133
      %s135 = sphi 0, %s133
      %s136 = sphi 0, %s135
      %s150 = sphi 0, %s136
      %s154 = sphi 0, %s154
      %s156 = sphi 0, %s154
      %s157 = sphi 0, %s156
      %s171 = sphi 0, %s157
      %s175 = sphi 0, %s175
      %s177 = sphi 0, %s175
      %s178 = sphi 0, %s177
      %s192 = sphi 0, %s178
      %s196 = sphi 0, %s196
      %s198 = sphi 0, %s196
      %s199 = sphi 0, %s198
      %s213 = sphi 0, %s199
      %s219 = sphi 0, %s221
      %s222 = sphi 0, %s219
      %s223 = sphi 0, %s222
      %s239 = sphi 0, %s223
    $region4: #{forward.1} parent=1 // loop_header_branch
      %18 = sbr.rel (%p16) target = $region8
    $region5: #{forward.1} parent=1 // loop_body
      %s20 = ssub.s32 %s15, 1
      %s21 = ssub.s32 %s15, 2
      %s22 = sadd.s32 %s15, 1
      %s23 = ssub.s32 %s15, %s22
      %p24 = scmp.eq.s32.totalorder %s23, 0
      %s26 = sadd.s32 %s25, 1
      %s27 = scalar_select %p24, %s25, %s26
      %p30 = pneg %p24
      %p31 = scmp.eq.s32.totalorder %s15, 1
      %p32 = por %p30, %p31
      %p33 = scmp.ne.s32.totalorder %s25, %s28
      %p34 = scmp.eq.s32.totalorder %s15, 0
      %p35 = por %p33, %p34
      %p36 = scmp.ne.s32.totalorder %s25, %s28
      %p37 = scmp.eq.s32.totalorder %s20, 1
      %p38 = por %p36, %p37
      %p39 = scmp.ne.s32.totalorder %s28, %s29
      %p40 = scmp.eq.s32.totalorder %s20, 0
      %p41 = por %p39, %p40
      %p42 = scmp.ne.s32.totalorder %s28, %s29
      %p43 = scmp.eq.s32.totalorder %s21, 1
      %p44 = por %p42, %p43
      %p46 = scmp.ne.s32.totalorder %s29, %s45
      %p47 = scmp.eq.s32.totalorder %s21, 0
      %p48 = por %p46, %p47
      %s50 = sadd.s32 %s49, 1
      %p53 = scmp.eq.s32.totalorder %s15, 1
      %p54 = scmp.ne.s32.totalorder %s49, %s51
      %p55 = scmp.eq.s32.totalorder %s15, 0
      %p56 = por %p54, %p55
      %p57 = scmp.ne.s32.totalorder %s49, %s51
      %p58 = scmp.eq.s32.totalorder %s20, 1
      %p59 = por %p57, %p58
      %p60 = scmp.ne.s32.totalorder %s51, %s52
      %p61 = scmp.eq.s32.totalorder %s20, 0
      %p62 = por %p60, %p61
      %p63 = scmp.ne.s32.totalorder %s51, %s52
      %p64 = scmp.eq.s32.totalorder %s21, 1
      %p65 = por %p63, %p64
      %p67 = scmp.ne.s32.totalorder %s52, %s66
      %p68 = scmp.eq.s32.totalorder %s21, 0
      %p69 = por %p67, %p68
      %s71 = sadd.s32 %s70, 1
      %p74 = scmp.eq.s32.totalorder %s15, 1
      %p75 = scmp.ne.s32.totalorder %s70, %s72
      %p76 = scmp.eq.s32.totalorder %s15, 0
      %p77 = por %p75, %p76
      %p78 = scmp.ne.s32.totalorder %s70, %s72
      %p79 = scmp.eq.s32.totalorder %s20, 1
      %p80 = por %p78, %p79
      %p81 = scmp.ne.s32.totalorder %s72, %s73
      %p82 = scmp.eq.s32.totalorder %s20, 0
      %p83 = por %p81, %p82
      %p84 = scmp.ne.s32.totalorder %s72, %s73
      %p85 = scmp.eq.s32.totalorder %s21, 1
      %p86 = por %p84, %p85
      %p88 = scmp.ne.s32.totalorder %s73, %s87
      %p89 = scmp.eq.s32.totalorder %s21, 0
      %p90 = por %p88, %p89
      %s92 = sadd.s32 %s91, 1
      %p95 = scmp.eq.s32.totalorder %s15, 1
      %p96 = scmp.ne.s32.totalorder %s91, %s93
      %p97 = scmp.eq.s32.totalorder %s15, 0
      %p98 = por %p96, %p97
      %p99 = scmp.ne.s32.totalorder %s91, %s93
      %p100 = scmp.eq.s32.totalorder %s20, 1
      %p101 = por %p99, %p100
      %p102 = scmp.ne.s32.totalorder %s93, %s94
      %p103 = scmp.eq.s32.totalorder %s20, 0
      %p104 = por %p102, %p103
      %p105 = scmp.ne.s32.totalorder %s93, %s94
      %p106 = scmp.eq.s32.totalorder %s21, 1
      %p107 = por %p105, %p106
      %p109 = scmp.ne.s32.totalorder %s94, %s108
      %p110 = scmp.eq.s32.totalorder %s21, 0
      %p111 = por %p109, %p110
      %s113 = sadd.s32 %s112, 1
      %p116 = scmp.eq.s32.totalorder %s15, 1
      %p117 = scmp.ne.s32.totalorder %s112, %s114
      %p118 = scmp.eq.s32.totalorder %s15, 0
      %p119 = por %p117, %p118
      %p120 = scmp.ne.s32.totalorder %s112, %s114
      %p121 = scmp.eq.s32.totalorder %s20, 1
      %p122 = por %p120, %p121
      %p123 = scmp.ne.s32.totalorder %s114, %s115
      %p124 = scmp.eq.s32.totalorder %s20, 0
      %p125 = por %p123, %p124
      %p126 = scmp.ne.s32.totalorder %s114, %s115
      %p127 = scmp.eq.s32.totalorder %s21, 1
      %p128 = por %p126, %p127
      %p130 = scmp.ne.s32.totalorder %s115, %s129
      %p131 = scmp.eq.s32.totalorder %s21, 0
      %p132 = por %p130, %p131
      %s134 = sadd.s32 %s133, 1
      %p137 = scmp.eq.s32.totalorder %s15, 1
      %p138 = scmp.ne.s32.totalorder %s133, %s135
      %p139 = scmp.eq.s32.totalorder %s15, 0
      %p140 = por %p138, %p139
      %p141 = scmp.ne.s32.totalorder %s133, %s135
      %p142 = scmp.eq.s32.totalorder %s20, 1
      %p143 = por %p141, %p142
      %p144 = scmp.ne.s32.totalorder %s135, %s136
      %p145 = scmp.eq.s32.totalorder %s20, 0
      %p146 = por %p144, %p145
      %p147 = scmp.ne.s32.totalorder %s135, %s136
      %p148 = scmp.eq.s32.totalorder %s21, 1
      %p149 = por %p147, %p148
      %p151 = scmp.ne.s32.totalorder %s136, %s150
      %p152 = scmp.eq.s32.totalorder %s21, 0
      %p153 = por %p151, %p152
      %s155 = sadd.s32 %s154, 1
      %p158 = scmp.eq.s32.totalorder %s15, 1
      %p159 = scmp.ne.s32.totalorder %s154, %s156
      %p160 = scmp.eq.s32.totalorder %s15, 0
      %p161 = por %p159, %p160
      %p162 = scmp.ne.s32.totalorder %s154, %s156
      %p163 = scmp.eq.s32.totalorder %s20, 1
      %p164 = por %p162, %p163
      %p165 = scmp.ne.s32.totalorder %s156, %s157
      %p166 = scmp.eq.s32.totalorder %s20, 0
      %p167 = por %p165, %p166
      %p168 = scmp.ne.s32.totalorder %s156, %s157
      %p169 = scmp.eq.s32.totalorder %s21, 1
      %p170 = por %p168, %p169
      %p172 = scmp.ne.s32.totalorder %s157, %s171
      %p173 = scmp.eq.s32.totalorder %s21, 0
      %p174 = por %p172, %p173
      %s176 = sadd.s32 %s175, 1
      %p179 = scmp.eq.s32.totalorder %s15, 1
      %p180 = scmp.ne.s32.totalorder %s175, %s177
      %p181 = scmp.eq.s32.totalorder %s15, 0
      %p182 = por %p180, %p181
      %p183 = scmp.ne.s32.totalorder %s175, %s177
      %p184 = scmp.eq.s32.totalorder %s20, 1
      %p185 = por %p183, %p184
      %p186 = scmp.ne.s32.totalorder %s177, %s178
      %p187 = scmp.eq.s32.totalorder %s20, 0
      %p188 = por %p186, %p187
      %p189 = scmp.ne.s32.totalorder %s177, %s178
      %p190 = scmp.eq.s32.totalorder %s21, 1
      %p191 = por %p189, %p190
      %p193 = scmp.ne.s32.totalorder %s178, %s192
      %p194 = scmp.eq.s32.totalorder %s21, 0
      %p195 = por %p193, %p194
      %s197 = sadd.s32 %s196, 1
      %p200 = scmp.eq.s32.totalorder %s15, 1
      %p201 = scmp.ne.s32.totalorder %s196, %s198
      %p202 = scmp.eq.s32.totalorder %s15, 0
      %p203 = por %p201, %p202
      %p204 = scmp.ne.s32.totalorder %s196, %s198
      %p205 = scmp.eq.s32.totalorder %s20, 1
      %p206 = por %p204, %p205
      %p207 = scmp.ne.s32.totalorder %s198, %s199
      %p208 = scmp.eq.s32.totalorder %s20, 0
      %p209 = por %p207, %p208
      %p210 = scmp.ne.s32.totalorder %s198, %s199
      %p211 = scmp.eq.s32.totalorder %s21, 1
      %p212 = por %p210, %p211
      %p214 = scmp.ne.s32.totalorder %s199, %s213
      %p215 = scmp.eq.s32.totalorder %s21, 0
      %p216 = por %p214, %p215
      %s217 = ssub.s32 %s15, %s22
      %p218 = scmp.eq.s32.totalorder %s217, 0
      %s220 = sadd.s32 %s219, 1
      %s221 = scalar_select %p218, %s219, %s220
      %p224 = pneg %p218
      %p225 = scmp.eq.s32.totalorder %s15, 1
      %p226 = por %p224, %p225
      %p227 = scmp.ne.s32.totalorder %s219, %s222
      %p228 = scmp.eq.s32.totalorder %s15, 0
      %p229 = por %p227, %p228
      %p230 = scmp.ne.s32.totalorder %s219, %s222
      %p231 = scmp.eq.s32.totalorder %s20, 1
      %p232 = por %p230, %p231
      %p233 = scmp.ne.s32.totalorder %s222, %s223
      %p234 = scmp.eq.s32.totalorder %s20, 0
      %p235 = por %p233, %p234
      %p236 = scmp.ne.s32.totalorder %s222, %s223
      %p237 = scmp.eq.s32.totalorder %s21, 1
      %p238 = por %p236, %p237
      %p240 = scmp.ne.s32.totalorder %s223, %s239
      %p241 = scmp.eq.s32.totalorder %s21, 0
      %p242 = por %p240, %p241
      %p243 = scmp.le.s32.totalorder 1, %s15
      %p244 = scmp.lt.s32.totalorder %s15, 3
      %p245 = pnand %p243, %p244
      %p246 = pneg %p245
      // Predicated region
      $region9: #{forward.1} parent=5 // pred_check
        _
      $region10: #{forward.1} parent=5 // pred_check_branch
        %248 = sbr.rel (%p245) target = $region12
      $region11: #{forward.1} parent=5 // pred_region
        %s249 = ssub.s32 %s15, 1
        // Predicated region
        $region13: #{forward.1} parent=11 // pred_check
          %p250 = pneg %p62
        $region14: #{forward.1} parent=11 // pred_check_branch
          %252 = sbr.rel (%p250) target = $region16
        $region15: #{forward.1} parent=11 // pred_region
          _
        $region16: #{forward.1} parent=11 // pred_fallthru
          _
        // Predicated region
        $region17: #{forward.1} parent=11 // pred_check
          %p253 = pneg %p83
        $region18: #{forward.1} parent=11 // pred_check_branch
          %255 = sbr.rel (%p253) target = $region20
        $region19: #{forward.1} parent=11 // pred_region
          _
        $region20: #{forward.1} parent=11 // pred_fallthru
          _
        // Predicated region
        $region21: #{forward.1} parent=11 // pred_check
          %p256 = pneg %p104
        $region22: #{forward.1} parent=11 // pred_check_branch
          %258 = sbr.rel (%p256) target = $region24
        $region23: #{forward.1} parent=11 // pred_region
          _
        $region24: #{forward.1} parent=11 // pred_fallthru
          _
        // Predicated region
        $region25: #{forward.1} parent=11 // pred_check
          %p259 = pneg %p125
        $region26: #{forward.1} parent=11 // pred_check_branch
          %261 = sbr.rel (%p259) target = $region28
        $region27: #{forward.1} parent=11 // pred_region
          _
        $region28: #{forward.1} parent=11 // pred_fallthru
          _
        // Predicated region
        $region29: #{forward.1} parent=11 // pred_check
          %p262 = pneg %p146
        $region30: #{forward.1} parent=11 // pred_check_branch
          %264 = sbr.rel (%p262) target = $region32
        $region31: #{forward.1} parent=11 // pred_region
          _
        $region32: #{forward.1} parent=11 // pred_fallthru
          _
        // Predicated region
        $region33: #{forward.1} parent=11 // pred_check
          %p265 = pneg %p167
        $region34: #{forward.1} parent=11 // pred_check_branch
          %267 = sbr.rel (%p265) target = $region36
        $region35: #{forward.1} parent=11 // pred_region
          _
        $region36: #{forward.1} parent=11 // pred_fallthru
          _
        // Predicated region
        $region37: #{forward.1} parent=11 // pred_check
          %p268 = pneg %p188
        $region38: #{forward.1} parent=11 // pred_check_branch
          %270 = sbr.rel (%p268) target = $region40
        $region39: #{forward.1} parent=11 // pred_region
          _
        $region40: #{forward.1} parent=11 // pred_fallthru
          _
        // Predicated region
        $region41: #{forward.1} parent=11 // pred_check
          %p271 = pneg %p209
        $region42: #{forward.1} parent=11 // pred_check_branch
          %273 = sbr.rel (%p271) target = $region44
        $region43: #{forward.1} parent=11 // pred_region
          _
        $region44: #{forward.1} parent=11 // pred_fallthru
          _
      $region12: #{forward.1} parent=5 // pred_fallthru
        _
      %p274 = scmp.lt.s32.totalorder %s15, 2
      // Predicated region
      $region45: #{forward.1} parent=5 // pred_check
        %p275 = pneg %p274
      $region46: #{forward.1} parent=5 // pred_check_branch
        %277 = sbr.rel (%p275) target = $region48
      $region47: #{forward.1} parent=5 // pred_region
        // Predicated region
        $region49: #{forward.1} parent=47 // pred_check
          %p278 = pneg %p35
        $region50: #{forward.1} parent=47 // pred_check_branch
          %280 = sbr.rel (%p278) target = $region52
        $region51: #{forward.1} parent=47 // pred_region
          %s281 = sand.u32 %s25, 1
          %s282 = sand.u32 %s25, 1
          %s283 = smul.addr %s282, 192
          %s284 = scalar_lea.vmem [#allocation3], %s283
          %s285 = smul.u32 2, %s15
          %s286 = smul.addr %s285, 2
          %s287 = smul.addr %s286, 4
          %s288 = scalar_lea.vmem %s0, %s287
          // Predicated region
          $region53: #{forward.1} parent=51 // pred_check
            _
          $region54: #{forward.1} parent=51 // pred_check_branch
            %290 = sbr.rel (0) target = $region56
          $region55: #{forward.1} parent=51 // pred_region
            // Predicated region
            $region57: #{forward.1} parent=55 // pred_check
              _
            $region58: #{forward.1} parent=55 // pred_check_branch
              %292 = sbr.rel (0) target = $region60
            $region59: #{forward.1} parent=55 // pred_region
              // Predicated region
              $region72: #{forward.1} parent=59 // pred_check
                _
              $region73: #{forward.1} parent=59 // pred_check_branch
                %353 = sbr.rel (0) target = $region75
              $region74: #{forward.1} parent=59 // pred_region
                loop: start=0, step=1, limit=1
                $region76: #{forward.1} parent=74 // loop_pre_header
                  _
                $region77: #{forward.1} parent=74 // loop_header
                  %s355 = sphi 0, %s359
                  %p356 = scmp.ge.s32.totalorder %s355, 1
                  %s360 = sphi %s288, %s288
                  %s361 = sphi %s284, %s284
                $region78: #{forward.1} parent=74 // loop_header_branch
                  %358 = sbr.rel (%p356) target = $region82
                $region79: #{forward.1} parent=74 // loop_body
                  %v362 = vld [vmem:[%s360] sm:$0xff]
                  %363 = vst [vmem:[%s361] sm:$0xff] %v362
                  %v364 = vld [vmem:[%s360 + $0x8] sm:$0xff]
                  %365 = vst [vmem:[%s361 + $0x8] sm:$0xff] %v364
                  %v366 = vld [vmem:[%s360 + $0x20] sm:$0xff]
                  %367 = vst [vmem:[%s361 + $0x10] sm:$0xff] %v366
                  %v368 = vld [vmem:[%s360 + $0x28] sm:$0xff]
                  %369 = vst [vmem:[%s361 + $0x18] sm:$0xff] %v368
                  %v370 = vld [vmem:[%s360 + $0x40] sm:$0xff]
                  %371 = vst [vmem:[%s361 + $0x20] sm:$0xff] %v370
                  %v372 = vld [vmem:[%s360 + $0x48] sm:$0xff]
                  %373 = vst [vmem:[%s361 + $0x28] sm:$0xff] %v372
                  %v374 = vld [vmem:[%s360 + $0x60] sm:$0xff]
                  %375 = vst [vmem:[%s361 + $0x30] sm:$0xff] %v374
                  %v376 = vld [vmem:[%s360 + $0x68] sm:$0xff]
                  %377 = vst [vmem:[%s361 + $0x38] sm:$0xff] %v376
                  %v378 = vld [vmem:[%s360 + $0x80] sm:$0xff]
                  %379 = vst [vmem:[%s361 + $0x40] sm:$0xff] %v378
                  %v380 = vld [vmem:[%s360 + $0x88] sm:$0xff]
                  %381 = vst [vmem:[%s361 + $0x48] sm:$0xff] %v380
                  %v382 = vld [vmem:[%s360 + $0xa0] sm:$0xff]
                  %383 = vst [vmem:[%s361 + $0x50] sm:$0xff] %v382
                  %v384 = vld [vmem:[%s360 + $0xa8] sm:$0xff]
                  %385 = vst [vmem:[%s361 + $0x58] sm:$0xff] %v384
                  %v386 = vld [vmem:[%s360 + $0xc0] sm:$0xff]
                  %387 = vst [vmem:[%s361 + $0x60] sm:$0xff] %v386
                  %v388 = vld [vmem:[%s360 + $0xc8] sm:$0xff]
                  %389 = vst [vmem:[%s361 + $0x68] sm:$0xff] %v388
                  %v390 = vld [vmem:[%s360 + $0xe0] sm:$0xff]
                  %391 = vst [vmem:[%s361 + $0x70] sm:$0xff] %v390
                  %v392 = vld [vmem:[%s360 + $0xe8] sm:$0xff]
                  %393 = vst [vmem:[%s361 + $0x78] sm:$0xff] %v392
                  %v394 = vld [vmem:[%s360 + $0x100] sm:$0xff]
                  %395 = vst [vmem:[%s361 + $0x80] sm:$0xff] %v394
                  %v396 = vld [vmem:[%s360 + $0x108] sm:$0xff]
                  %397 = vst [vmem:[%s361 + $0x88] sm:$0xff] %v396
                  %v398 = vld [vmem:[%s360 + $0x120] sm:$0xff]
                  %399 = vst [vmem:[%s361 + $0x90] sm:$0xff] %v398
                  %v400 = vld [vmem:[%s360 + $0x128] sm:$0xff]
                  %401 = vst [vmem:[%s361 + $0x98] sm:$0xff] %v400
                  %v402 = vld [vmem:[%s360 + $0x140] sm:$0xff]
                  %403 = vst [vmem:[%s361 + $0xa0] sm:$0xff] %v402
                  %v404 = vld [vmem:[%s360 + $0x148] sm:$0xff]
                  %405 = vst [vmem:[%s361 + $0xa8] sm:$0xff] %v404
                  %v406 = vld [vmem:[%s360 + $0x160] sm:$0xff]
                  %407 = vst [vmem:[%s361 + $0xb0] sm:$0xff] %v406
                  %v408 = vld [vmem:[%s360 + $0x168] sm:$0xff]
                  %409 = vst [vmem:[%s361 + $0xb8] sm:$0xff] %v408
                $region80: #{forward.1} parent=74 // loop_footer
                  %s359 = sadd.s32 1, %s355
                $region81: #{forward.1} parent=74 // loop_footer_branch
                  %354 = sbr.rel target = $region77
                $region82: #{forward.1} parent=74 // loop_exit
                  _
              $region75: #{forward.1} parent=59 // pred_fallthru
                _
              // Predicated region
              $region83: #{forward.1} parent=59 // pred_check
                _
              $region84: #{forward.1} parent=59 // pred_check_branch
                %411 = sbr.rel target = $region86
              $region85: #{forward.1} parent=59 // pred_region
                _
              $region86: #{forward.1} parent=59 // pred_fallthru
                _
            $region60: #{forward.1} parent=55 // pred_fallthru
              _
            // Predicated region
            $region61: #{forward.1} parent=55 // pred_check
              _
            $region62: #{forward.1} parent=55 // pred_check_branch
              %294 = sbr.rel target = $region64
            $region63: #{forward.1} parent=55 // pred_region
              loop: start=0, step=1, limit=1
              $region65: #{forward.1} parent=63 // loop_pre_header
                _
              $region66: #{forward.1} parent=63 // loop_header
                %s297 = sphi 0, %s301
                %p298 = scmp.ge.s32.totalorder %s297, 1
                %s302 = sphi %s288, %s288
                %s303 = sphi %s284, %s284
              $region67: #{forward.1} parent=63 // loop_header_branch
                %300 = sbr.rel (%p298) target = $region71
              $region68: #{forward.1} parent=63 // loop_body
                %v304 = vld [vmem:[%s302] sm:$0xff]
                %305 = vst [vmem:[%s303] sm:$0xff] %v304
                %v306 = vld [vmem:[%s302 + $0x8] sm:$0xff]
                %307 = vst [vmem:[%s303 + $0x8] sm:$0xff] %v306
                %v308 = vld [vmem:[%s302 + $0x20] sm:$0xff]
                %309 = vst [vmem:[%s303 + $0x10] sm:$0xff] %v308
                %v310 = vld [vmem:[%s302 + $0x28] sm:$0xff]
                %311 = vst [vmem:[%s303 + $0x18] sm:$0xff] %v310
                %v312 = vld [vmem:[%s302 + $0x40] sm:$0xff]
                %313 = vst [vmem:[%s303 + $0x20] sm:$0xff] %v312
                %v314 = vld [vmem:[%s302 + $0x48] sm:$0xff]
                %315 = vst [vmem:[%s303 + $0x28] sm:$0xff] %v314
                %v316 = vld [vmem:[%s302 + $0x60] sm:$0xff]
                %317 = vst [vmem:[%s303 + $0x30] sm:$0xff] %v316
                %v318 = vld [vmem:[%s302 + $0x68] sm:$0xff]
                %319 = vst [vmem:[%s303 + $0x38] sm:$0xff] %v318
                %v320 = vld [vmem:[%s302 + $0x80] sm:$0xff]
                %321 = vst [vmem:[%s303 + $0x40] sm:$0xff] %v320
                %v322 = vld [vmem:[%s302 + $0x88] sm:$0xff]
                %323 = vst [vmem:[%s303 + $0x48] sm:$0xff] %v322
                %v324 = vld [vmem:[%s302 + $0xa0] sm:$0xff]
                %325 = vst [vmem:[%s303 + $0x50] sm:$0xff] %v324
                %v326 = vld [vmem:[%s302 + $0xa8] sm:$0xff]
                %327 = vst [vmem:[%s303 + $0x58] sm:$0xff] %v326
                %v328 = vld [vmem:[%s302 + $0xc0] sm:$0xff]
                %329 = vst [vmem:[%s303 + $0x60] sm:$0xff] %v328
                %v330 = vld [vmem:[%s302 + $0xc8] sm:$0xff]
                %331 = vst [vmem:[%s303 + $0x68] sm:$0xff] %v330
                %v332 = vld [vmem:[%s302 + $0xe0] sm:$0xff]
                %333 = vst [vmem:[%s303 + $0x70] sm:$0xff] %v332
                %v334 = vld [vmem:[%s302 + $0xe8] sm:$0xff]
                %335 = vst [vmem:[%s303 + $0x78] sm:$0xff] %v334
                %v336 = vld [vmem:[%s302 + $0x100] sm:$0xff]
                %337 = vst [vmem:[%s303 + $0x80] sm:$0xff] %v336
                %v338 = vld [vmem:[%s302 + $0x108] sm:$0xff]
                %339 = vst [vmem:[%s303 + $0x88] sm:$0xff] %v338
                %v340 = vld [vmem:[%s302 + $0x120] sm:$0xff]
                %341 = vst [vmem:[%s303 + $0x90] sm:$0xff] %v340
                %v342 = vld [vmem:[%s302 + $0x128] sm:$0xff]
                %343 = vst [vmem:[%s303 + $0x98] sm:$0xff] %v342
                %v344 = vld [vmem:[%s302 + $0x140] sm:$0xff]
                %345 = vst [vmem:[%s303 + $0xa0] sm:$0xff] %v344
                %v346 = vld [vmem:[%s302 + $0x148] sm:$0xff]
                %347 = vst [vmem:[%s303 + $0xa8] sm:$0xff] %v346
                %v348 = vld [vmem:[%s302 + $0x160] sm:$0xff]
                %349 = vst [vmem:[%s303 + $0xb0] sm:$0xff] %v348
                %v350 = vld [vmem:[%s302 + $0x168] sm:$0xff]
                %351 = vst [vmem:[%s303 + $0xb8] sm:$0xff] %v350
              $region69: #{forward.1} parent=63 // loop_footer
                %s301 = sadd.s32 1, %s297
              $region70: #{forward.1} parent=63 // loop_footer_branch
                %296 = sbr.rel target = $region66
              $region71: #{forward.1} parent=63 // loop_exit
                _
            $region64: #{forward.1} parent=55 // pred_fallthru
              _
          $region56: #{forward.1} parent=51 // pred_fallthru
            _
          %412 = vnop
        $region52: #{forward.1} parent=47 // pred_fallthru
          _
      $region48: #{forward.1} parent=5 // pred_fallthru
        _
      %p413 = scmp.le.s32.totalorder 1, %s15
      %p414 = scmp.lt.s32.totalorder %s15, 3
      %p415 = pnand %p413, %p414
      %p416 = pneg %p415
      // Predicated region
      $region87: #{forward.1} parent=5 // pred_check
        _
      $region88: #{forward.1} parent=5 // pred_check_branch
        %418 = sbr.rel (%p415) target = $region90
      $region89: #{forward.1} parent=5 // pred_region
        %s419 = ssub.s32 %s15, 1
        %s420 = sand.u32 %s28, 1
        %s421 = sand.u32 %s28, 1
        %s422 = smul.addr %s421, 192
        %s423 = scalar_lea.vmem [#allocation3], %s422
        // Predicated region
        $region91: #{forward.1} parent=89 // pred_check
          %p424 = pneg %p41
        $region92: #{forward.1} parent=89 // pred_check_branch
          %426 = sbr.rel (%p424) target = $region94
        $region93: #{forward.1} parent=89 // pred_region
          _
        $region94: #{forward.1} parent=89 // pred_fallthru
          _
        %s427 = sand.u32 %s28, 1
        %s428 = sand.u32 %s28, 1
        %s429 = smul.addr %s428, 192
        %s430 = scalar_lea.vmem [#allocation3], %s429
        %p431 = pneg %p41
        %p432 = pneg %p38
        %p433 = pneg %p62
        %p434 = pneg %p59
        %p435 = pneg %p83
        %p436 = pneg %p80
        %p437 = pneg %p104
        %p438 = pneg %p101
        %p439 = pneg %p125
        %p440 = pneg %p122
        %p441 = pneg %p146
        %p442 = pneg %p143
        %p443 = pneg %p167
        %p444 = pneg %p164
        %p445 = pneg %p188
        %p446 = pneg %p185
        %p447 = pneg %p209
        %p448 = pneg %p206
        %p449 = pneg %p235
        %p450 = pneg %p232
        %s451 = smul.u32 2, %s20
        %p452 = scmp.lt.s32.totalorder %s451, 3
        %s453 = scalar_select %p452, %s451, 3
        %s454 = smul.addr %s453, 8
        %s455 = scalar_lea.vmem %s9, %s454
        %s456 = smul.u32 2, %s20
        %s457 = smul.u32 2, %s20
        %p458 = scmp.lt.s32.totalorder %s457, 3
        %s459 = scalar_select %p458, %s457, 3
        %s460 = smul.addr %s459, 8
        %s461 = scalar_lea.vmem %s9, %s460
        %s462 = smul.u32 2, %s20
        %v464 = vld [vmem:[%s423] sm:$0xff]
        %v465 = vld [vmem:[%s423 + $0x8] sm:$0xff]
        %v466 = vld [vmem:[%s423 + $0x10] sm:$0xff]
        %v467 = vld [vmem:[%s423 + $0x18] sm:$0xff]
        %v468 = vld [vmem:[%s423 + $0x20] sm:$0xff]
        %v469 = vld [vmem:[%s423 + $0x28] sm:$0xff]
        %v470 = vld [vmem:[%s423 + $0x30] sm:$0xff]
        %v471 = vld [vmem:[%s423 + $0x38] sm:$0xff]
        %v472 = vld [vmem:[%s423 + $0x40] sm:$0xff]
        %v473 = vld [vmem:[%s423 + $0x48] sm:$0xff]
        %v474 = vld [vmem:[%s423 + $0x50] sm:$0xff]
        %v475 = vld [vmem:[%s423 + $0x58] sm:$0xff]
        %v476 = vld [vmem:[%s423 + $0x60] sm:$0xff]
        %v477 = vld [vmem:[%s423 + $0x68] sm:$0xff]
        %v478 = vld [vmem:[%s423 + $0x70] sm:$0xff]
        %v479 = vld [vmem:[%s423 + $0x78] sm:$0xff]
        %v480 = vld [vmem:[%s423 + $0x80] sm:$0xff]
        %v481 = vld [vmem:[%s423 + $0x88] sm:$0xff]
        %v482 = vld [vmem:[%s423 + $0x90] sm:$0xff]
        %v483 = vld [vmem:[%s423 + $0x98] sm:$0xff]
        %v484 = vld [vmem:[%s423 + $0xa0] sm:$0xff]
        %v485 = vld [vmem:[%s423 + $0xa8] sm:$0xff]
        %v486 = vld [vmem:[%s423 + $0xb0] sm:$0xff]
        %v487 = vld [vmem:[%s423 + $0xb8] sm:$0xff]
        %v488 = vld [vmem:[%s1] sm:$0xff]
        %v489 = vld [vmem:[%s1 + $0x8] sm:$0xff]
        %v490 = vld [vmem:[%s1 + $0x10] sm:$0xff]
        %v491 = vld [vmem:[%s1 + $0x18] sm:$0xff]
        %v492 = vld [vmem:[%s1 + $0x20] sm:$0xff]
        %v493 = vld [vmem:[%s1 + $0x28] sm:$0xff]
        %v494 = vld [vmem:[%s1 + $0x30] sm:$0xff]
        %v495 = vld [vmem:[%s1 + $0x38] sm:$0xff]
        %v496 = vld [vmem:[%s1 + $0x40] sm:$0xff]
        %v497 = vld [vmem:[%s1 + $0x48] sm:$0xff]
        %v498 = vld [vmem:[%s1 + $0x50] sm:$0xff]
        %v499 = vld [vmem:[%s1 + $0x58] sm:$0xff]
        %v500 = vld [vmem:[%s1 + $0x60] sm:$0xff]
        %v501 = vld [vmem:[%s1 + $0x68] sm:$0xff]
        %v502 = vld [vmem:[%s1 + $0x70] sm:$0xff]
        %v503 = vld [vmem:[%s1 + $0x78] sm:$0xff]
        %v504 = vld [vmem:[%s1 + $0x80] sm:$0xff]
        %v505 = vld [vmem:[%s1 + $0x88] sm:$0xff]
        %v506 = vld [vmem:[%s1 + $0x90] sm:$0xff]
        %v507 = vld [vmem:[%s1 + $0x98] sm:$0xff]
        %v508 = vld [vmem:[%s1 + $0xa0] sm:$0xff]
        %v509 = vld [vmem:[%s1 + $0xa8] sm:$0xff]
        %v510 = vld [vmem:[%s1 + $0xb0] sm:$0xff]
        %v511 = vld [vmem:[%s1 + $0xb8] sm:$0xff]
        %v512 = vld [vmem:[%s1 + $0xc0] sm:$0xff]
        %v513 = vld [vmem:[%s1 + $0xc8] sm:$0xff]
        %v514 = vld [vmem:[%s1 + $0xd0] sm:$0xff]
        %v515 = vld [vmem:[%s1 + $0xd8] sm:$0xff]
        %v516 = vld [vmem:[%s1 + $0xe0] sm:$0xff]
        %v517 = vld [vmem:[%s1 + $0xe8] sm:$0xff]
        %v518 = vld [vmem:[%s1 + $0xf0] sm:$0xff]
        %v519 = vld [vmem:[%s1 + $0xf8] sm:$0xff]
        %v520 = vld [vmem:[%s1 + $0x100] sm:$0xff]
        %v521 = vld [vmem:[%s1 + $0x108] sm:$0xff]
        %v522 = vld [vmem:[%s1 + $0x110] sm:$0xff]
        %v523 = vld [vmem:[%s1 + $0x118] sm:$0xff]
        %v524 = vld [vmem:[%s1 + $0x120] sm:$0xff]
        %v525 = vld [vmem:[%s1 + $0x128] sm:$0xff]
        %v526 = vld [vmem:[%s1 + $0x130] sm:$0xff]
        %v527 = vld [vmem:[%s1 + $0x138] sm:$0xff]
        %v528 = vld [vmem:[%s1 + $0x140] sm:$0xff]
        %v529 = vld [vmem:[%s1 + $0x148] sm:$0xff]
        %v530 = vld [vmem:[%s1 + $0x150] sm:$0xff]
        %v531 = vld [vmem:[%s1 + $0x158] sm:$0xff]
        %v532 = vld [vmem:[%s1 + $0x160] sm:$0xff]
        %v533 = vld [vmem:[%s1 + $0x168] sm:$0xff]
        %v534 = vld [vmem:[%s1 + $0x170] sm:$0xff]
        %v535 = vld [vmem:[%s1 + $0x178] sm:$0xff]
        %v536 = vld [vmem:[%s1 + $0x180] sm:$0xff]
        %v537 = vld [vmem:[%s1 + $0x188] sm:$0xff]
        %v538 = vld [vmem:[%s1 + $0x190] sm:$0xff]
        %v539 = vld [vmem:[%s1 + $0x198] sm:$0xff]
        %v540 = vld [vmem:[%s1 + $0x1a0] sm:$0xff]
        %v541 = vld [vmem:[%s1 + $0x1a8] sm:$0xff]
        %v542 = vld [vmem:[%s1 + $0x1b0] sm:$0xff]
        %v543 = vld [vmem:[%s1 + $0x1b8] sm:$0xff]
        %v544 = vld [vmem:[%s1 + $0x1c0] sm:$0xff]
        %v545 = vld [vmem:[%s1 + $0x1c8] sm:$0xff]
        %v546 = vld [vmem:[%s1 + $0x1d0] sm:$0xff]
        %v547 = vld [vmem:[%s1 + $0x1d8] sm:$0xff]
        %v548 = vld [vmem:[%s1 + $0x1e0] sm:$0xff]
        %v549 = vld [vmem:[%s1 + $0x1e8] sm:$0xff]
        %v550 = vld [vmem:[%s1 + $0x1f0] sm:$0xff]
        %v551 = vld [vmem:[%s1 + $0x1f8] sm:$0xff]
        %v552 = vld [vmem:[%s1 + $0x200] sm:$0xff]
        %v553 = vld [vmem:[%s1 + $0x208] sm:$0xff]
        %v554 = vld [vmem:[%s1 + $0x210] sm:$0xff]
        %v555 = vld [vmem:[%s1 + $0x218] sm:$0xff]
        %v556 = vld [vmem:[%s1 + $0x220] sm:$0xff]
        %v557 = vld [vmem:[%s1 + $0x228] sm:$0xff]
        %v558 = vld [vmem:[%s1 + $0x230] sm:$0xff]
        %v559 = vld [vmem:[%s1 + $0x238] sm:$0xff]
        %v560 = vld [vmem:[%s1 + $0x240] sm:$0xff]
        %v561 = vld [vmem:[%s1 + $0x248] sm:$0xff]
        %v562 = vld [vmem:[%s1 + $0x250] sm:$0xff]
        %v563 = vld [vmem:[%s1 + $0x258] sm:$0xff]
        %v564 = vld [vmem:[%s1 + $0x260] sm:$0xff]
        %v565 = vld [vmem:[%s1 + $0x268] sm:$0xff]
        %v566 = vld [vmem:[%s1 + $0x270] sm:$0xff]
        %v567 = vld [vmem:[%s1 + $0x278] sm:$0xff]
        %v568 = vld [vmem:[%s1 + $0x280] sm:$0xff]
        %v569 = vld [vmem:[%s1 + $0x288] sm:$0xff]
        %v570 = vld [vmem:[%s1 + $0x290] sm:$0xff]
        %v571 = vld [vmem:[%s1 + $0x298] sm:$0xff]
        %v596 = vunpack.c.l.b16 %v464
        %v597 = vunpack.c.h.b16 %v464
        %v598 = vunpack.c.l.b16 %v465
        %v599 = vunpack.c.h.b16 %v465
        %v600 = vunpack.c.l.b16 %v466
        %v601 = vunpack.c.h.b16 %v466
        %v602 = vunpack.c.l.b16 %v467
        %v603 = vunpack.c.h.b16 %v467
        %v604 = vunpack.c.l.b16 %v468
        %v605 = vunpack.c.h.b16 %v468
        %v606 = vunpack.c.l.b16 %v469
        %v607 = vunpack.c.h.b16 %v469
        %v608 = vunpack.c.l.b16 %v470
        %v609 = vunpack.c.h.b16 %v470
        %v610 = vunpack.c.l.b16 %v471
        %v611 = vunpack.c.h.b16 %v471
        %v612 = vunpack.c.l.b16 %v472
        %v613 = vunpack.c.h.b16 %v472
        %v614 = vunpack.c.l.b16 %v473
        %v615 = vunpack.c.h.b16 %v473
        %v616 = vunpack.c.l.b16 %v474
        %v617 = vunpack.c.h.b16 %v474
        %v618 = vunpack.c.l.b16 %v475
        %v619 = vunpack.c.h.b16 %v475
        %v620 = vunpack.c.l.b16 %v476
        %v621 = vunpack.c.h.b16 %v476
        %v622 = vunpack.c.l.b16 %v477
        %v623 = vunpack.c.h.b16 %v477
        %v624 = vunpack.c.l.b16 %v478
        %v625 = vunpack.c.h.b16 %v478
        %v626 = vunpack.c.l.b16 %v479
        %v627 = vunpack.c.h.b16 %v479
        %v628 = vunpack.c.l.b16 %v480
        %v629 = vunpack.c.h.b16 %v480
        %v630 = vunpack.c.l.b16 %v481
        %v631 = vunpack.c.h.b16 %v481
        %v632 = vunpack.c.l.b16 %v482
        %v633 = vunpack.c.h.b16 %v482
        %v634 = vunpack.c.l.b16 %v483
        %v635 = vunpack.c.h.b16 %v483
        %v636 = vunpack.c.l.b16 %v484
        %v637 = vunpack.c.h.b16 %v484
        %v638 = vunpack.c.l.b16 %v485
        %v639 = vunpack.c.h.b16 %v485
        %v640 = vunpack.c.l.b16 %v486
        %v641 = vunpack.c.h.b16 %v486
        %v642 = vunpack.c.l.b16 %v487
        %v643 = vunpack.c.h.b16 %v487
        %v644 = vpack.c.b16 %v598, %v596
        %v645 = vpack.c.b16 %v599, %v597
        %v646 = vpack.c.b16 %v602, %v600
        %v647 = vpack.c.b16 %v603, %v601
        %v648 = vpack.c.b16 %v606, %v604
        %v649 = vpack.c.b16 %v607, %v605
        %v650 = vpack.c.b16 %v610, %v608
        %v651 = vpack.c.b16 %v611, %v609
        %v652 = vpack.c.b16 %v614, %v612
        %v653 = vpack.c.b16 %v615, %v613
        %v654 = vpack.c.b16 %v618, %v616
        %v655 = vpack.c.b16 %v619, %v617
        %v656 = vpack.c.b16 %v622, %v620
        %v657 = vpack.c.b16 %v623, %v621
        %v658 = vpack.c.b16 %v626, %v624
        %v659 = vpack.c.b16 %v627, %v625
        %v660 = vpack.c.b16 %v630, %v628
        %v661 = vpack.c.b16 %v631, %v629
        %v662 = vpack.c.b16 %v634, %v632
        %v663 = vpack.c.b16 %v635, %v633
        %v664 = vpack.c.b16 %v638, %v636
        %v665 = vpack.c.b16 %v639, %v637
        %v666 = vpack.c.b16 %v642, %v640
        %v667 = vpack.c.b16 %v643, %v641
        %v764 = vunpack.c.l.b16 %v488
        %v765 = vunpack.c.h.b16 %v488
        %v766 = vunpack.c.l.b16 %v489
        %v767 = vunpack.c.h.b16 %v489
        %v768 = vunpack.c.l.b16 %v490
        %v769 = vunpack.c.h.b16 %v490
        %v770 = vunpack.c.l.b16 %v491
        %v771 = vunpack.c.h.b16 %v491
        %v772 = vunpack.c.l.b16 %v492
        %v773 = vunpack.c.h.b16 %v492
        %v774 = vunpack.c.l.b16 %v493
        %v775 = vunpack.c.h.b16 %v493
        %v776 = vunpack.c.l.b16 %v494
        %v777 = vunpack.c.h.b16 %v494
        %v778 = vunpack.c.l.b16 %v495
        %v779 = vunpack.c.h.b16 %v495
        %v780 = vunpack.c.l.b16 %v496
        %v781 = vunpack.c.h.b16 %v496
        %v782 = vunpack.c.l.b16 %v497
        %v783 = vunpack.c.h.b16 %v497
        %v784 = vunpack.c.l.b16 %v498
        %v785 = vunpack.c.h.b16 %v498
        %v786 = vunpack.c.l.b16 %v499
        %v787 = vunpack.c.h.b16 %v499
        %v788 = vunpack.c.l.b16 %v500
        %v789 = vunpack.c.h.b16 %v500
        %v790 = vunpack.c.l.b16 %v501
        %v791 = vunpack.c.h.b16 %v501
        %v792 = vunpack.c.l.b16 %v502
        %v793 = vunpack.c.h.b16 %v502
        %v794 = vunpack.c.l.b16 %v503
        %v795 = vunpack.c.h.b16 %v503
        %v796 = vunpack.c.l.b16 %v504
        %v797 = vunpack.c.h.b16 %v504
        %v798 = vunpack.c.l.b16 %v505
        %v799 = vunpack.c.h.b16 %v505
        %v800 = vunpack.c.l.b16 %v506
        %v801 = vunpack.c.h.b16 %v506
        %v802 = vunpack.c.l.b16 %v507
        %v803 = vunpack.c.h.b16 %v507
        %v804 = vunpack.c.l.b16 %v508
        %v805 = vunpack.c.h.b16 %v508
        %v806 = vunpack.c.l.b16 %v509
        %v807 = vunpack.c.h.b16 %v509
        %v808 = vunpack.c.l.b16 %v510
        %v809 = vunpack.c.h.b16 %v510
        %v810 = vunpack.c.l.b16 %v511
        %v811 = vunpack.c.h.b16 %v511
        %v812 = vunpack.c.l.b16 %v512
        %v813 = vunpack.c.h.b16 %v512
        %v814 = vunpack.c.l.b16 %v513
        %v815 = vunpack.c.h.b16 %v513
        %v816 = vunpack.c.l.b16 %v514
        %v817 = vunpack.c.h.b16 %v514
        %v818 = vunpack.c.l.b16 %v515
        %v819 = vunpack.c.h.b16 %v515
        %v820 = vunpack.c.l.b16 %v516
        %v821 = vunpack.c.h.b16 %v516
        %v822 = vunpack.c.l.b16 %v517
        %v823 = vunpack.c.h.b16 %v517
        %v824 = vunpack.c.l.b16 %v518
        %v825 = vunpack.c.h.b16 %v518
        %v826 = vunpack.c.l.b16 %v519
        %v827 = vunpack.c.h.b16 %v519
        %v828 = vunpack.c.l.b16 %v520
        %v829 = vunpack.c.h.b16 %v520
        %v830 = vunpack.c.l.b16 %v521
        %v831 = vunpack.c.h.b16 %v521
        %v832 = vunpack.c.l.b16 %v522
        %v833 = vunpack.c.h.b16 %v522
        %v834 = vunpack.c.l.b16 %v523
        %v835 = vunpack.c.h.b16 %v523
        %v836 = vunpack.c.l.b16 %v524
        %v837 = vunpack.c.h.b16 %v524
        %v838 = vunpack.c.l.b16 %v525
        %v839 = vunpack.c.h.b16 %v525
        %v840 = vunpack.c.l.b16 %v526
        %v841 = vunpack.c.h.b16 %v526
        %v842 = vunpack.c.l.b16 %v527
        %v843 = vunpack.c.h.b16 %v527
        %v844 = vunpack.c.l.b16 %v528
        %v845 = vunpack.c.h.b16 %v528
        %v846 = vunpack.c.l.b16 %v529
        %v847 = vunpack.c.h.b16 %v529
        %v848 = vunpack.c.l.b16 %v530
        %v849 = vunpack.c.h.b16 %v530
        %v850 = vunpack.c.l.b16 %v531
        %v851 = vunpack.c.h.b16 %v531
        %v852 = vunpack.c.l.b16 %v532
        %v853 = vunpack.c.h.b16 %v532
        %v854 = vunpack.c.l.b16 %v533
        %v855 = vunpack.c.h.b16 %v533
        %v856 = vunpack.c.l.b16 %v534
        %v857 = vunpack.c.h.b16 %v534
        %v858 = vunpack.c.l.b16 %v535
        %v859 = vunpack.c.h.b16 %v535
        %v860 = vunpack.c.l.b16 %v536
        %v861 = vunpack.c.h.b16 %v536
        %v862 = vunpack.c.l.b16 %v537
        %v863 = vunpack.c.h.b16 %v537
        %v864 = vunpack.c.l.b16 %v538
        %v865 = vunpack.c.h.b16 %v538
        %v866 = vunpack.c.l.b16 %v539
        %v867 = vunpack.c.h.b16 %v539
        %v868 = vunpack.c.l.b16 %v540
        %v869 = vunpack.c.h.b16 %v540
        %v870 = vunpack.c.l.b16 %v541
        %v871 = vunpack.c.h.b16 %v541
        %v872 = vunpack.c.l.b16 %v542
        %v873 = vunpack.c.h.b16 %v542
        %v874 = vunpack.c.l.b16 %v543
        %v875 = vunpack.c.h.b16 %v543
        %v876 = vunpack.c.l.b16 %v544
        %v877 = vunpack.c.h.b16 %v544
        %v878 = vunpack.c.l.b16 %v545
        %v879 = vunpack.c.h.b16 %v545
        %v880 = vunpack.c.l.b16 %v546
        %v881 = vunpack.c.h.b16 %v546
        %v882 = vunpack.c.l.b16 %v547
        %v883 = vunpack.c.h.b16 %v547
        %v884 = vunpack.c.l.b16 %v548
        %v885 = vunpack.c.h.b16 %v548
        %v886 = vunpack.c.l.b16 %v549
        %v887 = vunpack.c.h.b16 %v549
        %v888 = vunpack.c.l.b16 %v550
        %v889 = vunpack.c.h.b16 %v550
        %v890 = vunpack.c.l.b16 %v551
        %v891 = vunpack.c.h.b16 %v551
        %v892 = vunpack.c.l.b16 %v552
        %v893 = vunpack.c.h.b16 %v552
        %v894 = vunpack.c.l.b16 %v553
        %v895 = vunpack.c.h.b16 %v553
        %v896 = vunpack.c.l.b16 %v554
        %v897 = vunpack.c.h.b16 %v554
        %v898 = vunpack.c.l.b16 %v555
        %v899 = vunpack.c.h.b16 %v555
        %v900 = vunpack.c.l.b16 %v556
        %v901 = vunpack.c.h.b16 %v556
        %v902 = vunpack.c.l.b16 %v557
        %v903 = vunpack.c.h.b16 %v557
        %v904 = vunpack.c.l.b16 %v558
        %v905 = vunpack.c.h.b16 %v558
        %v906 = vunpack.c.l.b16 %v559
        %v907 = vunpack.c.h.b16 %v559
        %v908 = vunpack.c.l.b16 %v560
        %v909 = vunpack.c.h.b16 %v560
        %v910 = vunpack.c.l.b16 %v561
        %v911 = vunpack.c.h.b16 %v561
        %v912 = vunpack.c.l.b16 %v562
        %v913 = vunpack.c.h.b16 %v562
        %v914 = vunpack.c.l.b16 %v563
        %v915 = vunpack.c.h.b16 %v563
        %v916 = vunpack.c.l.b16 %v564
        %v917 = vunpack.c.h.b16 %v564
        %v918 = vunpack.c.l.b16 %v565
        %v919 = vunpack.c.h.b16 %v565
        %v920 = vunpack.c.l.b16 %v566
        %v921 = vunpack.c.h.b16 %v566
        %v922 = vunpack.c.l.b16 %v567
        %v923 = vunpack.c.h.b16 %v567
        %v924 = vunpack.c.l.b16 %v568
        %v925 = vunpack.c.h.b16 %v568
        %v926 = vunpack.c.l.b16 %v569
        %v927 = vunpack.c.h.b16 %v569
        %v928 = vunpack.c.l.b16 %v570
        %v929 = vunpack.c.h.b16 %v570
        %v930 = vunpack.c.l.b16 %v571
        %v931 = vunpack.c.h.b16 %v571
        %v932 = vpack.c.b16 %v772, %v764
        %v933 = vpack.c.b16 %v773, %v765
        %v934 = vpack.c.b16 %v774, %v766
        %v935 = vpack.c.b16 %v775, %v767
        %v936 = vpack.c.b16 %v776, %v768
        %v937 = vpack.c.b16 %v777, %v769
        %v938 = vpack.c.b16 %v778, %v770
        %v939 = vpack.c.b16 %v779, %v771
        %v940 = vpack.c.b16 %v788, %v780
        %v941 = vpack.c.b16 %v789, %v781
        %v942 = vpack.c.b16 %v790, %v782
        %v943 = vpack.c.b16 %v791, %v783
        %v944 = vpack.c.b16 %v792, %v784
        %v945 = vpack.c.b16 %v793, %v785
        %v946 = vpack.c.b16 %v794, %v786
        %v947 = vpack.c.b16 %v795, %v787
        %v948 = vpack.c.b16 %v804, %v796
        %v949 = vpack.c.b16 %v805, %v797
        %v950 = vpack.c.b16 %v806, %v798
        %v951 = vpack.c.b16 %v807, %v799
        %v952 = vpack.c.b16 %v808, %v800
        %v953 = vpack.c.b16 %v809, %v801
        %v954 = vpack.c.b16 %v810, %v802
        %v955 = vpack.c.b16 %v811, %v803
        %v956 = vpack.c.b16 %v820, %v812
        %v957 = vpack.c.b16 %v821, %v813
        %v958 = vpack.c.b16 %v822, %v814
        %v959 = vpack.c.b16 %v823, %v815
        %v960 = vpack.c.b16 %v824, %v816
        %v961 = vpack.c.b16 %v825, %v817
        %v962 = vpack.c.b16 %v826, %v818
        %v963 = vpack.c.b16 %v827, %v819
        %v964 = vpack.c.b16 %v836, %v828
        %v965 = vpack.c.b16 %v837, %v829
        %v966 = vpack.c.b16 %v838, %v830
        %v967 = vpack.c.b16 %v839, %v831
        %v968 = vpack.c.b16 %v840, %v832
        %v969 = vpack.c.b16 %v841, %v833
        %v970 = vpack.c.b16 %v842, %v834
        %v971 = vpack.c.b16 %v843, %v835
        %v972 = vpack.c.b16 %v852, %v844
        %v973 = vpack.c.b16 %v853, %v845
        %v974 = vpack.c.b16 %v854, %v846
        %v975 = vpack.c.b16 %v855, %v847
        %v976 = vpack.c.b16 %v856, %v848
        %v977 = vpack.c.b16 %v857, %v849
        %v978 = vpack.c.b16 %v858, %v850
        %v979 = vpack.c.b16 %v859, %v851
        %v980 = vpack.c.b16 %v868, %v860
        %v981 = vpack.c.b16 %v869, %v861
        %v982 = vpack.c.b16 %v870, %v862
        %v983 = vpack.c.b16 %v871, %v863
        %v984 = vpack.c.b16 %v872, %v864
        %v985 = vpack.c.b16 %v873, %v865
        %v986 = vpack.c.b16 %v874, %v866
        %v987 = vpack.c.b16 %v875, %v867
        %v988 = vpack.c.b16 %v884, %v876
        %v989 = vpack.c.b16 %v885, %v877
        %v990 = vpack.c.b16 %v886, %v878
        %v991 = vpack.c.b16 %v887, %v879
        %v992 = vpack.c.b16 %v888, %v880
        %v993 = vpack.c.b16 %v889, %v881
        %v994 = vpack.c.b16 %v890, %v882
        %v995 = vpack.c.b16 %v891, %v883
        %v996 = vpack.c.b16 %v900, %v892
        %v997 = vpack.c.b16 %v901, %v893
        %v998 = vpack.c.b16 %v902, %v894
        %v999 = vpack.c.b16 %v903, %v895
        %v1000 = vpack.c.b16 %v904, %v896
        %v1001 = vpack.c.b16 %v905, %v897
        %v1002 = vpack.c.b16 %v906, %v898
        %v1003 = vpack.c.b16 %v907, %v899
        %v1004 = vpack.c.b16 %v916, %v908
        %v1005 = vpack.c.b16 %v917, %v909
        %v1006 = vpack.c.b16 %v918, %v910
        %v1007 = vpack.c.b16 %v919, %v911
        %v1008 = vpack.c.b16 %v920, %v912
        %v1009 = vpack.c.b16 %v921, %v913
        %v1010 = vpack.c.b16 %v922, %v914
        %v1011 = vpack.c.b16 %v923, %v915
        %v1012 = vpack.c.b16 %v924, %v924
        %v1013 = vpack.c.b16 %v925, %v925
        %v1014 = vpack.c.b16 %v926, %v926
        %v1015 = vpack.c.b16 %v927, %v927
        %v1016 = vpack.c.b16 %v928, %v928
        %v1017 = vpack.c.b16 %v929, %v929
        %v1018 = vpack.c.b16 %v930, %v930
        %v1019 = vpack.c.b16 %v931, %v931
        %vm1100 = vcmask 326656
        %v1102 = vsel %vm1100, %v645, 0
        %v1105 = vsel %vm1100, %v647, 0
        %v1108 = vsel %vm1100, %v649, 0
        %v1111 = vsel %vm1100, %v651, 0
        %v1114 = vsel %vm1100, %v653, 0
        %v1117 = vsel %vm1100, %v655, 0
        %v1120 = vsel %vm1100, %v657, 0
        %v1123 = vsel %vm1100, %v659, 0
        %v1126 = vsel %vm1100, %v661, 0
        %v1129 = vsel %vm1100, %v663, 0
        %v1132 = vsel %vm1100, %v665, 0
        %v1135 = vsel %vm1100, %v667, 0
        %vm1137 = vcmask 1043456
        %v1139 = vsel %vm1137, %v1012, 0
        %v1142 = vsel %vm1137, %v1013, 0
        %v1145 = vsel %vm1137, %v1014, 0
        %v1148 = vsel %vm1137, %v1015, 0
        %v1151 = vsel %vm1137, %v1016, 0
        %v1154 = vsel %vm1137, %v1017, 0
        %v1157 = vsel %vm1137, %v1018, 0
        %v1160 = vsel %vm1137, %v1019, 0
        %1162 = vmatprep.subr.bf16.mxu0 %v933
        %1163 = vmatpush1.bf16.msra.mxu0 %v932
        %1164 = vmatprep.subr.bf16.mxu0 %v941
        %1165 = vmatpush1.bf16.msra.mxu0 %v940
        %1166 = vmatprep.subr.bf16.mxu0 %v949
        %1167 = vmatpush1.bf16.msra.mxu0 %v948
        %1168 = vmatprep.subr.bf16.mxu0 %v957
        %1169 = vmatpush1.bf16.msra.mxu0 %v956
        %1170 = vmatprep.subr.bf16.mxu0 %v965
        %1171 = vmatpush1.bf16.msra.mxu0 %v964
        %1172 = vmatprep.subr.bf16.mxu0 %v973
        %1173 = vmatpush1.bf16.msra.mxu0 %v972
        %1174 = vmatprep.subr.bf16.mxu0 %v981
        %1175 = vmatpush1.bf16.msra.mxu0 %v980
        %1176 = vmatprep.subr.bf16.mxu0 %v989
        %1177 = vmatpush1.bf16.msra.mxu0 %v988
        %1178 = vmatprep.subr.bf16.mxu0 %v997
        %1179 = vmatpush1.bf16.msra.mxu0 %v996
        %1180 = vmatprep.subr.bf16.mxu0 %v1005
        %1181 = vmatpush1.bf16.msra.mxu0 %v1004
        %1182 = vmatprep.subr.bf16.mxu0 %v1142
        %1183 = vmatpush1.bf16.msra.mxu0 %v1139
        %1184 = vmatprep.subr.bf16.mxu0 0
        %1185 = vmatpush1.bf16.msra.mxu0 0
        %1186 = vmatprep.subr.bf16.mxu0 0
        %1187 = vmatpush1.bf16.msra.mxu0 0
        %1188 = vmatprep.subr.bf16.mxu0 0
        %1189 = vmatpush1.bf16.msra.mxu0 0
        %1190 = vmatprep.subr.bf16.mxu0 0
        %1191 = vmatpush1.bf16.msra.mxu0 0
        %1192 = vmatprep.subr.bf16.mxu0 0
        %1193 = vmatpush1.bf16.msra.mxu0 0
        %1194 = vmatprep.mubr.bf16.mxu0 %v1102
        %1195 = vmatmul.mubr.bf16.gmra.mrb[0].mxu0 %v644
        %v1196 = vpop.f32.mrb[0].mxu0
        %v1197 = vadd.f32 0.0, %v1196
        %v1198 = vpop.f32.mrb[0].mxu0
        %v1199 = vadd.f32 0.0, %v1198
        %v1200 = vpop.f32.mrb[0].mxu0
        %v1201 = vadd.f32 0.0, %v1200
        %v1202 = vpop.f32.mrb[0].mxu0
        %v1203 = vadd.f32 0.0, %v1202
        %1204 = vmatprep.mubr.bf16.mxu0 %v1105
        %1205 = vmatmul.mubr.bf16.gmra.mrb[0].mxu0 %v646
        %v1206 = vpop.f32.mrb[0].mxu0
        %v1207 = vadd.f32 0.0, %v1206
        %v1208 = vpop.f32.mrb[0].mxu0
        %v1209 = vadd.f32 0.0, %v1208
        %v1210 = vpop.f32.mrb[0].mxu0
        %v1211 = vadd.f32 0.0, %v1210
        %v1212 = vpop.f32.mrb[0].mxu0
        %v1213 = vadd.f32 0.0, %v1212
        %1214 = vmatprep.mubr.bf16.mxu0 %v1108
        %1215 = vmatmul.mubr.bf16.gmra.mrb[0].mxu0 %v648
        %v1216 = vpop.f32.mrb[0].mxu0
        %v1217 = vadd.f32 0.0, %v1216
        %v1218 = vpop.f32.mrb[0].mxu0
        %v1219 = vadd.f32 0.0, %v1218
        %v1220 = vpop.f32.mrb[0].mxu0
        %v1221 = vadd.f32 0.0, %v1220
        %v1222 = vpop.f32.mrb[0].mxu0
        %v1223 = vadd.f32 0.0, %v1222
        %1224 = vmatprep.mubr.bf16.mxu0 %v1111
        %1225 = vmatmul.mubr.bf16.gmra.mrb[0].mxu0 %v650
        %v1226 = vpop.f32.mrb[0].mxu0
        %v1227 = vadd.f32 0.0, %v1226
        %v1228 = vpop.f32.mrb[0].mxu0
        %v1229 = vadd.f32 0.0, %v1228
        %v1230 = vpop.f32.mrb[0].mxu0
        %v1231 = vadd.f32 0.0, %v1230
        %v1232 = vpop.f32.mrb[0].mxu0
        %v1233 = vadd.f32 0.0, %v1232
        %1234 = vmatprep.mubr.bf16.mxu0 %v1114
        %1235 = vmatmul.mubr.bf16.gmra.mrb[0].mxu0 %v652
        %v1236 = vpop.f32.mrb[0].mxu0
        %v1237 = vadd.f32 0.0, %v1236
        %v1238 = vpop.f32.mrb[0].mxu0
        %v1239 = vadd.f32 0.0, %v1238
        %v1240 = vpop.f32.mrb[0].mxu0
        %v1241 = vadd.f32 0.0, %v1240
        %v1242 = vpop.f32.mrb[0].mxu0
        %v1243 = vadd.f32 0.0, %v1242
        %1244 = vmatprep.mubr.bf16.mxu0 %v1117
        %1245 = vmatmul.mubr.bf16.gmra.mrb[0].mxu0 %v654
        %v1246 = vpop.f32.mrb[0].mxu0
        %v1247 = vadd.f32 0.0, %v1246
        %v1248 = vpop.f32.mrb[0].mxu0
        %v1249 = vadd.f32 0.0, %v1248
        %v1250 = vpop.f32.mrb[0].mxu0
        %v1251 = vadd.f32 0.0, %v1250
        %v1252 = vpop.f32.mrb[0].mxu0
        %v1253 = vadd.f32 0.0, %v1252
        %1254 = vmatprep.mubr.bf16.mxu0 %v1120
        %1255 = vmatmul.mubr.bf16.gmra.mrb[0].mxu0 %v656
        %v1256 = vpop.f32.mrb[0].mxu0
        %v1257 = vadd.f32 0.0, %v1256
        %v1258 = vpop.f32.mrb[0].mxu0
        %v1259 = vadd.f32 0.0, %v1258
        %v1260 = vpop.f32.mrb[0].mxu0
        %v1261 = vadd.f32 0.0, %v1260
        %v1262 = vpop.f32.mrb[0].mxu0
        %v1263 = vadd.f32 0.0, %v1262
        %1264 = vmatprep.mubr.bf16.mxu0 %v1123
        %1265 = vmatmul.mubr.bf16.gmra.mrb[0].mxu0 %v658
        %v1266 = vpop.f32.mrb[0].mxu0
        %v1267 = vadd.f32 0.0, %v1266
        %v1268 = vpop.f32.mrb[0].mxu0
        %v1269 = vadd.f32 0.0, %v1268
        %v1270 = vpop.f32.mrb[0].mxu0
        %v1271 = vadd.f32 0.0, %v1270
        %v1272 = vpop.f32.mrb[0].mxu0
        %v1273 = vadd.f32 0.0, %v1272
        %1274 = vmatprep.mubr.bf16.mxu0 %v1126
        %1275 = vmatmul.mubr.bf16.gmra.mrb[0].mxu0 %v660
        %v1276 = vpop.f32.mrb[0].mxu0
        %v1277 = vadd.f32 0.0, %v1276
        %v1278 = vpop.f32.mrb[0].mxu0
        %v1279 = vadd.f32 0.0, %v1278
        %v1280 = vpop.f32.mrb[0].mxu0
        %v1281 = vadd.f32 0.0, %v1280
        %v1282 = vpop.f32.mrb[0].mxu0
        %v1283 = vadd.f32 0.0, %v1282
        %1284 = vmatprep.mubr.bf16.mxu0 %v1129
        %1285 = vmatmul.mubr.bf16.gmra.mrb[0].mxu0 %v662
        %v1286 = vpop.f32.mrb[0].mxu0
        %v1287 = vadd.f32 0.0, %v1286
        %v1288 = vpop.f32.mrb[0].mxu0
        %v1289 = vadd.f32 0.0, %v1288
        %v1290 = vpop.f32.mrb[0].mxu0
        %v1291 = vadd.f32 0.0, %v1290
        %v1292 = vpop.f32.mrb[0].mxu0
        %v1293 = vadd.f32 0.0, %v1292
        %1294 = vmatprep.mubr.bf16.mxu0 %v1132
        %1295 = vmatmul.mubr.bf16.gmra.mrb[0].mxu0 %v664
        %v1296 = vpop.f32.mrb[0].mxu0
        %v1297 = vadd.f32 0.0, %v1296
        %v1298 = vpop.f32.mrb[0].mxu0
        %v1299 = vadd.f32 0.0, %v1298
        %v1300 = vpop.f32.mrb[0].mxu0
        %v1301 = vadd.f32 0.0, %v1300
        %v1302 = vpop.f32.mrb[0].mxu0
        %v1303 = vadd.f32 0.0, %v1302
        %1304 = vmatprep.mubr.bf16.mxu0 %v1135
        %1305 = vmatmul.mubr.bf16.gmra.mrb[0].mxu0 %v666
        %v1306 = vpop.f32.mrb[0].mxu0
        %v1307 = vadd.f32 0.0, %v1306
        %v1308 = vpop.f32.mrb[0].mxu0
        %v1309 = vadd.f32 0.0, %v1308
        %v1310 = vpop.f32.mrb[0].mxu0
        %v1311 = vadd.f32 0.0, %v1310
        %v1312 = vpop.f32.mrb[0].mxu0
        %v1313 = vadd.f32 0.0, %v1312
        %1314 = vdwg.mxu0
        %1315 = vmatprep.subr.bf16.mxu0 %v935
        %1316 = vmatpush1.bf16.msra.mxu0 %v934
        %1317 = vmatprep.subr.bf16.mxu0 %v943
        %1318 = vmatpush1.bf16.msra.mxu0 %v942
        %1319 = vmatprep.subr.bf16.mxu0 %v951
        %1320 = vmatpush1.bf16.msra.mxu0 %v950
        %1321 = vmatprep.subr.bf16.mxu0 %v959
        %1322 = vmatpush1.bf16.msra.mxu0 %v958
        %1323 = vmatprep.subr.bf16.mxu0 %v967
        %1324 = vmatpush1.bf16.msra.mxu0 %v966
        %1325 = vmatprep.subr.bf16.mxu0 %v975
        %1326 = vmatpush1.bf16.msra.mxu0 %v974
        %1327 = vmatprep.subr.bf16.mxu0 %v983
        %1328 = vmatpush1.bf16.msra.mxu0 %v982
        %1329 = vmatprep.subr.bf16.mxu0 %v991
        %1330 = vmatpush1.bf16.msra.mxu0 %v990
        %1331 = vmatprep.subr.bf16.mxu0 %v999
        %1332 = vmatpush1.bf16.msra.mxu0 %v998
        %1333 = vmatprep.subr.bf16.mxu0 %v1007
        %1334 = vmatpush1.bf16.msra.mxu0 %v1006
        %1335 = vmatprep.subr.bf16.mxu0 %v1148
        %1336 = vmatpush1.bf16.msra.mxu0 %v1145
        %1337 = vmatprep.subr.bf16.mxu0 0
        %1338 = vmatpush1.bf16.msra.mxu0 0
        %1339 = vmatprep.subr.bf16.mxu0 0
        %1340 = vmatpush1.bf16.msra.mxu0 0
        %1341 = vmatprep.subr.bf16.mxu0 0
        %1342 = vmatpush1.bf16.msra.mxu0 0
        %1343 = vmatprep.subr.bf16.mxu0 0
        %1344 = vmatpush1.bf16.msra.mxu0 0
        %1345 = vmatprep.subr.bf16.mxu0 0
        %1346 = vmatpush1.bf16.msra.mxu0 0
        %1347 = vmatprep.mubr.bf16.mxu0 %v1102
        %1348 = vmatmul.mubr.bf16.gmra.mrb[0].mxu0 %v644
        %v1349 = vpop.f32.mrb[0].mxu0
        %v1350 = vadd.f32 0.0, %v1349
        %v1351 = vpop.f32.mrb[0].mxu0
        %v1352 = vadd.f32 0.0, %v1351
        %v1353 = vpop.f32.mrb[0].mxu0
        %v1354 = vadd.f32 0.0, %v1353
        %v1355 = vpop.f32.mrb[0].mxu0
        %v1356 = vadd.f32 0.0, %v1355
        %1357 = vmatprep.mubr.bf16.mxu0 %v1105
        %1358 = vmatmul.mubr.bf16.gmra.mrb[0].mxu0 %v646
        %v1359 = vpop.f32.mrb[0].mxu0
        %v1360 = vadd.f32 0.0, %v1359
        %v1361 = vpop.f32.mrb[0].mxu0
        %v1362 = vadd.f32 0.0, %v1361
        %v1363 = vpop.f32.mrb[0].mxu0
        %v1364 = vadd.f32 0.0, %v1363
        %v1365 = vpop.f32.mrb[0].mxu0
        %v1366 = vadd.f32 0.0, %v1365
        %1367 = vmatprep.mubr.bf16.mxu0 %v1108
        %1368 = vmatmul.mubr.bf16.gmra.mrb[0].mxu0 %v648
        %v1369 = vpop.f32.mrb[0].mxu0
        %v1370 = vadd.f32 0.0, %v1369
        %v1371 = vpop.f32.mrb[0].mxu0
        %v1372 = vadd.f32 0.0, %v1371
        %v1373 = vpop.f32.mrb[0].mxu0
        %v1374 = vadd.f32 0.0, %v1373
        %v1375 = vpop.f32.mrb[0].mxu0
        %v1376 = vadd.f32 0.0, %v1375
        %1377 = vmatprep.mubr.bf16.mxu0 %v1111
        %1378 = vmatmul.mubr.bf16.gmra.mrb[0].mxu0 %v650
        %v1379 = vpop.f32.mrb[0].mxu0
        %v1380 = vadd.f32 0.0, %v1379
        %v1381 = vpop.f32.mrb[0].mxu0
        %v1382 = vadd.f32 0.0, %v1381
        %v1383 = vpop.f32.mrb[0].mxu0
        %v1384 = vadd.f32 0.0, %v1383
        %v1385 = vpop.f32.mrb[0].mxu0
        %v1386 = vadd.f32 0.0, %v1385
        %1387 = vmatprep.mubr.bf16.mxu0 %v1114
        %1388 = vmatmul.mubr.bf16.gmra.mrb[0].mxu0 %v652
        %v1389 = vpop.f32.mrb[0].mxu0
        %v1390 = vadd.f32 0.0, %v1389
        %v1391 = vpop.f32.mrb[0].mxu0
        %v1392 = vadd.f32 0.0, %v1391
        %v1393 = vpop.f32.mrb[0].mxu0
        %v1394 = vadd.f32 0.0, %v1393
        %v1395 = vpop.f32.mrb[0].mxu0
        %v1396 = vadd.f32 0.0, %v1395
        %1397 = vmatprep.mubr.bf16.mxu0 %v1117
        %1398 = vmatmul.mubr.bf16.gmra.mrb[0].mxu0 %v654
        %v1399 = vpop.f32.mrb[0].mxu0
        %v1400 = vadd.f32 0.0, %v1399
        %v1401 = vpop.f32.mrb[0].mxu0
        %v1402 = vadd.f32 0.0, %v1401
        %v1403 = vpop.f32.mrb[0].mxu0
        %v1404 = vadd.f32 0.0, %v1403
        %v1405 = vpop.f32.mrb[0].mxu0
        %v1406 = vadd.f32 0.0, %v1405
        %1407 = vmatprep.mubr.bf16.mxu0 %v1120
        %1408 = vmatmul.mubr.bf16.gmra.mrb[0].mxu0 %v656
        %v1409 = vpop.f32.mrb[0].mxu0
        %v1410 = vadd.f32 0.0, %v1409
        %v1411 = vpop.f32.mrb[0].mxu0
        %v1412 = vadd.f32 0.0, %v1411
        %v1413 = vpop.f32.mrb[0].mxu0
        %v1414 = vadd.f32 0.0, %v1413
        %v1415 = vpop.f32.mrb[0].mxu0
        %v1416 = vadd.f32 0.0, %v1415
        %1417 = vmatprep.mubr.bf16.mxu0 %v1123
        %1418 = vmatmul.mubr.bf16.gmra.mrb[0].mxu0 %v658
        %v1419 = vpop.f32.mrb[0].mxu0
        %v1420 = vadd.f32 0.0, %v1419
        %v1421 = vpop.f32.mrb[0].mxu0
        %v1422 = vadd.f32 0.0, %v1421
        %v1423 = vpop.f32.mrb[0].mxu0
        %v1424 = vadd.f32 0.0, %v1423
        %v1425 = vpop.f32.mrb[0].mxu0
        %v1426 = vadd.f32 0.0, %v1425
        %1427 = vmatprep.mubr.bf16.mxu0 %v1126
        %1428 = vmatmul.mubr.bf16.gmra.mrb[0].mxu0 %v660
        %v1429 = vpop.f32.mrb[0].mxu0
        %v1430 = vadd.f32 0.0, %v1429
        %v1431 = vpop.f32.mrb[0].mxu0
        %v1432 = vadd.f32 0.0, %v1431
        %v1433 = vpop.f32.mrb[0].mxu0
        %v1434 = vadd.f32 0.0, %v1433
        %v1435 = vpop.f32.mrb[0].mxu0
        %v1436 = vadd.f32 0.0, %v1435
        %1437 = vmatprep.mubr.bf16.mxu0 %v1129
        %1438 = vmatmul.mubr.bf16.gmra.mrb[0].mxu0 %v662
        %v1439 = vpop.f32.mrb[0].mxu0
        %v1440 = vadd.f32 0.0, %v1439
        %v1441 = vpop.f32.mrb[0].mxu0
        %v1442 = vadd.f32 0.0, %v1441
        %v1443 = vpop.f32.mrb[0].mxu0
        %v1444 = vadd.f32 0.0, %v1443
        %v1445 = vpop.f32.mrb[0].mxu0
        %v1446 = vadd.f32 0.0, %v1445
        %1447 = vmatprep.mubr.bf16.mxu0 %v1132
        %1448 = vmatmul.mubr.bf16.gmra.mrb[0].mxu0 %v664
        %v1449 = vpop.f32.mrb[0].mxu0
        %v1450 = vadd.f32 0.0, %v1449
        %v1451 = vpop.f32.mrb[0].mxu0
        %v1452 = vadd.f32 0.0, %v1451
        %v1453 = vpop.f32.mrb[0].mxu0
        %v1454 = vadd.f32 0.0, %v1453
        %v1455 = vpop.f32.mrb[0].mxu0
        %v1456 = vadd.f32 0.0, %v1455
        %1457 = vmatprep.mubr.bf16.mxu0 %v1135
        %1458 = vmatmul.mubr.bf16.gmra.mrb[0].mxu0 %v666
        %v1459 = vpop.f32.mrb[0].mxu0
        %v1460 = vadd.f32 0.0, %v1459
        %v1461 = vpop.f32.mrb[0].mxu0
        %v1462 = vadd.f32 0.0, %v1461
        %v1463 = vpop.f32.mrb[0].mxu0
        %v1464 = vadd.f32 0.0, %v1463
        %v1465 = vpop.f32.mrb[0].mxu0
        %v1466 = vadd.f32 0.0, %v1465
        %1467 = vdwg.mxu0
        %1468 = vmatprep.subr.bf16.mxu0 %v937
        %1469 = vmatpush1.bf16.msra.mxu0 %v936
        %1470 = vmatprep.subr.bf16.mxu0 %v945
        %1471 = vmatpush1.bf16.msra.mxu0 %v944
        %1472 = vmatprep.subr.bf16.mxu0 %v953
        %1473 = vmatpush1.bf16.msra.mxu0 %v952
        %1474 = vmatprep.subr.bf16.mxu0 %v961
        %1475 = vmatpush1.bf16.msra.mxu0 %v960
        %1476 = vmatprep.subr.bf16.mxu0 %v969
        %1477 = vmatpush1.bf16.msra.mxu0 %v968
        %1478 = vmatprep.subr.bf16.mxu0 %v977
        %1479 = vmatpush1.bf16.msra.mxu0 %v976
        %1480 = vmatprep.subr.bf16.mxu0 %v985
        %1481 = vmatpush1.bf16.msra.mxu0 %v984
        %1482 = vmatprep.subr.bf16.mxu0 %v993
        %1483 = vmatpush1.bf16.msra.mxu0 %v992
        %1484 = vmatprep.subr.bf16.mxu0 %v1001
        %1485 = vmatpush1.bf16.msra.mxu0 %v1000
        %1486 = vmatprep.subr.bf16.mxu0 %v1009
        %1487 = vmatpush1.bf16.msra.mxu0 %v1008
        %1488 = vmatprep.subr.bf16.mxu0 %v1154
        %1489 = vmatpush1.bf16.msra.mxu0 %v1151
        %1490 = vmatprep.subr.bf16.mxu0 0
        %1491 = vmatpush1.bf16.msra.mxu0 0
        %1492 = vmatprep.subr.bf16.mxu0 0
        %1493 = vmatpush1.bf16.msra.mxu0 0
        %1494 = vmatprep.subr.bf16.mxu0 0
        %1495 = vmatpush1.bf16.msra.mxu0 0
        %1496 = vmatprep.subr.bf16.mxu0 0
        %1497 = vmatpush1.bf16.msra.mxu0 0
        %1498 = vmatprep.subr.bf16.mxu0 0
        %1499 = vmatpush1.bf16.msra.mxu0 0
        %1500 = vmatprep.mubr.bf16.mxu0 %v1102
        %1501 = vmatmul.mubr.bf16.gmra.mrb[0].mxu0 %v644
        %v1502 = vpop.f32.mrb[0].mxu0
        %v1503 = vadd.f32 0.0, %v1502
        %v1504 = vpop.f32.mrb[0].mxu0
        %v1505 = vadd.f32 0.0, %v1504
        %v1506 = vpop.f32.mrb[0].mxu0
        %v1507 = vadd.f32 0.0, %v1506
        %v1508 = vpop.f32.mrb[0].mxu0
        %v1509 = vadd.f32 0.0, %v1508
        %1510 = vmatprep.mubr.bf16.mxu0 %v1105
        %1511 = vmatmul.mubr.bf16.gmra.mrb[0].mxu0 %v646
        %v1512 = vpop.f32.mrb[0].mxu0
        %v1513 = vadd.f32 0.0, %v1512
        %v1514 = vpop.f32.mrb[0].mxu0
        %v1515 = vadd.f32 0.0, %v1514
        %v1516 = vpop.f32.mrb[0].mxu0
        %v1517 = vadd.f32 0.0, %v1516
        %v1518 = vpop.f32.mrb[0].mxu0
        %v1519 = vadd.f32 0.0, %v1518
        %1520 = vmatprep.mubr.bf16.mxu0 %v1108
        %1521 = vmatmul.mubr.bf16.gmra.mrb[0].mxu0 %v648
        %v1522 = vpop.f32.mrb[0].mxu0
        %v1523 = vadd.f32 0.0, %v1522
        %v1524 = vpop.f32.mrb[0].mxu0
        %v1525 = vadd.f32 0.0, %v1524
        %v1526 = vpop.f32.mrb[0].mxu0
        %v1527 = vadd.f32 0.0, %v1526
        %v1528 = vpop.f32.mrb[0].mxu0
        %v1529 = vadd.f32 0.0, %v1528
        %1530 = vmatprep.mubr.bf16.mxu0 %v1111
        %1531 = vmatmul.mubr.bf16.gmra.mrb[0].mxu0 %v650
        %v1532 = vpop.f32.mrb[0].mxu0
        %v1533 = vadd.f32 0.0, %v1532
        %v1534 = vpop.f32.mrb[0].mxu0
        %v1535 = vadd.f32 0.0, %v1534
        %v1536 = vpop.f32.mrb[0].mxu0
        %v1537 = vadd.f32 0.0, %v1536
        %v1538 = vpop.f32.mrb[0].mxu0
        %v1539 = vadd.f32 0.0, %v1538
        %1540 = vmatprep.mubr.bf16.mxu0 %v1114
        %1541 = vmatmul.mubr.bf16.gmra.mrb[0].mxu0 %v652
        %v1542 = vpop.f32.mrb[0].mxu0
        %v1543 = vadd.f32 0.0, %v1542
        %v1544 = vpop.f32.mrb[0].mxu0
        %v1545 = vadd.f32 0.0, %v1544
        %v1546 = vpop.f32.mrb[0].mxu0
        %v1547 = vadd.f32 0.0, %v1546
        %v1548 = vpop.f32.mrb[0].mxu0
        %v1549 = vadd.f32 0.0, %v1548
        %1550 = vmatprep.mubr.bf16.mxu0 %v1117
        %1551 = vmatmul.mubr.bf16.gmra.mrb[0].mxu0 %v654
        %v1552 = vpop.f32.mrb[0].mxu0
        %v1553 = vadd.f32 0.0, %v1552
        %v1554 = vpop.f32.mrb[0].mxu0
        %v1555 = vadd.f32 0.0, %v1554
        %v1556 = vpop.f32.mrb[0].mxu0
        %v1557 = vadd.f32 0.0, %v1556
        %v1558 = vpop.f32.mrb[0].mxu0
        %v1559 = vadd.f32 0.0, %v1558
        %1560 = vmatprep.mubr.bf16.mxu0 %v1120
        %1561 = vmatmul.mubr.bf16.gmra.mrb[0].mxu0 %v656
        %v1562 = vpop.f32.mrb[0].mxu0
        %v1563 = vadd.f32 0.0, %v1562
        %v1564 = vpop.f32.mrb[0].mxu0
        %v1565 = vadd.f32 0.0, %v1564
        %v1566 = vpop.f32.mrb[0].mxu0
        %v1567 = vadd.f32 0.0, %v1566
        %v1568 = vpop.f32.mrb[0].mxu0
        %v1569 = vadd.f32 0.0, %v1568
        %1570 = vmatprep.mubr.bf16.mxu0 %v1123
        %1571 = vmatmul.mubr.bf16.gmra.mrb[0].mxu0 %v658
        %v1572 = vpop.f32.mrb[0].mxu0
        %v1573 = vadd.f32 0.0, %v1572
        %v1574 = vpop.f32.mrb[0].mxu0
        %v1575 = vadd.f32 0.0, %v1574
        %v1576 = vpop.f32.mrb[0].mxu0
        %v1577 = vadd.f32 0.0, %v1576
        %v1578 = vpop.f32.mrb[0].mxu0
        %v1579 = vadd.f32 0.0, %v1578
        %1580 = vmatprep.mubr.bf16.mxu0 %v1126
        %1581 = vmatmul.mubr.bf16.gmra.mrb[0].mxu0 %v660
        %v1582 = vpop.f32.mrb[0].mxu0
        %v1583 = vadd.f32 0.0, %v1582
        %v1584 = vpop.f32.mrb[0].mxu0
        %v1585 = vadd.f32 0.0, %v1584
        %v1586 = vpop.f32.mrb[0].mxu0
        %v1587 = vadd.f32 0.0, %v1586
        %v1588 = vpop.f32.mrb[0].mxu0
        %v1589 = vadd.f32 0.0, %v1588
        %1590 = vmatprep.mubr.bf16.mxu0 %v1129
        %1591 = vmatmul.mubr.bf16.gmra.mrb[0].mxu0 %v662
        %v1592 = vpop.f32.mrb[0].mxu0
        %v1593 = vadd.f32 0.0, %v1592
        %v1594 = vpop.f32.mrb[0].mxu0
        %v1595 = vadd.f32 0.0, %v1594
        %v1596 = vpop.f32.mrb[0].mxu0
        %v1597 = vadd.f32 0.0, %v1596
        %v1598 = vpop.f32.mrb[0].mxu0
        %v1599 = vadd.f32 0.0, %v1598
        %1600 = vmatprep.mubr.bf16.mxu0 %v1132
        %1601 = vmatmul.mubr.bf16.gmra.mrb[0].mxu0 %v664
        %v1602 = vpop.f32.mrb[0].mxu0
        %v1603 = vadd.f32 0.0, %v1602
        %v1604 = vpop.f32.mrb[0].mxu0
        %v1605 = vadd.f32 0.0, %v1604
        %v1606 = vpop.f32.mrb[0].mxu0
        %v1607 = vadd.f32 0.0, %v1606
        %v1608 = vpop.f32.mrb[0].mxu0
        %v1609 = vadd.f32 0.0, %v1608
        %1610 = vmatprep.mubr.bf16.mxu0 %v1135
        %1611 = vmatmul.mubr.bf16.gmra.mrb[0].mxu0 %v666
        %v1612 = vpop.f32.mrb[0].mxu0
        %v1613 = vadd.f32 0.0, %v1612
        %v1614 = vpop.f32.mrb[0].mxu0
        %v1615 = vadd.f32 0.0, %v1614
        %v1616 = vpop.f32.mrb[0].mxu0
        %v1617 = vadd.f32 0.0, %v1616
        %v1618 = vpop.f32.mrb[0].mxu0
        %v1619 = vadd.f32 0.0, %v1618
        %1620 = vdwg.mxu0
        %1621 = vmatprep.subr.bf16.mxu0 %v939
        %1622 = vmatpush1.bf16.msra.mxu0 %v938
        %1623 = vmatprep.subr.bf16.mxu0 %v947
        %1624 = vmatpush1.bf16.msra.mxu0 %v946
        %1625 = vmatprep.subr.bf16.mxu0 %v955
        %1626 = vmatpush1.bf16.msra.mxu0 %v954
        %1627 = vmatprep.subr.bf16.mxu0 %v963
        %1628 = vmatpush1.bf16.msra.mxu0 %v962
        %1629 = vmatprep.subr.bf16.mxu0 %v971
        %1630 = vmatpush1.bf16.msra.mxu0 %v970
        %1631 = vmatprep.subr.bf16.mxu0 %v979
        %1632 = vmatpush1.bf16.msra.mxu0 %v978
        %1633 = vmatprep.subr.bf16.mxu0 %v987
        %1634 = vmatpush1.bf16.msra.mxu0 %v986
        %1635 = vmatprep.subr.bf16.mxu0 %v995
        %1636 = vmatpush1.bf16.msra.mxu0 %v994
        %1637 = vmatprep.subr.bf16.mxu0 %v1003
        %1638 = vmatpush1.bf16.msra.mxu0 %v1002
        %1639 = vmatprep.subr.bf16.mxu0 %v1011
        %1640 = vmatpush1.bf16.msra.mxu0 %v1010
        %1641 = vmatprep.subr.bf16.mxu0 %v1160
        %1642 = vmatpush1.bf16.msra.mxu0 %v1157
        %1643 = vmatprep.subr.bf16.mxu0 0
        %1644 = vmatpush1.bf16.msra.mxu0 0
        %1645 = vmatprep.subr.bf16.mxu0 0
        %1646 = vmatpush1.bf16.msra.mxu0 0
        %1647 = vmatprep.subr.bf16.mxu0 0
        %1648 = vmatpush1.bf16.msra.mxu0 0
        %1649 = vmatprep.subr.bf16.mxu0 0
        %1650 = vmatpush1.bf16.msra.mxu0 0
        %1651 = vmatprep.subr.bf16.mxu0 0
        %1652 = vmatpush1.bf16.msra.mxu0 0
        %1653 = vmatprep.mubr.bf16.mxu0 %v1102
        %1654 = vmatmul.mubr.bf16.gmra.mrb[0].mxu0 %v644
        %v1655 = vpop.f32.mrb[0].mxu0
        %v1656 = vadd.f32 0.0, %v1655
        %v1657 = vpop.f32.mrb[0].mxu0
        %v1658 = vadd.f32 0.0, %v1657
        %v1659 = vpop.f32.mrb[0].mxu0
        %v1660 = vadd.f32 0.0, %v1659
        %v1661 = vpop.f32.mrb[0].mxu0
        %v1662 = vadd.f32 0.0, %v1661
        %1663 = vmatprep.mubr.bf16.mxu0 %v1105
        %1664 = vmatmul.mubr.bf16.gmra.mrb[0].mxu0 %v646
        %v1665 = vpop.f32.mrb[0].mxu0
        %v1666 = vadd.f32 0.0, %v1665
        %v1667 = vpop.f32.mrb[0].mxu0
        %v1668 = vadd.f32 0.0, %v1667
        %v1669 = vpop.f32.mrb[0].mxu0
        %v1670 = vadd.f32 0.0, %v1669
        %v1671 = vpop.f32.mrb[0].mxu0
        %v1672 = vadd.f32 0.0, %v1671
        %1673 = vmatprep.mubr.bf16.mxu0 %v1108
        %1674 = vmatmul.mubr.bf16.gmra.mrb[0].mxu0 %v648
        %v1675 = vpop.f32.mrb[0].mxu0
        %v1676 = vadd.f32 0.0, %v1675
        %v1677 = vpop.f32.mrb[0].mxu0
        %v1678 = vadd.f32 0.0, %v1677
        %v1679 = vpop.f32.mrb[0].mxu0
        %v1680 = vadd.f32 0.0, %v1679
        %v1681 = vpop.f32.mrb[0].mxu0
        %v1682 = vadd.f32 0.0, %v1681
        %1683 = vmatprep.mubr.bf16.mxu0 %v1111
        %1684 = vmatmul.mubr.bf16.gmra.mrb[0].mxu0 %v650
        %v1685 = vpop.f32.mrb[0].mxu0
        %v1686 = vadd.f32 0.0, %v1685
        %v1687 = vpop.f32.mrb[0].mxu0
        %v1688 = vadd.f32 0.0, %v1687
        %v1689 = vpop.f32.mrb[0].mxu0
        %v1690 = vadd.f32 0.0, %v1689
        %v1691 = vpop.f32.mrb[0].mxu0
        %v1692 = vadd.f32 0.0, %v1691
        %1693 = vmatprep.mubr.bf16.mxu0 %v1114
        %1694 = vmatmul.mubr.bf16.gmra.mrb[0].mxu0 %v652
        %v1695 = vpop.f32.mrb[0].mxu0
        %v1696 = vadd.f32 0.0, %v1695
        %v1697 = vpop.f32.mrb[0].mxu0
        %v1698 = vadd.f32 0.0, %v1697
        %v1699 = vpop.f32.mrb[0].mxu0
        %v1700 = vadd.f32 0.0, %v1699
        %v1701 = vpop.f32.mrb[0].mxu0
        %v1702 = vadd.f32 0.0, %v1701
        %1703 = vmatprep.mubr.bf16.mxu0 %v1117
        %1704 = vmatmul.mubr.bf16.gmra.mrb[0].mxu0 %v654
        %v1705 = vpop.f32.mrb[0].mxu0
        %v1706 = vadd.f32 0.0, %v1705
        %v1707 = vpop.f32.mrb[0].mxu0
        %v1708 = vadd.f32 0.0, %v1707
        %v1709 = vpop.f32.mrb[0].mxu0
        %v1710 = vadd.f32 0.0, %v1709
        %v1711 = vpop.f32.mrb[0].mxu0
        %v1712 = vadd.f32 0.0, %v1711
        %1713 = vmatprep.mubr.bf16.mxu0 %v1120
        %1714 = vmatmul.mubr.bf16.gmra.mrb[0].mxu0 %v656
        %v1715 = vpop.f32.mrb[0].mxu0
        %v1716 = vadd.f32 0.0, %v1715
        %v1717 = vpop.f32.mrb[0].mxu0
        %v1718 = vadd.f32 0.0, %v1717
        %v1719 = vpop.f32.mrb[0].mxu0
        %v1720 = vadd.f32 0.0, %v1719
        %v1721 = vpop.f32.mrb[0].mxu0
        %v1722 = vadd.f32 0.0, %v1721
        %1723 = vmatprep.mubr.bf16.mxu0 %v1123
        %1724 = vmatmul.mubr.bf16.gmra.mrb[0].mxu0 %v658
        %v1725 = vpop.f32.mrb[0].mxu0
        %v1726 = vadd.f32 0.0, %v1725
        %v1727 = vpop.f32.mrb[0].mxu0
        %v1728 = vadd.f32 0.0, %v1727
        %v1729 = vpop.f32.mrb[0].mxu0
        %v1730 = vadd.f32 0.0, %v1729
        %v1731 = vpop.f32.mrb[0].mxu0
        %v1732 = vadd.f32 0.0, %v1731
        %1733 = vmatprep.mubr.bf16.mxu0 %v1126
        %1734 = vmatmul.mubr.bf16.gmra.mrb[0].mxu0 %v660
        %v1735 = vpop.f32.mrb[0].mxu0
        %v1736 = vadd.f32 0.0, %v1735
        %v1737 = vpop.f32.mrb[0].mxu0
        %v1738 = vadd.f32 0.0, %v1737
        %v1739 = vpop.f32.mrb[0].mxu0
        %v1740 = vadd.f32 0.0, %v1739
        %v1741 = vpop.f32.mrb[0].mxu0
        %v1742 = vadd.f32 0.0, %v1741
        %1743 = vmatprep.mubr.bf16.mxu0 %v1129
        %1744 = vmatmul.mubr.bf16.gmra.mrb[0].mxu0 %v662
        %v1745 = vpop.f32.mrb[0].mxu0
        %v1746 = vadd.f32 0.0, %v1745
        %v1747 = vpop.f32.mrb[0].mxu0
        %v1748 = vadd.f32 0.0, %v1747
        %v1749 = vpop.f32.mrb[0].mxu0
        %v1750 = vadd.f32 0.0, %v1749
        %v1751 = vpop.f32.mrb[0].mxu0
        %v1752 = vadd.f32 0.0, %v1751
        %1753 = vmatprep.mubr.bf16.mxu0 %v1132
        %1754 = vmatmul.mubr.bf16.gmra.mrb[0].mxu0 %v664
        %v1755 = vpop.f32.mrb[0].mxu0
        %v1756 = vadd.f32 0.0, %v1755
        %v1757 = vpop.f32.mrb[0].mxu0
        %v1758 = vadd.f32 0.0, %v1757
        %v1759 = vpop.f32.mrb[0].mxu0
        %v1760 = vadd.f32 0.0, %v1759
        %v1761 = vpop.f32.mrb[0].mxu0
        %v1762 = vadd.f32 0.0, %v1761
        %1763 = vmatprep.mubr.bf16.mxu0 %v1135
        %1764 = vmatmul.mubr.bf16.gmra.mrb[0].mxu0 %v666
        %v1765 = vpop.f32.mrb[0].mxu0
        %v1766 = vadd.f32 0.0, %v1765
        %v1767 = vpop.f32.mrb[0].mxu0
        %v1768 = vadd.f32 0.0, %v1767
        %v1769 = vpop.f32.mrb[0].mxu0
        %v1770 = vadd.f32 0.0, %v1769
        %v1771 = vpop.f32.mrb[0].mxu0
        %v1772 = vadd.f32 0.0, %v1771
        %1773 = vdwg.mxu0
        %v1774 = vmax.f32 %v1197, %v1350
        %v1775 = vmax.f32 %v1199, %v1352
        %v1776 = vmax.f32 %v1201, %v1354
        %v1777 = vmax.f32 %v1203, %v1356
        %v1778 = vmax.f32 %v1207, %v1360
        %v1779 = vmax.f32 %v1209, %v1362
        %v1780 = vmax.f32 %v1211, %v1364
        %v1781 = vmax.f32 %v1213, %v1366
        %v1782 = vmax.f32 %v1217, %v1370
        %v1783 = vmax.f32 %v1219, %v1372
        %v1784 = vmax.f32 %v1221, %v1374
        %v1785 = vmax.f32 %v1223, %v1376
        %v1786 = vmax.f32 %v1227, %v1380
        %v1787 = vmax.f32 %v1229, %v1382
        %v1788 = vmax.f32 %v1231, %v1384
        %v1789 = vmax.f32 %v1233, %v1386
        %v1790 = vmax.f32 %v1237, %v1390
        %v1791 = vmax.f32 %v1239, %v1392
        %v1792 = vmax.f32 %v1241, %v1394
        %v1793 = vmax.f32 %v1243, %v1396
        %v1794 = vmax.f32 %v1247, %v1400
        %v1795 = vmax.f32 %v1249, %v1402
        %v1796 = vmax.f32 %v1251, %v1404
        %v1797 = vmax.f32 %v1253, %v1406
        %v1798 = vmax.f32 %v1257, %v1410
        %v1799 = vmax.f32 %v1259, %v1412
        %v1800 = vmax.f32 %v1261, %v1414
        %v1801 = vmax.f32 %v1263, %v1416
        %v1802 = vmax.f32 %v1267, %v1420
        %v1803 = vmax.f32 %v1269, %v1422
        %v1804 = vmax.f32 %v1271, %v1424
        %v1805 = vmax.f32 %v1273, %v1426
        %v1806 = vmax.f32 %v1277, %v1430
        %v1807 = vmax.f32 %v1279, %v1432
        %v1808 = vmax.f32 %v1281, %v1434
        %v1809 = vmax.f32 %v1283, %v1436
        %v1810 = vmax.f32 %v1287, %v1440
        %v1811 = vmax.f32 %v1289, %v1442
        %v1812 = vmax.f32 %v1291, %v1444
        %v1813 = vmax.f32 %v1293, %v1446
        %v1814 = vmax.f32 %v1297, %v1450
        %v1815 = vmax.f32 %v1299, %v1452
        %v1816 = vmax.f32 %v1301, %v1454
        %v1817 = vmax.f32 %v1303, %v1456
        %v1818 = vmax.f32 %v1307, %v1460
        %v1819 = vmax.f32 %v1309, %v1462
        %v1820 = vmax.f32 %v1311, %v1464
        %v1821 = vmax.f32 %v1313, %v1466
        %v1822 = vmax.f32 %v1503, %v1656
        %v1823 = vmax.f32 %v1505, %v1658
        %v1824 = vmax.f32 %v1507, %v1660
        %v1825 = vmax.f32 %v1509, %v1662
        %v1826 = vmax.f32 %v1513, %v1666
        %v1827 = vmax.f32 %v1515, %v1668
        %v1828 = vmax.f32 %v1517, %v1670
        %v1829 = vmax.f32 %v1519, %v1672
        %v1830 = vmax.f32 %v1523, %v1676
        %v1831 = vmax.f32 %v1525, %v1678
        %v1832 = vmax.f32 %v1527, %v1680
        %v1833 = vmax.f32 %v1529, %v1682
        %v1834 = vmax.f32 %v1533, %v1686
        %v1835 = vmax.f32 %v1535, %v1688
        %v1836 = vmax.f32 %v1537, %v1690
        %v1837 = vmax.f32 %v1539, %v1692
        %v1838 = vmax.f32 %v1543, %v1696
        %v1839 = vmax.f32 %v1545, %v1698
        %v1840 = vmax.f32 %v1547, %v1700
        %v1841 = vmax.f32 %v1549, %v1702
        %v1842 = vmax.f32 %v1553, %v1706
        %v1843 = vmax.f32 %v1555, %v1708
        %v1844 = vmax.f32 %v1557, %v1710
        %v1845 = vmax.f32 %v1559, %v1712
        %v1846 = vmax.f32 %v1563, %v1716
        %v1847 = vmax.f32 %v1565, %v1718
        %v1848 = vmax.f32 %v1567, %v1720
        %v1849 = vmax.f32 %v1569, %v1722
        %v1850 = vmax.f32 %v1573, %v1726
        %v1851 = vmax.f32 %v1575, %v1728
        %v1852 = vmax.f32 %v1577, %v1730
        %v1853 = vmax.f32 %v1579, %v1732
        %v1854 = vmax.f32 %v1583, %v1736
        %v1855 = vmax.f32 %v1585, %v1738
        %v1856 = vmax.f32 %v1587, %v1740
        %v1857 = vmax.f32 %v1589, %v1742
        %v1858 = vmax.f32 %v1593, %v1746
        %v1859 = vmax.f32 %v1595, %v1748
        %v1860 = vmax.f32 %v1597, %v1750
        %v1861 = vmax.f32 %v1599, %v1752
        %v1862 = vmax.f32 %v1603, %v1756
        %v1863 = vmax.f32 %v1605, %v1758
        %v1864 = vmax.f32 %v1607, %v1760
        %v1865 = vmax.f32 %v1609, %v1762
        %v1866 = vmax.f32 %v1613, %v1766
        %v1867 = vmax.f32 %v1615, %v1768
        %v1868 = vmax.f32 %v1617, %v1770
        %v1869 = vmax.f32 %v1619, %v1772
        %v1870 = vmax.f32 %v1774, %v1822
        %v1871 = vmax.f32 %v1775, %v1823
        %v1872 = vmax.f32 %v1776, %v1824
        %v1873 = vmax.f32 %v1777, %v1825
        %v1874 = vmax.f32 %v1778, %v1826
        %v1875 = vmax.f32 %v1779, %v1827
        %v1876 = vmax.f32 %v1780, %v1828
        %v1877 = vmax.f32 %v1781, %v1829
        %v1878 = vmax.f32 %v1782, %v1830
        %v1879 = vmax.f32 %v1783, %v1831
        %v1880 = vmax.f32 %v1784, %v1832
        %v1881 = vmax.f32 %v1785, %v1833
        %v1882 = vmax.f32 %v1786, %v1834
        %v1883 = vmax.f32 %v1787, %v1835
        %v1884 = vmax.f32 %v1788, %v1836
        %v1885 = vmax.f32 %v1789, %v1837
        %v1886 = vmax.f32 %v1790, %v1838
        %v1887 = vmax.f32 %v1791, %v1839
        %v1888 = vmax.f32 %v1792, %v1840
        %v1889 = vmax.f32 %v1793, %v1841
        %v1890 = vmax.f32 %v1794, %v1842
        %v1891 = vmax.f32 %v1795, %v1843
        %v1892 = vmax.f32 %v1796, %v1844
        %v1893 = vmax.f32 %v1797, %v1845
        %v1894 = vmax.f32 %v1798, %v1846
        %v1895 = vmax.f32 %v1799, %v1847
        %v1896 = vmax.f32 %v1800, %v1848
        %v1897 = vmax.f32 %v1801, %v1849
        %v1898 = vmax.f32 %v1802, %v1850
        %v1899 = vmax.f32 %v1803, %v1851
        %v1900 = vmax.f32 %v1804, %v1852
        %v1901 = vmax.f32 %v1805, %v1853
        %v1902 = vmax.f32 %v1806, %v1854
        %v1903 = vmax.f32 %v1807, %v1855
        %v1904 = vmax.f32 %v1808, %v1856
        %v1905 = vmax.f32 %v1809, %v1857
        %v1906 = vmax.f32 %v1810, %v1858
        %v1907 = vmax.f32 %v1811, %v1859
        %v1908 = vmax.f32 %v1812, %v1860
        %v1909 = vmax.f32 %v1813, %v1861
        %v1910 = vmax.f32 %v1814, %v1862
        %v1911 = vmax.f32 %v1815, %v1863
        %v1912 = vmax.f32 %v1816, %v1864
        %v1913 = vmax.f32 %v1817, %v1865
        %v1914 = vmax.f32 %v1818, %v1866
        %v1915 = vmax.f32 %v1819, %v1867
        %v1916 = vmax.f32 %v1820, %v1868
        %v1917 = vmax.f32 %v1821, %v1869
        %v1918 = vld [vmem:[%s2] sm:$0x3]
        %v1920 = vlaneseq
        %v1921 = vshrl.u32 %v1920, 7
        %v1922 = vsub.s32 0, %v1921
        %v1923 = vrot.slane %v1918, %v1922
        %v1924 = vlaneseq
        %v1925 = vshrl.u32 %v1924, 7
        %v1926 = vsub.s32 1, %v1925
        %v1927 = vrot.slane %v1918, %v1926
        %v1930 = vadd.f32 %v1870, %v1923
        %v1931 = vadd.f32 %v1871, %v1927
        %v1932 = vadd.f32 %v1872, %v1923
        %v1933 = vadd.f32 %v1873, %v1927
        %v1934 = vadd.f32 %v1874, %v1923
        %v1935 = vadd.f32 %v1875, %v1927
        %v1936 = vadd.f32 %v1876, %v1923
        %v1937 = vadd.f32 %v1877, %v1927
        %v1938 = vadd.f32 %v1878, %v1923
        %v1939 = vadd.f32 %v1879, %v1927
        %v1940 = vadd.f32 %v1880, %v1923
        %v1941 = vadd.f32 %v1881, %v1927
        %v1942 = vadd.f32 %v1882, %v1923
        %v1943 = vadd.f32 %v1883, %v1927
        %v1944 = vadd.f32 %v1884, %v1923
        %v1945 = vadd.f32 %v1885, %v1927
        %v1946 = vadd.f32 %v1886, %v1923
        %v1947 = vadd.f32 %v1887, %v1927
        %v1948 = vadd.f32 %v1888, %v1923
        %v1949 = vadd.f32 %v1889, %v1927
        %v1950 = vadd.f32 %v1890, %v1923
        %v1951 = vadd.f32 %v1891, %v1927
        %v1952 = vadd.f32 %v1892, %v1923
        %v1953 = vadd.f32 %v1893, %v1927
        %v1954 = vadd.f32 %v1894, %v1923
        %v1955 = vadd.f32 %v1895, %v1927
        %v1956 = vadd.f32 %v1896, %v1923
        %v1957 = vadd.f32 %v1897, %v1927
        %v1958 = vadd.f32 %v1898, %v1923
        %v1959 = vadd.f32 %v1899, %v1927
        %v1960 = vadd.f32 %v1900, %v1923
        %v1961 = vadd.f32 %v1901, %v1927
        %v1962 = vadd.f32 %v1902, %v1923
        %v1963 = vadd.f32 %v1903, %v1927
        %v1964 = vadd.f32 %v1904, %v1923
        %v1965 = vadd.f32 %v1905, %v1927
        %v1966 = vadd.f32 %v1906, %v1923
        %v1967 = vadd.f32 %v1907, %v1927
        %v1968 = vadd.f32 %v1908, %v1923
        %v1969 = vadd.f32 %v1909, %v1927
        %v1970 = vadd.f32 %v1910, %v1923
        %v1971 = vadd.f32 %v1911, %v1927
        %v1972 = vadd.f32 %v1912, %v1923
        %v1973 = vadd.f32 %v1913, %v1927
        %v1974 = vadd.f32 %v1914, %v1923
        %v1975 = vadd.f32 %v1915, %v1927
        %v1976 = vadd.f32 %v1916, %v1923
        %v1977 = vadd.f32 %v1917, %v1927
        %v1978 = vmax.f32 %v1930, 0.0
        %v1979 = vmax.f32 %v1931, 0.0
        %v1980 = vmax.f32 %v1932, 0.0
        %v1981 = vmax.f32 %v1933, 0.0
        %v1982 = vmax.f32 %v1934, 0.0
        %v1983 = vmax.f32 %v1935, 0.0
        %v1984 = vmax.f32 %v1936, 0.0
        %v1985 = vmax.f32 %v1937, 0.0
        %v1986 = vmax.f32 %v1938, 0.0
        %v1987 = vmax.f32 %v1939, 0.0
        %v1988 = vmax.f32 %v1940, 0.0
        %v1989 = vmax.f32 %v1941, 0.0
        %v1990 = vmax.f32 %v1942, 0.0
        %v1991 = vmax.f32 %v1943, 0.0
        %v1992 = vmax.f32 %v1944, 0.0
        %v1993 = vmax.f32 %v1945, 0.0
        %v1994 = vmax.f32 %v1946, 0.0
        %v1995 = vmax.f32 %v1947, 0.0
        %v1996 = vmax.f32 %v1948, 0.0
        %v1997 = vmax.f32 %v1949, 0.0
        %v1998 = vmax.f32 %v1950, 0.0
        %v1999 = vmax.f32 %v1951, 0.0
        %v2000 = vmax.f32 %v1952, 0.0
        %v2001 = vmax.f32 %v1953, 0.0
        %v2002 = vmax.f32 %v1954, 0.0
        %v2003 = vmax.f32 %v1955, 0.0
        %v2004 = vmax.f32 %v1956, 0.0
        %v2005 = vmax.f32 %v1957, 0.0
        %v2006 = vmax.f32 %v1958, 0.0
        %v2007 = vmax.f32 %v1959, 0.0
        %v2008 = vmax.f32 %v1960, 0.0
        %v2009 = vmax.f32 %v1961, 0.0
        %v2010 = vmax.f32 %v1962, 0.0
        %v2011 = vmax.f32 %v1963, 0.0
        %v2012 = vmax.f32 %v1964, 0.0
        %v2013 = vmax.f32 %v1965, 0.0
        %v2014 = vmax.f32 %v1966, 0.0
        %v2015 = vmax.f32 %v1967, 0.0
        %v2016 = vmax.f32 %v1968, 0.0
        %v2017 = vmax.f32 %v1969, 0.0
        %v2018 = vmax.f32 %v1970, 0.0
        %v2019 = vmax.f32 %v1971, 0.0
        %v2020 = vmax.f32 %v1972, 0.0
        %v2021 = vmax.f32 %v1973, 0.0
        %v2022 = vmax.f32 %v1974, 0.0
        %v2023 = vmax.f32 %v1975, 0.0
        %v2024 = vmax.f32 %v1976, 0.0
        %v2025 = vmax.f32 %v1977, 0.0
        %v2026 = vpack.c.bf16 %v1980, %v1978
        %v2027 = vpack.c.bf16 %v1981, %v1979
        %v2028 = vpack.c.bf16 %v1984, %v1982
        %v2029 = vpack.c.bf16 %v1985, %v1983
        %v2030 = vpack.c.bf16 %v1988, %v1986
        %v2031 = vpack.c.bf16 %v1989, %v1987
        %v2032 = vpack.c.bf16 %v1992, %v1990
        %v2033 = vpack.c.bf16 %v1993, %v1991
        %v2034 = vpack.c.bf16 %v1996, %v1994
        %v2035 = vpack.c.bf16 %v1997, %v1995
        %v2036 = vpack.c.bf16 %v2000, %v1998
        %v2037 = vpack.c.bf16 %v2001, %v1999
        %v2038 = vpack.c.bf16 %v2004, %v2002
        %v2039 = vpack.c.bf16 %v2005, %v2003
        %v2040 = vpack.c.bf16 %v2008, %v2006
        %v2041 = vpack.c.bf16 %v2009, %v2007
        %v2042 = vpack.c.bf16 %v2012, %v2010
        %v2043 = vpack.c.bf16 %v2013, %v2011
        %v2044 = vpack.c.bf16 %v2016, %v2014
        %v2045 = vpack.c.bf16 %v2017, %v2015
        %v2046 = vpack.c.bf16 %v2020, %v2018
        %v2047 = vpack.c.bf16 %v2021, %v2019
        %v2048 = vpack.c.bf16 %v2024, %v2022
        %v2049 = vpack.c.bf16 %v2025, %v2023
        %2050 = vst [vmem:[#allocation2] sm:$0xff] %v2026
        %2051 = vst [vmem:[#allocation2 + $0x8] sm:$0xff] %v2027
        %2052 = vst [vmem:[#allocation2 + $0x10] sm:$0xff] %v2028
        %2053 = vst [vmem:[#allocation2 + $0x18] sm:$0xff] %v2029
        %2054 = vst [vmem:[#allocation2 + $0x20] sm:$0xff] %v2030
        %2055 = vst [vmem:[#allocation2 + $0x28] sm:$0xff] %v2031
        %2056 = vst [vmem:[#allocation2 + $0x30] sm:$0xff] %v2032
        %2057 = vst [vmem:[#allocation2 + $0x38] sm:$0xff] %v2033
        %2058 = vst [vmem:[#allocation2 + $0x40] sm:$0xff] %v2034
        %2059 = vst [vmem:[#allocation2 + $0x48] sm:$0xff] %v2035
        %2060 = vst [vmem:[#allocation2 + $0x50] sm:$0xff] %v2036
        %2061 = vst [vmem:[#allocation2 + $0x58] sm:$0xff] %v2037
        %2062 = vst [vmem:[#allocation2 + $0x60] sm:$0xff] %v2038
        %2063 = vst [vmem:[#allocation2 + $0x68] sm:$0xff] %v2039
        %2064 = vst [vmem:[#allocation2 + $0x70] sm:$0xff] %v2040
        %2065 = vst [vmem:[#allocation2 + $0x78] sm:$0xff] %v2041
        %2066 = vst [vmem:[#allocation2 + $0x80] sm:$0xff] %v2042
        %2067 = vst [vmem:[#allocation2 + $0x88] sm:$0xff] %v2043
        %2068 = vst [vmem:[#allocation2 + $0x90] sm:$0xff] %v2044
        %2069 = vst [vmem:[#allocation2 + $0x98] sm:$0xff] %v2045
        %2070 = vst [vmem:[#allocation2 + $0xa0] sm:$0xff] %v2046
        %2071 = vst [vmem:[#allocation2 + $0xa8] sm:$0xff] %v2047
        %2072 = vst [vmem:[#allocation2 + $0xb0] sm:$0xff] %v2048
        %2073 = vst [vmem:[#allocation2 + $0xb8] sm:$0xff] %v2049
        %v2074 = vld [vmem:[#allocation2] sm:$0xff]
        %v2075 = vld [vmem:[#allocation2 + $0x8] sm:$0xff]
        %v2076 = vld [vmem:[#allocation2 + $0x20] sm:$0xff]
        %v2077 = vld [vmem:[#allocation2 + $0x28] sm:$0xff]
        %v2078 = vld [vmem:[#allocation2 + $0x40] sm:$0xff]
        %v2079 = vld [vmem:[#allocation2 + $0x48] sm:$0xff]
        %v2080 = vld [vmem:[#allocation2 + $0x60] sm:$0xff]
        %v2081 = vld [vmem:[#allocation2 + $0x68] sm:$0xff]
        %s2082 = scalar_lea.vmem [#allocation2], 16
        %v2083 = vld [vmem:[%s2082] sm:$0xff]
        %v2084 = vld [vmem:[%s2082 + $0x8] sm:$0xff]
        %v2085 = vld [vmem:[%s2082 + $0x20] sm:$0xff]
        %v2086 = vld [vmem:[%s2082 + $0x28] sm:$0xff]
        %v2087 = vld [vmem:[%s2082 + $0x40] sm:$0xff]
        %v2088 = vld [vmem:[%s2082 + $0x48] sm:$0xff]
        %v2089 = vld [vmem:[%s2082 + $0x60] sm:$0xff]
        %v2090 = vld [vmem:[%s2082 + $0x68] sm:$0xff]
        %s2091 = scalar_lea.vmem [#allocation2], 32
        %v2092 = vld [vmem:[%s2091] sm:$0xff]
        %v2093 = vld [vmem:[%s2091 + $0x8] sm:$0xff]
        %v2094 = vld [vmem:[%s2091 + $0x20] sm:$0xff]
        %v2095 = vld [vmem:[%s2091 + $0x28] sm:$0xff]
        %v2096 = vld [vmem:[%s2091 + $0x40] sm:$0xff]
        %v2097 = vld [vmem:[%s2091 + $0x48] sm:$0xff]
        %v2098 = vld [vmem:[%s2091 + $0x60] sm:$0xff]
        %v2099 = vld [vmem:[%s2091 + $0x68] sm:$0xff]
        %s2100 = scalar_lea.vmem [#allocation2], 48
        %v2101 = vld [vmem:[%s2100] sm:$0xff]
        %v2102 = vld [vmem:[%s2100 + $0x8] sm:$0xff]
        %v2103 = vld [vmem:[%s2100 + $0x20] sm:$0xff]
        %v2104 = vld [vmem:[%s2100 + $0x28] sm:$0xff]
        %v2105 = vld [vmem:[%s2100 + $0x40] sm:$0xff]
        %v2106 = vld [vmem:[%s2100 + $0x48] sm:$0xff]
        %v2107 = vld [vmem:[%s2100 + $0x60] sm:$0xff]
        %v2108 = vld [vmem:[%s2100 + $0x68] sm:$0xff]
        %s2109 = scalar_lea.vmem [#allocation2], 64
        %v2110 = vld [vmem:[%s2109] sm:$0xff]
        %v2111 = vld [vmem:[%s2109 + $0x8] sm:$0xff]
        %v2112 = vld [vmem:[%s2109 + $0x20] sm:$0xff]
        %v2113 = vld [vmem:[%s2109 + $0x28] sm:$0xff]
        %v2114 = vld [vmem:[%s2109 + $0x40] sm:$0xff]
        %v2115 = vld [vmem:[%s2109 + $0x48] sm:$0xff]
        %v2116 = vld [vmem:[%s2109 + $0x60] sm:$0xff]
        %v2117 = vld [vmem:[%s2109 + $0x68] sm:$0xff]
        %s2118 = scalar_lea.vmem [#allocation2], 80
        %v2119 = vld [vmem:[%s2118] sm:$0xff]
        %v2120 = vld [vmem:[%s2118 + $0x8] sm:$0xff]
        %v2121 = vld [vmem:[%s2118 + $0x20] sm:$0xff]
        %v2122 = vld [vmem:[%s2118 + $0x28] sm:$0xff]
        %v2123 = vld [vmem:[%s2118 + $0x40] sm:$0xff]
        %v2124 = vld [vmem:[%s2118 + $0x48] sm:$0xff]
        %v2125 = vld [vmem:[%s2118 + $0x60] sm:$0xff]
        %v2126 = vld [vmem:[%s2118 + $0x68] sm:$0xff]
        %v2127 = vld [vmem:[%s3] sm:$0xff]
        %v2128 = vld [vmem:[%s3 + $0x8] sm:$0xff]
        %v2129 = vld [vmem:[%s3 + $0x10] sm:$0xff]
        %v2130 = vld [vmem:[%s3 + $0x18] sm:$0xff]
        %v2131 = vld [vmem:[%s3 + $0x20] sm:$0xff]
        %v2132 = vld [vmem:[%s3 + $0x28] sm:$0xff]
        %v2133 = vld [vmem:[%s3 + $0x30] sm:$0xff]
        %v2134 = vld [vmem:[%s3 + $0x38] sm:$0xff]
        %v2135 = vld [vmem:[%s3 + $0x40] sm:$0xff]
        %v2136 = vld [vmem:[%s3 + $0x48] sm:$0xff]
        %v2137 = vld [vmem:[%s3 + $0x50] sm:$0xff]
        %v2138 = vld [vmem:[%s3 + $0x58] sm:$0xff]
        %v2139 = vld [vmem:[%s3 + $0x60] sm:$0xff]
        %v2140 = vld [vmem:[%s3 + $0x68] sm:$0xff]
        %v2141 = vld [vmem:[%s3 + $0x70] sm:$0xff]
        %v2142 = vld [vmem:[%s3 + $0x78] sm:$0xff]
        %v2143 = vld [vmem:[%s3 + $0x80] sm:$0xff]
        %v2144 = vld [vmem:[%s3 + $0x88] sm:$0xff]
        %v2145 = vld [vmem:[%s3 + $0x90] sm:$0xff]
        %v2146 = vld [vmem:[%s3 + $0x98] sm:$0xff]
        %v2147 = vld [vmem:[%s3 + $0xa0] sm:$0xff]
        %v2148 = vld [vmem:[%s3 + $0xa8] sm:$0xff]
        %v2149 = vld [vmem:[%s3 + $0xb0] sm:$0xff]
        %v2150 = vld [vmem:[%s3 + $0xb8] sm:$0xff]
        %v2151 = vld [vmem:[%s3 + $0xc0] sm:$0xff]
        %v2152 = vld [vmem:[%s3 + $0xc8] sm:$0xff]
        %v2153 = vld [vmem:[%s3 + $0xd0] sm:$0xff]
        %v2154 = vld [vmem:[%s3 + $0xd8] sm:$0xff]
        %v2155 = vld [vmem:[%s3 + $0xe0] sm:$0xff]
        %v2156 = vld [vmem:[%s3 + $0xe8] sm:$0xff]
        %v2157 = vld [vmem:[%s3 + $0xf0] sm:$0xff]
        %v2158 = vld [vmem:[%s3 + $0xf8] sm:$0xff]
        %v2159 = vld [vmem:[%s3 + $0x100] sm:$0xff]
        %v2160 = vld [vmem:[%s3 + $0x108] sm:$0xff]
        %v2161 = vld [vmem:[%s3 + $0x110] sm:$0xff]
        %v2162 = vld [vmem:[%s3 + $0x118] sm:$0xff]
        %v2163 = vld [vmem:[%s3 + $0x120] sm:$0xff]
        %v2164 = vld [vmem:[%s3 + $0x128] sm:$0xff]
        %v2165 = vld [vmem:[%s3 + $0x130] sm:$0xff]
        %v2166 = vld [vmem:[%s3 + $0x138] sm:$0xff]
        %v2167 = vld [vmem:[%s3 + $0x140] sm:$0xff]
        %v2168 = vld [vmem:[%s3 + $0x148] sm:$0xff]
        %v2169 = vld [vmem:[%s3 + $0x150] sm:$0xff]
        %v2170 = vld [vmem:[%s3 + $0x158] sm:$0xff]
        %v2171 = vld [vmem:[%s3 + $0x160] sm:$0xff]
        %v2172 = vld [vmem:[%s3 + $0x168] sm:$0xff]
        %v2173 = vld [vmem:[%s3 + $0x170] sm:$0xff]
        %v2174 = vld [vmem:[%s3 + $0x178] sm:$0xff]
        %v2175 = vld [vmem:[%s3 + $0x180] sm:$0xff]
        %v2176 = vld [vmem:[%s3 + $0x188] sm:$0xff]
        %v2177 = vld [vmem:[%s3 + $0x190] sm:$0xff]
        %v2178 = vld [vmem:[%s3 + $0x198] sm:$0xff]
        %v2179 = vld [vmem:[%s3 + $0x1a0] sm:$0xff]
        %v2180 = vld [vmem:[%s3 + $0x1a8] sm:$0xff]
        %v2181 = vld [vmem:[%s3 + $0x1b0] sm:$0xff]
        %v2182 = vld [vmem:[%s3 + $0x1b8] sm:$0xff]
        %v2183 = vld [vmem:[%s3 + $0x1c0] sm:$0xff]
        %v2184 = vld [vmem:[%s3 + $0x1c8] sm:$0xff]
        %v2185 = vld [vmem:[%s3 + $0x1d0] sm:$0xff]
        %v2186 = vld [vmem:[%s3 + $0x1d8] sm:$0xff]
        %v2187 = vld [vmem:[%s3 + $0x1e0] sm:$0xff]
        %v2188 = vld [vmem:[%s3 + $0x1e8] sm:$0xff]
        %v2189 = vld [vmem:[%s3 + $0x1f0] sm:$0xff]
        %v2190 = vld [vmem:[%s3 + $0x1f8] sm:$0xff]
        %v2191 = vld [vmem:[%s3 + $0x200] sm:$0xff]
        %v2192 = vld [vmem:[%s3 + $0x208] sm:$0xff]
        %v2193 = vld [vmem:[%s3 + $0x210] sm:$0xff]
        %v2194 = vld [vmem:[%s3 + $0x218] sm:$0xff]
        %v2195 = vld [vmem:[%s3 + $0x220] sm:$0xff]
        %v2196 = vld [vmem:[%s3 + $0x228] sm:$0xff]
        %v2197 = vld [vmem:[%s3 + $0x230] sm:$0xff]
        %v2198 = vld [vmem:[%s3 + $0x238] sm:$0xff]
        %v2199 = vld [vmem:[%s3 + $0x240] sm:$0xff]
        %v2200 = vld [vmem:[%s3 + $0x248] sm:$0xff]
        %v2201 = vld [vmem:[%s3 + $0x250] sm:$0xff]
        %v2202 = vld [vmem:[%s3 + $0x258] sm:$0xff]
        %v2203 = vld [vmem:[%s3 + $0x260] sm:$0xff]
        %v2204 = vld [vmem:[%s3 + $0x268] sm:$0xff]
        %v2205 = vld [vmem:[%s3 + $0x270] sm:$0xff]
        %v2206 = vld [vmem:[%s3 + $0x278] sm:$0xff]
        %v2207 = vld [vmem:[%s3 + $0x280] sm:$0xff]
        %v2208 = vld [vmem:[%s3 + $0x288] sm:$0xff]
        %v2209 = vld [vmem:[%s3 + $0x290] sm:$0xff]
        %v2210 = vld [vmem:[%s3 + $0x298] sm:$0xff]
        %v2211 = vld [vmem:[%s3 + $0x2a0] sm:$0xff]
        %v2212 = vld [vmem:[%s3 + $0x2a8] sm:$0xff]
        %v2213 = vld [vmem:[%s3 + $0x2b0] sm:$0xff]
        %v2214 = vld [vmem:[%s3 + $0x2b8] sm:$0xff]
        %v2215 = vld [vmem:[%s3 + $0x2c0] sm:$0xff]
        %v2216 = vld [vmem:[%s3 + $0x2c8] sm:$0xff]
        %v2217 = vld [vmem:[%s3 + $0x2d0] sm:$0xff]
        %v2218 = vld [vmem:[%s3 + $0x2d8] sm:$0xff]
        %v2219 = vld [vmem:[%s3 + $0x2e0] sm:$0xff]
        %v2220 = vld [vmem:[%s3 + $0x2e8] sm:$0xff]
        %v2221 = vld [vmem:[%s3 + $0x2f0] sm:$0xff]
        %v2222 = vld [vmem:[%s3 + $0x2f8] sm:$0xff]
        %v2223 = vld [vmem:[%s3 + $0x300] sm:$0xff]
        %v2224 = vld [vmem:[%s3 + $0x308] sm:$0xff]
        %v2225 = vld [vmem:[%s3 + $0x310] sm:$0xff]
        %v2226 = vld [vmem:[%s3 + $0x318] sm:$0xff]
        %v2227 = vld [vmem:[%s3 + $0x320] sm:$0xff]
        %v2228 = vld [vmem:[%s3 + $0x328] sm:$0xff]
        %v2229 = vld [vmem:[%s3 + $0x330] sm:$0xff]
        %v2230 = vld [vmem:[%s3 + $0x338] sm:$0xff]
        %v2231 = vld [vmem:[%s3 + $0x340] sm:$0xff]
        %v2232 = vld [vmem:[%s3 + $0x348] sm:$0xff]
        %v2233 = vld [vmem:[%s3 + $0x350] sm:$0xff]
        %v2234 = vld [vmem:[%s3 + $0x358] sm:$0xff]
        %v2235 = vld [vmem:[%s3 + $0x360] sm:$0xff]
        %v2236 = vld [vmem:[%s3 + $0x368] sm:$0xff]
        %v2237 = vld [vmem:[%s3 + $0x370] sm:$0xff]
        %v2238 = vld [vmem:[%s3 + $0x378] sm:$0xff]
        %v2239 = vld [vmem:[%s3 + $0x380] sm:$0xff]
        %v2240 = vld [vmem:[%s3 + $0x388] sm:$0xff]
        %v2241 = vld [vmem:[%s3 + $0x390] sm:$0xff]
        %v2242 = vld [vmem:[%s3 + $0x398] sm:$0xff]
        %v2243 = vld [vmem:[%s3 + $0x3a0] sm:$0xff]
        %v2244 = vld [vmem:[%s3 + $0x3a8] sm:$0xff]
        %v2245 = vld [vmem:[%s3 + $0x3b0] sm:$0xff]
        %v2246 = vld [vmem:[%s3 + $0x3b8] sm:$0xff]
        %v2247 = vld [vmem:[%s3 + $0x3c0] sm:$0xff]
        %v2248 = vld [vmem:[%s3 + $0x3c8] sm:$0xff]
        %v2249 = vld [vmem:[%s3 + $0x3d0] sm:$0xff]
        %v2250 = vld [vmem:[%s3 + $0x3d8] sm:$0xff]
        %v2251 = vld [vmem:[%s3 + $0x3e0] sm:$0xff]
        %v2252 = vld [vmem:[%s3 + $0x3e8] sm:$0xff]
        %v2253 = vld [vmem:[%s3 + $0x3f0] sm:$0xff]
        %v2254 = vld [vmem:[%s3 + $0x3f8] sm:$0xff]
        %v2255 = vld [vmem:[%s3 + $0x400] sm:$0xff]
        %v2256 = vld [vmem:[%s3 + $0x408] sm:$0xff]
        %v2257 = vld [vmem:[%s3 + $0x410] sm:$0xff]
        %v2258 = vld [vmem:[%s3 + $0x418] sm:$0xff]
        %v2259 = vld [vmem:[%s3 + $0x420] sm:$0xff]
        %v2260 = vld [vmem:[%s3 + $0x428] sm:$0xff]
        %v2261 = vld [vmem:[%s3 + $0x430] sm:$0xff]
        %v2262 = vld [vmem:[%s3 + $0x438] sm:$0xff]
        %v2263 = vld [vmem:[%s3 + $0x440] sm:$0xff]
        %v2264 = vld [vmem:[%s3 + $0x448] sm:$0xff]
        %v2265 = vld [vmem:[%s3 + $0x450] sm:$0xff]
        %v2266 = vld [vmem:[%s3 + $0x458] sm:$0xff]
        %v2267 = vld [vmem:[%s3 + $0x460] sm:$0xff]
        %v2268 = vld [vmem:[%s3 + $0x468] sm:$0xff]
        %v2269 = vld [vmem:[%s3 + $0x470] sm:$0xff]
        %v2270 = vld [vmem:[%s3 + $0x478] sm:$0xff]
        %v2271 = vld [vmem:[%s3 + $0x480] sm:$0xff]
        %v2272 = vld [vmem:[%s3 + $0x488] sm:$0xff]
        %v2273 = vld [vmem:[%s3 + $0x490] sm:$0xff]
        %v2274 = vld [vmem:[%s3 + $0x498] sm:$0xff]
        %v2275 = vld [vmem:[%s3 + $0x4a0] sm:$0xff]
        %v2276 = vld [vmem:[%s3 + $0x4a8] sm:$0xff]
        %v2277 = vld [vmem:[%s3 + $0x4b0] sm:$0xff]
        %v2278 = vld [vmem:[%s3 + $0x4b8] sm:$0xff]
        %v2279 = vld [vmem:[%s3 + $0x4c0] sm:$0xff]
        %v2280 = vld [vmem:[%s3 + $0x4c8] sm:$0xff]
        %v2281 = vld [vmem:[%s3 + $0x4d0] sm:$0xff]
        %v2282 = vld [vmem:[%s3 + $0x4d8] sm:$0xff]
        %v2283 = vld [vmem:[%s3 + $0x4e0] sm:$0xff]
        %v2284 = vld [vmem:[%s3 + $0x4e8] sm:$0xff]
        %v2285 = vld [vmem:[%s3 + $0x4f0] sm:$0xff]
        %v2286 = vld [vmem:[%s3 + $0x4f8] sm:$0xff]
        %v2287 = vld [vmem:[%s3 + $0x500] sm:$0xff]
        %v2288 = vld [vmem:[%s3 + $0x508] sm:$0xff]
        %v2289 = vld [vmem:[%s3 + $0x510] sm:$0xff]
        %v2290 = vld [vmem:[%s3 + $0x518] sm:$0xff]
        %v2291 = vld [vmem:[%s3 + $0x520] sm:$0xff]
        %v2292 = vld [vmem:[%s3 + $0x528] sm:$0xff]
        %v2293 = vld [vmem:[%s3 + $0x530] sm:$0xff]
        %v2294 = vld [vmem:[%s3 + $0x538] sm:$0xff]
        %v2295 = vld [vmem:[%s3 + $0x540] sm:$0xff]
        %v2296 = vld [vmem:[%s3 + $0x548] sm:$0xff]
        %v2297 = vld [vmem:[%s3 + $0x550] sm:$0xff]
        %v2298 = vld [vmem:[%s3 + $0x558] sm:$0xff]
        %v2299 = vld [vmem:[%s3 + $0x560] sm:$0xff]
        %v2300 = vld [vmem:[%s3 + $0x568] sm:$0xff]
        %v2301 = vld [vmem:[%s3 + $0x570] sm:$0xff]
        %v2302 = vld [vmem:[%s3 + $0x578] sm:$0xff]
        %v2303 = vld [vmem:[%s3 + $0x580] sm:$0xff]
        %v2304 = vld [vmem:[%s3 + $0x588] sm:$0xff]
        %v2305 = vld [vmem:[%s3 + $0x590] sm:$0xff]
        %v2306 = vld [vmem:[%s3 + $0x598] sm:$0xff]
        %v2307 = vld [vmem:[%s3 + $0x5a0] sm:$0xff]
        %v2308 = vld [vmem:[%s3 + $0x5a8] sm:$0xff]
        %v2309 = vld [vmem:[%s3 + $0x5b0] sm:$0xff]
        %v2310 = vld [vmem:[%s3 + $0x5b8] sm:$0xff]
        %v2311 = vld [vmem:[%s3 + $0x5c0] sm:$0xff]
        %v2312 = vld [vmem:[%s3 + $0x5c8] sm:$0xff]
        %v2313 = vld [vmem:[%s3 + $0x5d0] sm:$0xff]
        %v2314 = vld [vmem:[%s3 + $0x5d8] sm:$0xff]
        %v2315 = vld [vmem:[%s3 + $0x5e0] sm:$0xff]
        %v2316 = vld [vmem:[%s3 + $0x5e8] sm:$0xff]
        %v2317 = vld [vmem:[%s3 + $0x5f0] sm:$0xff]
        %v2318 = vld [vmem:[%s3 + $0x5f8] sm:$0xff]
        %v2319 = vld [vmem:[%s3 + $0x600] sm:$0xff]
        %v2320 = vld [vmem:[%s3 + $0x608] sm:$0xff]
        %v2321 = vld [vmem:[%s3 + $0x610] sm:$0xff]
        %v2322 = vld [vmem:[%s3 + $0x618] sm:$0xff]
        %v2323 = vld [vmem:[%s3 + $0x620] sm:$0xff]
        %v2324 = vld [vmem:[%s3 + $0x628] sm:$0xff]
        %v2325 = vld [vmem:[%s3 + $0x630] sm:$0xff]
        %v2326 = vld [vmem:[%s3 + $0x638] sm:$0xff]
        %v2327 = vld [vmem:[%s3 + $0x640] sm:$0xff]
        %v2328 = vld [vmem:[%s3 + $0x648] sm:$0xff]
        %v2329 = vld [vmem:[%s3 + $0x650] sm:$0xff]
        %v2330 = vld [vmem:[%s3 + $0x658] sm:$0xff]
        %v2331 = vld [vmem:[%s3 + $0x660] sm:$0xff]
        %v2332 = vld [vmem:[%s3 + $0x668] sm:$0xff]
        %v2333 = vld [vmem:[%s3 + $0x670] sm:$0xff]
        %v2334 = vld [vmem:[%s3 + $0x678] sm:$0xff]
        %v2335 = vld [vmem:[%s3 + $0x680] sm:$0xff]
        %v2336 = vld [vmem:[%s3 + $0x688] sm:$0xff]
        %v2337 = vld [vmem:[%s3 + $0x690] sm:$0xff]
        %v2338 = vld [vmem:[%s3 + $0x698] sm:$0xff]
        %v2339 = vld [vmem:[%s3 + $0x6a0] sm:$0xff]
        %v2340 = vld [vmem:[%s3 + $0x6a8] sm:$0xff]
        %v2341 = vld [vmem:[%s3 + $0x6b0] sm:$0xff]
        %v2342 = vld [vmem:[%s3 + $0x6b8] sm:$0xff]
        %v2343 = vld [vmem:[%s3 + $0x6c0] sm:$0xff]
        %v2344 = vld [vmem:[%s3 + $0x6c8] sm:$0xff]
        %v2345 = vld [vmem:[%s3 + $0x6d0] sm:$0xff]
        %v2346 = vld [vmem:[%s3 + $0x6d8] sm:$0xff]
        %v2347 = vld [vmem:[%s3 + $0x6e0] sm:$0xff]
        %v2348 = vld [vmem:[%s3 + $0x6e8] sm:$0xff]
        %v2349 = vld [vmem:[%s3 + $0x6f0] sm:$0xff]
        %v2350 = vld [vmem:[%s3 + $0x6f8] sm:$0xff]
        %v2351 = vld [vmem:[%s3 + $0x700] sm:$0xff]
        %v2352 = vld [vmem:[%s3 + $0x708] sm:$0xff]
        %v2353 = vld [vmem:[%s3 + $0x710] sm:$0xff]
        %v2354 = vld [vmem:[%s3 + $0x718] sm:$0xff]
        %v2355 = vld [vmem:[%s3 + $0x720] sm:$0xff]
        %v2356 = vld [vmem:[%s3 + $0x728] sm:$0xff]
        %v2357 = vld [vmem:[%s3 + $0x730] sm:$0xff]
        %v2358 = vld [vmem:[%s3 + $0x738] sm:$0xff]
        %v2359 = vld [vmem:[%s3 + $0x740] sm:$0xff]
        %v2360 = vld [vmem:[%s3 + $0x748] sm:$0xff]
        %v2361 = vld [vmem:[%s3 + $0x750] sm:$0xff]
        %v2362 = vld [vmem:[%s3 + $0x758] sm:$0xff]
        %v2363 = vld [vmem:[%s3 + $0x760] sm:$0xff]
        %v2364 = vld [vmem:[%s3 + $0x768] sm:$0xff]
        %v2365 = vld [vmem:[%s3 + $0x770] sm:$0xff]
        %v2366 = vld [vmem:[%s3 + $0x778] sm:$0xff]
        %v2367 = vld [vmem:[%s3 + $0x780] sm:$0xff]
        %v2368 = vld [vmem:[%s3 + $0x788] sm:$0xff]
        %v2369 = vld [vmem:[%s3 + $0x790] sm:$0xff]
        %v2370 = vld [vmem:[%s3 + $0x798] sm:$0xff]
        %v2371 = vld [vmem:[%s3 + $0x7a0] sm:$0xff]
        %v2372 = vld [vmem:[%s3 + $0x7a8] sm:$0xff]
        %v2373 = vld [vmem:[%s3 + $0x7b0] sm:$0xff]
        %v2374 = vld [vmem:[%s3 + $0x7b8] sm:$0xff]
        %v2375 = vld [vmem:[%s3 + $0x7c0] sm:$0xff]
        %v2376 = vld [vmem:[%s3 + $0x7c8] sm:$0xff]
        %v2377 = vld [vmem:[%s3 + $0x7d0] sm:$0xff]
        %v2378 = vld [vmem:[%s3 + $0x7d8] sm:$0xff]
        %v2379 = vld [vmem:[%s3 + $0x7e0] sm:$0xff]
        %v2380 = vld [vmem:[%s3 + $0x7e8] sm:$0xff]
        %v2381 = vld [vmem:[%s3 + $0x7f0] sm:$0xff]
        %v2382 = vld [vmem:[%s3 + $0x7f8] sm:$0xff]
        %v2383 = vld [vmem:[%s3 + $0x800] sm:$0xff]
        %v2384 = vld [vmem:[%s3 + $0x808] sm:$0xff]
        %v2385 = vld [vmem:[%s3 + $0x810] sm:$0xff]
        %v2386 = vld [vmem:[%s3 + $0x818] sm:$0xff]
        %v2387 = vld [vmem:[%s3 + $0x820] sm:$0xff]
        %v2388 = vld [vmem:[%s3 + $0x828] sm:$0xff]
        %v2389 = vld [vmem:[%s3 + $0x830] sm:$0xff]
        %v2390 = vld [vmem:[%s3 + $0x838] sm:$0xff]
        %v2391 = vld [vmem:[%s3 + $0x840] sm:$0xff]
        %v2392 = vld [vmem:[%s3 + $0x848] sm:$0xff]
        %v2393 = vld [vmem:[%s3 + $0x850] sm:$0xff]
        %v2394 = vld [vmem:[%s3 + $0x858] sm:$0xff]
        %v2395 = vld [vmem:[%s3 + $0x860] sm:$0xff]
        %v2396 = vld [vmem:[%s3 + $0x868] sm:$0xff]
        %v2397 = vld [vmem:[%s3 + $0x870] sm:$0xff]
        %v2398 = vld [vmem:[%s3 + $0x878] sm:$0xff]
        %v2399 = vld [vmem:[%s3 + $0x880] sm:$0xff]
        %v2400 = vld [vmem:[%s3 + $0x888] sm:$0xff]
        %v2401 = vld [vmem:[%s3 + $0x890] sm:$0xff]
        %v2402 = vld [vmem:[%s3 + $0x898] sm:$0xff]
        %v2403 = vld [vmem:[%s3 + $0x8a0] sm:$0xff]
        %v2404 = vld [vmem:[%s3 + $0x8a8] sm:$0xff]
        %v2405 = vld [vmem:[%s3 + $0x8b0] sm:$0xff]
        %v2406 = vld [vmem:[%s3 + $0x8b8] sm:$0xff]
        %v2407 = vld [vmem:[%s3 + $0x8c0] sm:$0xff]
        %v2408 = vld [vmem:[%s3 + $0x8c8] sm:$0xff]
        %v2409 = vld [vmem:[%s3 + $0x8d0] sm:$0xff]
        %v2410 = vld [vmem:[%s3 + $0x8d8] sm:$0xff]
        %v2411 = vld [vmem:[%s3 + $0x8e0] sm:$0xff]
        %v2412 = vld [vmem:[%s3 + $0x8e8] sm:$0xff]
        %v2413 = vld [vmem:[%s3 + $0x8f0] sm:$0xff]
        %v2414 = vld [vmem:[%s3 + $0x8f8] sm:$0xff]
        %v2415 = vld [vmem:[%s3 + $0x900] sm:$0xff]
        %v2416 = vld [vmem:[%s3 + $0x908] sm:$0xff]
        %v2417 = vld [vmem:[%s3 + $0x910] sm:$0xff]
        %v2418 = vld [vmem:[%s3 + $0x918] sm:$0xff]
        %v2419 = vld [vmem:[%s3 + $0x920] sm:$0xff]
        %v2420 = vld [vmem:[%s3 + $0x928] sm:$0xff]
        %v2421 = vld [vmem:[%s3 + $0x930] sm:$0xff]
        %v2422 = vld [vmem:[%s3 + $0x938] sm:$0xff]
        %v2423 = vld [vmem:[%s3 + $0x940] sm:$0xff]
        %v2424 = vld [vmem:[%s3 + $0x948] sm:$0xff]
        %v2425 = vld [vmem:[%s3 + $0x950] sm:$0xff]
        %v2426 = vld [vmem:[%s3 + $0x958] sm:$0xff]
        %v2427 = vld [vmem:[%s3 + $0x960] sm:$0xff]
        %v2428 = vld [vmem:[%s3 + $0x968] sm:$0xff]
        %v2429 = vld [vmem:[%s3 + $0x970] sm:$0xff]
        %v2430 = vld [vmem:[%s3 + $0x978] sm:$0xff]
        %v2431 = vld [vmem:[%s3 + $0x980] sm:$0xff]
        %v2432 = vld [vmem:[%s3 + $0x988] sm:$0xff]
        %v2433 = vld [vmem:[%s3 + $0x990] sm:$0xff]
        %v2434 = vld [vmem:[%s3 + $0x998] sm:$0xff]
        %v2435 = vld [vmem:[%s3 + $0x9a0] sm:$0xff]
        %v2436 = vld [vmem:[%s3 + $0x9a8] sm:$0xff]
        %v2437 = vld [vmem:[%s3 + $0x9b0] sm:$0xff]
        %v2438 = vld [vmem:[%s3 + $0x9b8] sm:$0xff]
        %v2439 = vld [vmem:[%s3 + $0x9c0] sm:$0xff]
        %v2440 = vld [vmem:[%s3 + $0x9c8] sm:$0xff]
        %v2441 = vld [vmem:[%s3 + $0x9d0] sm:$0xff]
        %v2442 = vld [vmem:[%s3 + $0x9d8] sm:$0xff]
        %v2443 = vld [vmem:[%s3 + $0x9e0] sm:$0xff]
        %v2444 = vld [vmem:[%s3 + $0x9e8] sm:$0xff]
        %v2445 = vld [vmem:[%s3 + $0x9f0] sm:$0xff]
        %v2446 = vld [vmem:[%s3 + $0x9f8] sm:$0xff]
        %v2447 = vld [vmem:[%s3 + $0xa00] sm:$0xff]
        %v2448 = vld [vmem:[%s3 + $0xa08] sm:$0xff]
        %v2449 = vld [vmem:[%s3 + $0xa10] sm:$0xff]
        %v2450 = vld [vmem:[%s3 + $0xa18] sm:$0xff]
        %v2451 = vld [vmem:[%s3 + $0xa20] sm:$0xff]
        %v2452 = vld [vmem:[%s3 + $0xa28] sm:$0xff]
        %v2453 = vld [vmem:[%s3 + $0xa30] sm:$0xff]
        %v2454 = vld [vmem:[%s3 + $0xa38] sm:$0xff]
        %v2455 = vld [vmem:[%s3 + $0xa40] sm:$0xff]
        %v2456 = vld [vmem:[%s3 + $0xa48] sm:$0xff]
        %v2457 = vld [vmem:[%s3 + $0xa50] sm:$0xff]
        %v2458 = vld [vmem:[%s3 + $0xa58] sm:$0xff]
        %v2459 = vld [vmem:[%s3 + $0xa60] sm:$0xff]
        %v2460 = vld [vmem:[%s3 + $0xa68] sm:$0xff]
        %v2461 = vld [vmem:[%s3 + $0xa70] sm:$0xff]
        %v2462 = vld [vmem:[%s3 + $0xa78] sm:$0xff]
        %v2463 = vld [vmem:[%s3 + $0xa80] sm:$0xff]
        %v2464 = vld [vmem:[%s3 + $0xa88] sm:$0xff]
        %v2465 = vld [vmem:[%s3 + $0xa90] sm:$0xff]
        %v2466 = vld [vmem:[%s3 + $0xa98] sm:$0xff]
        %v2467 = vld [vmem:[%s3 + $0xaa0] sm:$0xff]
        %v2468 = vld [vmem:[%s3 + $0xaa8] sm:$0xff]
        %v2469 = vld [vmem:[%s3 + $0xab0] sm:$0xff]
        %v2470 = vld [vmem:[%s3 + $0xab8] sm:$0xff]
        %v2471 = vld [vmem:[%s3 + $0xac0] sm:$0xff]
        %v2472 = vld [vmem:[%s3 + $0xac8] sm:$0xff]
        %v2473 = vld [vmem:[%s3 + $0xad0] sm:$0xff]
        %v2474 = vld [vmem:[%s3 + $0xad8] sm:$0xff]
        %v2475 = vld [vmem:[%s3 + $0xae0] sm:$0xff]
        %v2476 = vld [vmem:[%s3 + $0xae8] sm:$0xff]
        %v2477 = vld [vmem:[%s3 + $0xaf0] sm:$0xff]
        %v2478 = vld [vmem:[%s3 + $0xaf8] sm:$0xff]
        %v2479 = vld [vmem:[%s3 + $0xb00] sm:$0xff]
        %v2480 = vld [vmem:[%s3 + $0xb08] sm:$0xff]
        %v2481 = vld [vmem:[%s3 + $0xb10] sm:$0xff]
        %v2482 = vld [vmem:[%s3 + $0xb18] sm:$0xff]
        %v2483 = vld [vmem:[%s3 + $0xb20] sm:$0xff]
        %v2484 = vld [vmem:[%s3 + $0xb28] sm:$0xff]
        %v2485 = vld [vmem:[%s3 + $0xb30] sm:$0xff]
        %v2486 = vld [vmem:[%s3 + $0xb38] sm:$0xff]
        %v2487 = vld [vmem:[%s3 + $0xb40] sm:$0xff]
        %v2488 = vld [vmem:[%s3 + $0xb48] sm:$0xff]
        %v2489 = vld [vmem:[%s3 + $0xb50] sm:$0xff]
        %v2490 = vld [vmem:[%s3 + $0xb58] sm:$0xff]
        %v2491 = vld [vmem:[%s3 + $0xb60] sm:$0xff]
        %v2492 = vld [vmem:[%s3 + $0xb68] sm:$0xff]
        %v2493 = vld [vmem:[%s3 + $0xb70] sm:$0xff]
        %v2494 = vld [vmem:[%s3 + $0xb78] sm:$0xff]
        %v2495 = vld [vmem:[%s3 + $0xb80] sm:$0xff]
        %v2496 = vld [vmem:[%s3 + $0xb88] sm:$0xff]
        %v2497 = vld [vmem:[%s3 + $0xb90] sm:$0xff]
        %v2498 = vld [vmem:[%s3 + $0xb98] sm:$0xff]
        %v2499 = vld [vmem:[%s3 + $0xba0] sm:$0xff]
        %v2500 = vld [vmem:[%s3 + $0xba8] sm:$0xff]
        %v2501 = vld [vmem:[%s3 + $0xbb0] sm:$0xff]
        %v2502 = vld [vmem:[%s3 + $0xbb8] sm:$0xff]
        %v2503 = vld [vmem:[%s3 + $0xbc0] sm:$0xff]
        %v2504 = vld [vmem:[%s3 + $0xbc8] sm:$0xff]
        %v2505 = vld [vmem:[%s3 + $0xbd0] sm:$0xff]
        %v2506 = vld [vmem:[%s3 + $0xbd8] sm:$0xff]
        %v2507 = vld [vmem:[%s3 + $0xbe0] sm:$0xff]
        %v2508 = vld [vmem:[%s3 + $0xbe8] sm:$0xff]
        %v2509 = vld [vmem:[%s3 + $0xbf0] sm:$0xff]
        %v2510 = vld [vmem:[%s3 + $0xbf8] sm:$0xff]
        %v2895 = vunpack.c.l.b16 %v2127
        %v2896 = vunpack.c.h.b16 %v2127
        %v2897 = vunpack.c.l.b16 %v2128
        %v2898 = vunpack.c.h.b16 %v2128
        %v2899 = vunpack.c.l.b16 %v2129
        %v2900 = vunpack.c.h.b16 %v2129
        %v2901 = vunpack.c.l.b16 %v2130
        %v2902 = vunpack.c.h.b16 %v2130
        %v2903 = vunpack.c.l.b16 %v2131
        %v2904 = vunpack.c.h.b16 %v2131
        %v2905 = vunpack.c.l.b16 %v2132
        %v2906 = vunpack.c.h.b16 %v2132
        %v2907 = vunpack.c.l.b16 %v2133
        %v2908 = vunpack.c.h.b16 %v2133
        %v2909 = vunpack.c.l.b16 %v2134
        %v2910 = vunpack.c.h.b16 %v2134
        %v2911 = vunpack.c.l.b16 %v2135
        %v2912 = vunpack.c.h.b16 %v2135
        %v2913 = vunpack.c.l.b16 %v2136
        %v2914 = vunpack.c.h.b16 %v2136
        %v2915 = vunpack.c.l.b16 %v2137
        %v2916 = vunpack.c.h.b16 %v2137
        %v2917 = vunpack.c.l.b16 %v2138
        %v2918 = vunpack.c.h.b16 %v2138
        %v2919 = vunpack.c.l.b16 %v2139
        %v2920 = vunpack.c.h.b16 %v2139
        %v2921 = vunpack.c.l.b16 %v2140
        %v2922 = vunpack.c.h.b16 %v2140
        %v2923 = vunpack.c.l.b16 %v2141
        %v2924 = vunpack.c.h.b16 %v2141
        %v2925 = vunpack.c.l.b16 %v2142
        %v2926 = vunpack.c.h.b16 %v2142
        %v2927 = vunpack.c.l.b16 %v2143
        %v2928 = vunpack.c.h.b16 %v2143
        %v2929 = vunpack.c.l.b16 %v2144
        %v2930 = vunpack.c.h.b16 %v2144
        %v2931 = vunpack.c.l.b16 %v2145
        %v2932 = vunpack.c.h.b16 %v2145
        %v2933 = vunpack.c.l.b16 %v2146
        %v2934 = vunpack.c.h.b16 %v2146
        %v2935 = vunpack.c.l.b16 %v2147
        %v2936 = vunpack.c.h.b16 %v2147
        %v2937 = vunpack.c.l.b16 %v2148
        %v2938 = vunpack.c.h.b16 %v2148
        %v2939 = vunpack.c.l.b16 %v2149
        %v2940 = vunpack.c.h.b16 %v2149
        %v2941 = vunpack.c.l.b16 %v2150
        %v2942 = vunpack.c.h.b16 %v2150
        %v2943 = vunpack.c.l.b16 %v2151
        %v2944 = vunpack.c.h.b16 %v2151
        %v2945 = vunpack.c.l.b16 %v2152
        %v2946 = vunpack.c.h.b16 %v2152
        %v2947 = vunpack.c.l.b16 %v2153
        %v2948 = vunpack.c.h.b16 %v2153
        %v2949 = vunpack.c.l.b16 %v2154
        %v2950 = vunpack.c.h.b16 %v2154
        %v2951 = vunpack.c.l.b16 %v2155
        %v2952 = vunpack.c.h.b16 %v2155
        %v2953 = vunpack.c.l.b16 %v2156
        %v2954 = vunpack.c.h.b16 %v2156
        %v2955 = vunpack.c.l.b16 %v2157
        %v2956 = vunpack.c.h.b16 %v2157
        %v2957 = vunpack.c.l.b16 %v2158
        %v2958 = vunpack.c.h.b16 %v2158
        %v2959 = vunpack.c.l.b16 %v2159
        %v2960 = vunpack.c.h.b16 %v2159
        %v2961 = vunpack.c.l.b16 %v2160
        %v2962 = vunpack.c.h.b16 %v2160
        %v2963 = vunpack.c.l.b16 %v2161
        %v2964 = vunpack.c.h.b16 %v2161
        %v2965 = vunpack.c.l.b16 %v2162
        %v2966 = vunpack.c.h.b16 %v2162
        %v2967 = vunpack.c.l.b16 %v2163
        %v2968 = vunpack.c.h.b16 %v2163
        %v2969 = vunpack.c.l.b16 %v2164
        %v2970 = vunpack.c.h.b16 %v2164
        %v2971 = vunpack.c.l.b16 %v2165
        %v2972 = vunpack.c.h.b16 %v2165
        %v2973 = vunpack.c.l.b16 %v2166
        %v2974 = vunpack.c.h.b16 %v2166
        %v2975 = vunpack.c.l.b16 %v2167
        %v2976 = vunpack.c.h.b16 %v2167
        %v2977 = vunpack.c.l.b16 %v2168
        %v2978 = vunpack.c.h.b16 %v2168
        %v2979 = vunpack.c.l.b16 %v2169
        %v2980 = vunpack.c.h.b16 %v2169
        %v2981 = vunpack.c.l.b16 %v2170
        %v2982 = vunpack.c.h.b16 %v2170
        %v2983 = vunpack.c.l.b16 %v2171
        %v2984 = vunpack.c.h.b16 %v2171
        %v2985 = vunpack.c.l.b16 %v2172
        %v2986 = vunpack.c.h.b16 %v2172
        %v2987 = vunpack.c.l.b16 %v2173
        %v2988 = vunpack.c.h.b16 %v2173
        %v2989 = vunpack.c.l.b16 %v2174
        %v2990 = vunpack.c.h.b16 %v2174
        %v2991 = vunpack.c.l.b16 %v2175
        %v2992 = vunpack.c.h.b16 %v2175
        %v2993 = vunpack.c.l.b16 %v2176
        %v2994 = vunpack.c.h.b16 %v2176
        %v2995 = vunpack.c.l.b16 %v2177
        %v2996 = vunpack.c.h.b16 %v2177
        %v2997 = vunpack.c.l.b16 %v2178
        %v2998 = vunpack.c.h.b16 %v2178
        %v2999 = vunpack.c.l.b16 %v2179
        %v3000 = vunpack.c.h.b16 %v2179
        %v3001 = vunpack.c.l.b16 %v2180
        %v3002 = vunpack.c.h.b16 %v2180
        %v3003 = vunpack.c.l.b16 %v2181
        %v3004 = vunpack.c.h.b16 %v2181
        %v3005 = vunpack.c.l.b16 %v2182
        %v3006 = vunpack.c.h.b16 %v2182
        %v3007 = vunpack.c.l.b16 %v2183
        %v3008 = vunpack.c.h.b16 %v2183
        %v3009 = vunpack.c.l.b16 %v2184
        %v3010 = vunpack.c.h.b16 %v2184
        %v3011 = vunpack.c.l.b16 %v2185
        %v3012 = vunpack.c.h.b16 %v2185
        %v3013 = vunpack.c.l.b16 %v2186
        %v3014 = vunpack.c.h.b16 %v2186
        %v3015 = vunpack.c.l.b16 %v2187
        %v3016 = vunpack.c.h.b16 %v2187
        %v3017 = vunpack.c.l.b16 %v2188
        %v3018 = vunpack.c.h.b16 %v2188
        %v3019 = vunpack.c.l.b16 %v2189
        %v3020 = vunpack.c.h.b16 %v2189
        %v3021 = vunpack.c.l.b16 %v2190
        %v3022 = vunpack.c.h.b16 %v2190
        %v3023 = vunpack.c.l.b16 %v2191
        %v3024 = vunpack.c.h.b16 %v2191
        %v3025 = vunpack.c.l.b16 %v2192
        %v3026 = vunpack.c.h.b16 %v2192
        %v3027 = vunpack.c.l.b16 %v2193
        %v3028 = vunpack.c.h.b16 %v2193
        %v3029 = vunpack.c.l.b16 %v2194
        %v3030 = vunpack.c.h.b16 %v2194
        %v3031 = vunpack.c.l.b16 %v2195
        %v3032 = vunpack.c.h.b16 %v2195
        %v3033 = vunpack.c.l.b16 %v2196
        %v3034 = vunpack.c.h.b16 %v2196
        %v3035 = vunpack.c.l.b16 %v2197
        %v3036 = vunpack.c.h.b16 %v2197
        %v3037 = vunpack.c.l.b16 %v2198
        %v3038 = vunpack.c.h.b16 %v2198
        %v3039 = vunpack.c.l.b16 %v2199
        %v3040 = vunpack.c.h.b16 %v2199
        %v3041 = vunpack.c.l.b16 %v2200
        %v3042 = vunpack.c.h.b16 %v2200
        %v3043 = vunpack.c.l.b16 %v2201
        %v3044 = vunpack.c.h.b16 %v2201
        %v3045 = vunpack.c.l.b16 %v2202
        %v3046 = vunpack.c.h.b16 %v2202
        %v3047 = vunpack.c.l.b16 %v2203
        %v3048 = vunpack.c.h.b16 %v2203
        %v3049 = vunpack.c.l.b16 %v2204
        %v3050 = vunpack.c.h.b16 %v2204
        %v3051 = vunpack.c.l.b16 %v2205
        %v3052 = vunpack.c.h.b16 %v2205
        %v3053 = vunpack.c.l.b16 %v2206
        %v3054 = vunpack.c.h.b16 %v2206
        %v3055 = vunpack.c.l.b16 %v2207
        %v3056 = vunpack.c.h.b16 %v2207
        %v3057 = vunpack.c.l.b16 %v2208
        %v3058 = vunpack.c.h.b16 %v2208
        %v3059 = vunpack.c.l.b16 %v2209
        %v3060 = vunpack.c.h.b16 %v2209
        %v3061 = vunpack.c.l.b16 %v2210
        %v3062 = vunpack.c.h.b16 %v2210
        %v3063 = vunpack.c.l.b16 %v2211
        %v3064 = vunpack.c.h.b16 %v2211
        %v3065 = vunpack.c.l.b16 %v2212
        %v3066 = vunpack.c.h.b16 %v2212
        %v3067 = vunpack.c.l.b16 %v2213
        %v3068 = vunpack.c.h.b16 %v2213
        %v3069 = vunpack.c.l.b16 %v2214
        %v3070 = vunpack.c.h.b16 %v2214
        %v3071 = vunpack.c.l.b16 %v2215
        %v3072 = vunpack.c.h.b16 %v2215
        %v3073 = vunpack.c.l.b16 %v2216
        %v3074 = vunpack.c.h.b16 %v2216
        %v3075 = vunpack.c.l.b16 %v2217
        %v3076 = vunpack.c.h.b16 %v2217
        %v3077 = vunpack.c.l.b16 %v2218
        %v3078 = vunpack.c.h.b16 %v2218
        %v3079 = vunpack.c.l.b16 %v2219
        %v3080 = vunpack.c.h.b16 %v2219
        %v3081 = vunpack.c.l.b16 %v2220
        %v3082 = vunpack.c.h.b16 %v2220
        %v3083 = vunpack.c.l.b16 %v2221
        %v3084 = vunpack.c.h.b16 %v2221
        %v3085 = vunpack.c.l.b16 %v2222
        %v3086 = vunpack.c.h.b16 %v2222
        %v3087 = vunpack.c.l.b16 %v2223
        %v3088 = vunpack.c.h.b16 %v2223
        %v3089 = vunpack.c.l.b16 %v2224
        %v3090 = vunpack.c.h.b16 %v2224
        %v3091 = vunpack.c.l.b16 %v2225
        %v3092 = vunpack.c.h.b16 %v2225
        %v3093 = vunpack.c.l.b16 %v2226
        %v3094 = vunpack.c.h.b16 %v2226
        %v3095 = vunpack.c.l.b16 %v2227
        %v3096 = vunpack.c.h.b16 %v2227
        %v3097 = vunpack.c.l.b16 %v2228
        %v3098 = vunpack.c.h.b16 %v2228
        %v3099 = vunpack.c.l.b16 %v2229
        %v3100 = vunpack.c.h.b16 %v2229
        %v3101 = vunpack.c.l.b16 %v2230
        %v3102 = vunpack.c.h.b16 %v2230
        %v3103 = vunpack.c.l.b16 %v2231
        %v3104 = vunpack.c.h.b16 %v2231
        %v3105 = vunpack.c.l.b16 %v2232
        %v3106 = vunpack.c.h.b16 %v2232
        %v3107 = vunpack.c.l.b16 %v2233
        %v3108 = vunpack.c.h.b16 %v2233
        %v3109 = vunpack.c.l.b16 %v2234
        %v3110 = vunpack.c.h.b16 %v2234
        %v3111 = vunpack.c.l.b16 %v2235
        %v3112 = vunpack.c.h.b16 %v2235
        %v3113 = vunpack.c.l.b16 %v2236
        %v3114 = vunpack.c.h.b16 %v2236
        %v3115 = vunpack.c.l.b16 %v2237
        %v3116 = vunpack.c.h.b16 %v2237
        %v3117 = vunpack.c.l.b16 %v2238
        %v3118 = vunpack.c.h.b16 %v2238
        %v3119 = vunpack.c.l.b16 %v2239
        %v3120 = vunpack.c.h.b16 %v2239
        %v3121 = vunpack.c.l.b16 %v2240
        %v3122 = vunpack.c.h.b16 %v2240
        %v3123 = vunpack.c.l.b16 %v2241
        %v3124 = vunpack.c.h.b16 %v2241
        %v3125 = vunpack.c.l.b16 %v2242
        %v3126 = vunpack.c.h.b16 %v2242
        %v3127 = vunpack.c.l.b16 %v2243
        %v3128 = vunpack.c.h.b16 %v2243
        %v3129 = vunpack.c.l.b16 %v2244
        %v3130 = vunpack.c.h.b16 %v2244
        %v3131 = vunpack.c.l.b16 %v2245
        %v3132 = vunpack.c.h.b16 %v2245
        %v3133 = vunpack.c.l.b16 %v2246
        %v3134 = vunpack.c.h.b16 %v2246
        %v3135 = vunpack.c.l.b16 %v2247
        %v3136 = vunpack.c.h.b16 %v2247
        %v3137 = vunpack.c.l.b16 %v2248
        %v3138 = vunpack.c.h.b16 %v2248
        %v3139 = vunpack.c.l.b16 %v2249
        %v3140 = vunpack.c.h.b16 %v2249
        %v3141 = vunpack.c.l.b16 %v2250
        %v3142 = vunpack.c.h.b16 %v2250
        %v3143 = vunpack.c.l.b16 %v2251
        %v3144 = vunpack.c.h.b16 %v2251
        %v3145 = vunpack.c.l.b16 %v2252
        %v3146 = vunpack.c.h.b16 %v2252
        %v3147 = vunpack.c.l.b16 %v2253
        %v3148 = vunpack.c.h.b16 %v2253
        %v3149 = vunpack.c.l.b16 %v2254
        %v3150 = vunpack.c.h.b16 %v2254
        %v3151 = vunpack.c.l.b16 %v2255
        %v3152 = vunpack.c.h.b16 %v2255
        %v3153 = vunpack.c.l.b16 %v2256
        %v3154 = vunpack.c.h.b16 %v2256
        %v3155 = vunpack.c.l.b16 %v2257
        %v3156 = vunpack.c.h.b16 %v2257
        %v3157 = vunpack.c.l.b16 %v2258
        %v3158 = vunpack.c.h.b16 %v2258
        %v3159 = vunpack.c.l.b16 %v2259
        %v3160 = vunpack.c.h.b16 %v2259
        %v3161 = vunpack.c.l.b16 %v2260
        %v3162 = vunpack.c.h.b16 %v2260
        %v3163 = vunpack.c.l.b16 %v2261
        %v3164 = vunpack.c.h.b16 %v2261
        %v3165 = vunpack.c.l.b16 %v2262
        %v3166 = vunpack.c.h.b16 %v2262
        %v3167 = vunpack.c.l.b16 %v2263
        %v3168 = vunpack.c.h.b16 %v2263
        %v3169 = vunpack.c.l.b16 %v2264
        %v3170 = vunpack.c.h.b16 %v2264
        %v3171 = vunpack.c.l.b16 %v2265
        %v3172 = vunpack.c.h.b16 %v2265
        %v3173 = vunpack.c.l.b16 %v2266
        %v3174 = vunpack.c.h.b16 %v2266
        %v3175 = vunpack.c.l.b16 %v2267
        %v3176 = vunpack.c.h.b16 %v2267
        %v3177 = vunpack.c.l.b16 %v2268
        %v3178 = vunpack.c.h.b16 %v2268
        %v3179 = vunpack.c.l.b16 %v2269
        %v3180 = vunpack.c.h.b16 %v2269
        %v3181 = vunpack.c.l.b16 %v2270
        %v3182 = vunpack.c.h.b16 %v2270
        %v3183 = vunpack.c.l.b16 %v2271
        %v3184 = vunpack.c.h.b16 %v2271
        %v3185 = vunpack.c.l.b16 %v2272
        %v3186 = vunpack.c.h.b16 %v2272
        %v3187 = vunpack.c.l.b16 %v2273
        %v3188 = vunpack.c.h.b16 %v2273
        %v3189 = vunpack.c.l.b16 %v2274
        %v3190 = vunpack.c.h.b16 %v2274
        %v3191 = vunpack.c.l.b16 %v2275
        %v3192 = vunpack.c.h.b16 %v2275
        %v3193 = vunpack.c.l.b16 %v2276
        %v3194 = vunpack.c.h.b16 %v2276
        %v3195 = vunpack.c.l.b16 %v2277
        %v3196 = vunpack.c.h.b16 %v2277
        %v3197 = vunpack.c.l.b16 %v2278
        %v3198 = vunpack.c.h.b16 %v2278
        %v3199 = vunpack.c.l.b16 %v2279
        %v3200 = vunpack.c.h.b16 %v2279
        %v3201 = vunpack.c.l.b16 %v2280
        %v3202 = vunpack.c.h.b16 %v2280
        %v3203 = vunpack.c.l.b16 %v2281
        %v3204 = vunpack.c.h.b16 %v2281
        %v3205 = vunpack.c.l.b16 %v2282
        %v3206 = vunpack.c.h.b16 %v2282
        %v3207 = vunpack.c.l.b16 %v2283
        %v3208 = vunpack.c.h.b16 %v2283
        %v3209 = vunpack.c.l.b16 %v2284
        %v3210 = vunpack.c.h.b16 %v2284
        %v3211 = vunpack.c.l.b16 %v2285
        %v3212 = vunpack.c.h.b16 %v2285
        %v3213 = vunpack.c.l.b16 %v2286
        %v3214 = vunpack.c.h.b16 %v2286
        %v3215 = vunpack.c.l.b16 %v2287
        %v3216 = vunpack.c.h.b16 %v2287
        %v3217 = vunpack.c.l.b16 %v2288
        %v3218 = vunpack.c.h.b16 %v2288
        %v3219 = vunpack.c.l.b16 %v2289
        %v3220 = vunpack.c.h.b16 %v2289
        %v3221 = vunpack.c.l.b16 %v2290
        %v3222 = vunpack.c.h.b16 %v2290
        %v3223 = vunpack.c.l.b16 %v2291
        %v3224 = vunpack.c.h.b16 %v2291
        %v3225 = vunpack.c.l.b16 %v2292
        %v3226 = vunpack.c.h.b16 %v2292
        %v3227 = vunpack.c.l.b16 %v2293
        %v3228 = vunpack.c.h.b16 %v2293
        %v3229 = vunpack.c.l.b16 %v2294
        %v3230 = vunpack.c.h.b16 %v2294
        %v3231 = vunpack.c.l.b16 %v2295
        %v3232 = vunpack.c.h.b16 %v2295
        %v3233 = vunpack.c.l.b16 %v2296
        %v3234 = vunpack.c.h.b16 %v2296
        %v3235 = vunpack.c.l.b16 %v2297
        %v3236 = vunpack.c.h.b16 %v2297
        %v3237 = vunpack.c.l.b16 %v2298
        %v3238 = vunpack.c.h.b16 %v2298
        %v3239 = vunpack.c.l.b16 %v2299
        %v3240 = vunpack.c.h.b16 %v2299
        %v3241 = vunpack.c.l.b16 %v2300
        %v3242 = vunpack.c.h.b16 %v2300
        %v3243 = vunpack.c.l.b16 %v2301
        %v3244 = vunpack.c.h.b16 %v2301
        %v3245 = vunpack.c.l.b16 %v2302
        %v3246 = vunpack.c.h.b16 %v2302
        %v3247 = vunpack.c.l.b16 %v2303
        %v3248 = vunpack.c.h.b16 %v2303
        %v3249 = vunpack.c.l.b16 %v2304
        %v3250 = vunpack.c.h.b16 %v2304
        %v3251 = vunpack.c.l.b16 %v2305
        %v3252 = vunpack.c.h.b16 %v2305
        %v3253 = vunpack.c.l.b16 %v2306
        %v3254 = vunpack.c.h.b16 %v2306
        %v3255 = vunpack.c.l.b16 %v2307
        %v3256 = vunpack.c.h.b16 %v2307
        %v3257 = vunpack.c.l.b16 %v2308
        %v3258 = vunpack.c.h.b16 %v2308
        %v3259 = vunpack.c.l.b16 %v2309
        %v3260 = vunpack.c.h.b16 %v2309
        %v3261 = vunpack.c.l.b16 %v2310
        %v3262 = vunpack.c.h.b16 %v2310
        %v3263 = vunpack.c.l.b16 %v2311
        %v3264 = vunpack.c.h.b16 %v2311
        %v3265 = vunpack.c.l.b16 %v2312
        %v3266 = vunpack.c.h.b16 %v2312
        %v3267 = vunpack.c.l.b16 %v2313
        %v3268 = vunpack.c.h.b16 %v2313
        %v3269 = vunpack.c.l.b16 %v2314
        %v3270 = vunpack.c.h.b16 %v2314
        %v3271 = vunpack.c.l.b16 %v2315
        %v3272 = vunpack.c.h.b16 %v2315
        %v3273 = vunpack.c.l.b16 %v2316
        %v3274 = vunpack.c.h.b16 %v2316
        %v3275 = vunpack.c.l.b16 %v2317
        %v3276 = vunpack.c.h.b16 %v2317
        %v3277 = vunpack.c.l.b16 %v2318
        %v3278 = vunpack.c.h.b16 %v2318
        %v3279 = vunpack.c.l.b16 %v2319
        %v3280 = vunpack.c.h.b16 %v2319
        %v3281 = vunpack.c.l.b16 %v2320
        %v3282 = vunpack.c.h.b16 %v2320
        %v3283 = vunpack.c.l.b16 %v2321
        %v3284 = vunpack.c.h.b16 %v2321
        %v3285 = vunpack.c.l.b16 %v2322
        %v3286 = vunpack.c.h.b16 %v2322
        %v3287 = vunpack.c.l.b16 %v2323
        %v3288 = vunpack.c.h.b16 %v2323
        %v3289 = vunpack.c.l.b16 %v2324
        %v3290 = vunpack.c.h.b16 %v2324
        %v3291 = vunpack.c.l.b16 %v2325
        %v3292 = vunpack.c.h.b16 %v2325
        %v3293 = vunpack.c.l.b16 %v2326
        %v3294 = vunpack.c.h.b16 %v2326
        %v3295 = vunpack.c.l.b16 %v2327
        %v3296 = vunpack.c.h.b16 %v2327
        %v3297 = vunpack.c.l.b16 %v2328
        %v3298 = vunpack.c.h.b16 %v2328
        %v3299 = vunpack.c.l.b16 %v2329
        %v3300 = vunpack.c.h.b16 %v2329
        %v3301 = vunpack.c.l.b16 %v2330
        %v3302 = vunpack.c.h.b16 %v2330
        %v3303 = vunpack.c.l.b16 %v2331
        %v3304 = vunpack.c.h.b16 %v2331
        %v3305 = vunpack.c.l.b16 %v2332
        %v3306 = vunpack.c.h.b16 %v2332
        %v3307 = vunpack.c.l.b16 %v2333
        %v3308 = vunpack.c.h.b16 %v2333
        %v3309 = vunpack.c.l.b16 %v2334
        %v3310 = vunpack.c.h.b16 %v2334
        %v3311 = vunpack.c.l.b16 %v2335
        %v3312 = vunpack.c.h.b16 %v2335
        %v3313 = vunpack.c.l.b16 %v2336
        %v3314 = vunpack.c.h.b16 %v2336
        %v3315 = vunpack.c.l.b16 %v2337
        %v3316 = vunpack.c.h.b16 %v2337
        %v3317 = vunpack.c.l.b16 %v2338
        %v3318 = vunpack.c.h.b16 %v2338
        %v3319 = vunpack.c.l.b16 %v2339
        %v3320 = vunpack.c.h.b16 %v2339
        %v3321 = vunpack.c.l.b16 %v2340
        %v3322 = vunpack.c.h.b16 %v2340
        %v3323 = vunpack.c.l.b16 %v2341
        %v3324 = vunpack.c.h.b16 %v2341
        %v3325 = vunpack.c.l.b16 %v2342
        %v3326 = vunpack.c.h.b16 %v2342
        %v3327 = vunpack.c.l.b16 %v2343
        %v3328 = vunpack.c.h.b16 %v2343
        %v3329 = vunpack.c.l.b16 %v2344
        %v3330 = vunpack.c.h.b16 %v2344
        %v3331 = vunpack.c.l.b16 %v2345
        %v3332 = vunpack.c.h.b16 %v2345
        %v3333 = vunpack.c.l.b16 %v2346
        %v3334 = vunpack.c.h.b16 %v2346
        %v3335 = vunpack.c.l.b16 %v2347
        %v3336 = vunpack.c.h.b16 %v2347
        %v3337 = vunpack.c.l.b16 %v2348
        %v3338 = vunpack.c.h.b16 %v2348
        %v3339 = vunpack.c.l.b16 %v2349
        %v3340 = vunpack.c.h.b16 %v2349
        %v3341 = vunpack.c.l.b16 %v2350
        %v3342 = vunpack.c.h.b16 %v2350
        %v3343 = vunpack.c.l.b16 %v2351
        %v3344 = vunpack.c.h.b16 %v2351
        %v3345 = vunpack.c.l.b16 %v2352
        %v3346 = vunpack.c.h.b16 %v2352
        %v3347 = vunpack.c.l.b16 %v2353
        %v3348 = vunpack.c.h.b16 %v2353
        %v3349 = vunpack.c.l.b16 %v2354
        %v3350 = vunpack.c.h.b16 %v2354
        %v3351 = vunpack.c.l.b16 %v2355
        %v3352 = vunpack.c.h.b16 %v2355
        %v3353 = vunpack.c.l.b16 %v2356
        %v3354 = vunpack.c.h.b16 %v2356
        %v3355 = vunpack.c.l.b16 %v2357
        %v3356 = vunpack.c.h.b16 %v2357
        %v3357 = vunpack.c.l.b16 %v2358
        %v3358 = vunpack.c.h.b16 %v2358
        %v3359 = vunpack.c.l.b16 %v2359
        %v3360 = vunpack.c.h.b16 %v2359
        %v3361 = vunpack.c.l.b16 %v2360
        %v3362 = vunpack.c.h.b16 %v2360
        %v3363 = vunpack.c.l.b16 %v2361
        %v3364 = vunpack.c.h.b16 %v2361
        %v3365 = vunpack.c.l.b16 %v2362
        %v3366 = vunpack.c.h.b16 %v2362
        %v3367 = vunpack.c.l.b16 %v2363
        %v3368 = vunpack.c.h.b16 %v2363
        %v3369 = vunpack.c.l.b16 %v2364
        %v3370 = vunpack.c.h.b16 %v2364
        %v3371 = vunpack.c.l.b16 %v2365
        %v3372 = vunpack.c.h.b16 %v2365
        %v3373 = vunpack.c.l.b16 %v2366
        %v3374 = vunpack.c.h.b16 %v2366
        %v3375 = vunpack.c.l.b16 %v2367
        %v3376 = vunpack.c.h.b16 %v2367
        %v3377 = vunpack.c.l.b16 %v2368
        %v3378 = vunpack.c.h.b16 %v2368
        %v3379 = vunpack.c.l.b16 %v2369
        %v3380 = vunpack.c.h.b16 %v2369
        %v3381 = vunpack.c.l.b16 %v2370
        %v3382 = vunpack.c.h.b16 %v2370
        %v3383 = vunpack.c.l.b16 %v2371
        %v3384 = vunpack.c.h.b16 %v2371
        %v3385 = vunpack.c.l.b16 %v2372
        %v3386 = vunpack.c.h.b16 %v2372
        %v3387 = vunpack.c.l.b16 %v2373
        %v3388 = vunpack.c.h.b16 %v2373
        %v3389 = vunpack.c.l.b16 %v2374
        %v3390 = vunpack.c.h.b16 %v2374
        %v3391 = vunpack.c.l.b16 %v2375
        %v3392 = vunpack.c.h.b16 %v2375
        %v3393 = vunpack.c.l.b16 %v2376
        %v3394 = vunpack.c.h.b16 %v2376
        %v3395 = vunpack.c.l.b16 %v2377
        %v3396 = vunpack.c.h.b16 %v2377
        %v3397 = vunpack.c.l.b16 %v2378
        %v3398 = vunpack.c.h.b16 %v2378
        %v3399 = vunpack.c.l.b16 %v2379
        %v3400 = vunpack.c.h.b16 %v2379
        %v3401 = vunpack.c.l.b16 %v2380
        %v3402 = vunpack.c.h.b16 %v2380
        %v3403 = vunpack.c.l.b16 %v2381
        %v3404 = vunpack.c.h.b16 %v2381
        %v3405 = vunpack.c.l.b16 %v2382
        %v3406 = vunpack.c.h.b16 %v2382
        %v3407 = vunpack.c.l.b16 %v2383
        %v3408 = vunpack.c.h.b16 %v2383
        %v3409 = vunpack.c.l.b16 %v2384
        %v3410 = vunpack.c.h.b16 %v2384
        %v3411 = vunpack.c.l.b16 %v2385
        %v3412 = vunpack.c.h.b16 %v2385
        %v3413 = vunpack.c.l.b16 %v2386
        %v3414 = vunpack.c.h.b16 %v2386
        %v3415 = vunpack.c.l.b16 %v2387
        %v3416 = vunpack.c.h.b16 %v2387
        %v3417 = vunpack.c.l.b16 %v2388
        %v3418 = vunpack.c.h.b16 %v2388
        %v3419 = vunpack.c.l.b16 %v2389
        %v3420 = vunpack.c.h.b16 %v2389
        %v3421 = vunpack.c.l.b16 %v2390
        %v3422 = vunpack.c.h.b16 %v2390
        %v3423 = vunpack.c.l.b16 %v2391
        %v3424 = vunpack.c.h.b16 %v2391
        %v3425 = vunpack.c.l.b16 %v2392
        %v3426 = vunpack.c.h.b16 %v2392
        %v3427 = vunpack.c.l.b16 %v2393
        %v3428 = vunpack.c.h.b16 %v2393
        %v3429 = vunpack.c.l.b16 %v2394
        %v3430 = vunpack.c.h.b16 %v2394
        %v3431 = vunpack.c.l.b16 %v2395
        %v3432 = vunpack.c.h.b16 %v2395
        %v3433 = vunpack.c.l.b16 %v2396
        %v3434 = vunpack.c.h.b16 %v2396
        %v3435 = vunpack.c.l.b16 %v2397
        %v3436 = vunpack.c.h.b16 %v2397
        %v3437 = vunpack.c.l.b16 %v2398
        %v3438 = vunpack.c.h.b16 %v2398
        %v3439 = vunpack.c.l.b16 %v2399
        %v3440 = vunpack.c.h.b16 %v2399
        %v3441 = vunpack.c.l.b16 %v2400
        %v3442 = vunpack.c.h.b16 %v2400
        %v3443 = vunpack.c.l.b16 %v2401
        %v3444 = vunpack.c.h.b16 %v2401
        %v3445 = vunpack.c.l.b16 %v2402
        %v3446 = vunpack.c.h.b16 %v2402
        %v3447 = vunpack.c.l.b16 %v2403
        %v3448 = vunpack.c.h.b16 %v2403
        %v3449 = vunpack.c.l.b16 %v2404
        %v3450 = vunpack.c.h.b16 %v2404
        %v3451 = vunpack.c.l.b16 %v2405
        %v3452 = vunpack.c.h.b16 %v2405
        %v3453 = vunpack.c.l.b16 %v2406
        %v3454 = vunpack.c.h.b16 %v2406
        %v3455 = vunpack.c.l.b16 %v2407
        %v3456 = vunpack.c.h.b16 %v2407
        %v3457 = vunpack.c.l.b16 %v2408
        %v3458 = vunpack.c.h.b16 %v2408
        %v3459 = vunpack.c.l.b16 %v2409
        %v3460 = vunpack.c.h.b16 %v2409
        %v3461 = vunpack.c.l.b16 %v2410
        %v3462 = vunpack.c.h.b16 %v2410
        %v3463 = vunpack.c.l.b16 %v2411
        %v3464 = vunpack.c.h.b16 %v2411
        %v3465 = vunpack.c.l.b16 %v2412
        %v3466 = vunpack.c.h.b16 %v2412
        %v3467 = vunpack.c.l.b16 %v2413
        %v3468 = vunpack.c.h.b16 %v2413
        %v3469 = vunpack.c.l.b16 %v2414
        %v3470 = vunpack.c.h.b16 %v2414
        %v3471 = vunpack.c.l.b16 %v2415
        %v3472 = vunpack.c.h.b16 %v2415
        %v3473 = vunpack.c.l.b16 %v2416
        %v3474 = vunpack.c.h.b16 %v2416
        %v3475 = vunpack.c.l.b16 %v2417
        %v3476 = vunpack.c.h.b16 %v2417
        %v3477 = vunpack.c.l.b16 %v2418
        %v3478 = vunpack.c.h.b16 %v2418
        %v3479 = vunpack.c.l.b16 %v2419
        %v3480 = vunpack.c.h.b16 %v2419
        %v3481 = vunpack.c.l.b16 %v2420
        %v3482 = vunpack.c.h.b16 %v2420
        %v3483 = vunpack.c.l.b16 %v2421
        %v3484 = vunpack.c.h.b16 %v2421
        %v3485 = vunpack.c.l.b16 %v2422
        %v3486 = vunpack.c.h.b16 %v2422
        %v3487 = vunpack.c.l.b16 %v2423
        %v3488 = vunpack.c.h.b16 %v2423
        %v3489 = vunpack.c.l.b16 %v2424
        %v3490 = vunpack.c.h.b16 %v2424
        %v3491 = vunpack.c.l.b16 %v2425
        %v3492 = vunpack.c.h.b16 %v2425
        %v3493 = vunpack.c.l.b16 %v2426
        %v3494 = vunpack.c.h.b16 %v2426
        %v3495 = vunpack.c.l.b16 %v2427
        %v3496 = vunpack.c.h.b16 %v2427
        %v3497 = vunpack.c.l.b16 %v2428
        %v3498 = vunpack.c.h.b16 %v2428
        %v3499 = vunpack.c.l.b16 %v2429
        %v3500 = vunpack.c.h.b16 %v2429
        %v3501 = vunpack.c.l.b16 %v2430
        %v3502 = vunpack.c.h.b16 %v2430
        %v3503 = vunpack.c.l.b16 %v2431
        %v3504 = vunpack.c.h.b16 %v2431
        %v3505 = vunpack.c.l.b16 %v2432
        %v3506 = vunpack.c.h.b16 %v2432
        %v3507 = vunpack.c.l.b16 %v2433
        %v3508 = vunpack.c.h.b16 %v2433
        %v3509 = vunpack.c.l.b16 %v2434
        %v3510 = vunpack.c.h.b16 %v2434
        %v3511 = vunpack.c.l.b16 %v2435
        %v3512 = vunpack.c.h.b16 %v2435
        %v3513 = vunpack.c.l.b16 %v2436
        %v3514 = vunpack.c.h.b16 %v2436
        %v3515 = vunpack.c.l.b16 %v2437
        %v3516 = vunpack.c.h.b16 %v2437
        %v3517 = vunpack.c.l.b16 %v2438
        %v3518 = vunpack.c.h.b16 %v2438
        %v3519 = vunpack.c.l.b16 %v2439
        %v3520 = vunpack.c.h.b16 %v2439
        %v3521 = vunpack.c.l.b16 %v2440
        %v3522 = vunpack.c.h.b16 %v2440
        %v3523 = vunpack.c.l.b16 %v2441
        %v3524 = vunpack.c.h.b16 %v2441
        %v3525 = vunpack.c.l.b16 %v2442
        %v3526 = vunpack.c.h.b16 %v2442
        %v3527 = vunpack.c.l.b16 %v2443
        %v3528 = vunpack.c.h.b16 %v2443
        %v3529 = vunpack.c.l.b16 %v2444
        %v3530 = vunpack.c.h.b16 %v2444
        %v3531 = vunpack.c.l.b16 %v2445
        %v3532 = vunpack.c.h.b16 %v2445
        %v3533 = vunpack.c.l.b16 %v2446
        %v3534 = vunpack.c.h.b16 %v2446
        %v3535 = vunpack.c.l.b16 %v2447
        %v3536 = vunpack.c.h.b16 %v2447
        %v3537 = vunpack.c.l.b16 %v2448
        %v3538 = vunpack.c.h.b16 %v2448
        %v3539 = vunpack.c.l.b16 %v2449
        %v3540 = vunpack.c.h.b16 %v2449
        %v3541 = vunpack.c.l.b16 %v2450
        %v3542 = vunpack.c.h.b16 %v2450
        %v3543 = vunpack.c.l.b16 %v2451
        %v3544 = vunpack.c.h.b16 %v2451
        %v3545 = vunpack.c.l.b16 %v2452
        %v3546 = vunpack.c.h.b16 %v2452
        %v3547 = vunpack.c.l.b16 %v2453
        %v3548 = vunpack.c.h.b16 %v2453
        %v3549 = vunpack.c.l.b16 %v2454
        %v3550 = vunpack.c.h.b16 %v2454
        %v3551 = vunpack.c.l.b16 %v2455
        %v3552 = vunpack.c.h.b16 %v2455
        %v3553 = vunpack.c.l.b16 %v2456
        %v3554 = vunpack.c.h.b16 %v2456
        %v3555 = vunpack.c.l.b16 %v2457
        %v3556 = vunpack.c.h.b16 %v2457
        %v3557 = vunpack.c.l.b16 %v2458
        %v3558 = vunpack.c.h.b16 %v2458
        %v3559 = vunpack.c.l.b16 %v2459
        %v3560 = vunpack.c.h.b16 %v2459
        %v3561 = vunpack.c.l.b16 %v2460
        %v3562 = vunpack.c.h.b16 %v2460
        %v3563 = vunpack.c.l.b16 %v2461
        %v3564 = vunpack.c.h.b16 %v2461
        %v3565 = vunpack.c.l.b16 %v2462
        %v3566 = vunpack.c.h.b16 %v2462
        %v3567 = vunpack.c.l.b16 %v2463
        %v3568 = vunpack.c.h.b16 %v2463
        %v3569 = vunpack.c.l.b16 %v2464
        %v3570 = vunpack.c.h.b16 %v2464
        %v3571 = vunpack.c.l.b16 %v2465
        %v3572 = vunpack.c.h.b16 %v2465
        %v3573 = vunpack.c.l.b16 %v2466
        %v3574 = vunpack.c.h.b16 %v2466
        %v3575 = vunpack.c.l.b16 %v2467
        %v3576 = vunpack.c.h.b16 %v2467
        %v3577 = vunpack.c.l.b16 %v2468
        %v3578 = vunpack.c.h.b16 %v2468
        %v3579 = vunpack.c.l.b16 %v2469
        %v3580 = vunpack.c.h.b16 %v2469
        %v3581 = vunpack.c.l.b16 %v2470
        %v3582 = vunpack.c.h.b16 %v2470
        %v3583 = vunpack.c.l.b16 %v2471
        %v3584 = vunpack.c.h.b16 %v2471
        %v3585 = vunpack.c.l.b16 %v2472
        %v3586 = vunpack.c.h.b16 %v2472
        %v3587 = vunpack.c.l.b16 %v2473
        %v3588 = vunpack.c.h.b16 %v2473
        %v3589 = vunpack.c.l.b16 %v2474
        %v3590 = vunpack.c.h.b16 %v2474
        %v3591 = vunpack.c.l.b16 %v2475
        %v3592 = vunpack.c.h.b16 %v2475
        %v3593 = vunpack.c.l.b16 %v2476
        %v3594 = vunpack.c.h.b16 %v2476
        %v3595 = vunpack.c.l.b16 %v2477
        %v3596 = vunpack.c.h.b16 %v2477
        %v3597 = vunpack.c.l.b16 %v2478
        %v3598 = vunpack.c.h.b16 %v2478
        %v3599 = vunpack.c.l.b16 %v2479
        %v3600 = vunpack.c.h.b16 %v2479
        %v3601 = vunpack.c.l.b16 %v2480
        %v3602 = vunpack.c.h.b16 %v2480
        %v3603 = vunpack.c.l.b16 %v2481
        %v3604 = vunpack.c.h.b16 %v2481
        %v3605 = vunpack.c.l.b16 %v2482
        %v3606 = vunpack.c.h.b16 %v2482
        %v3607 = vunpack.c.l.b16 %v2483
        %v3608 = vunpack.c.h.b16 %v2483
        %v3609 = vunpack.c.l.b16 %v2484
        %v3610 = vunpack.c.h.b16 %v2484
        %v3611 = vunpack.c.l.b16 %v2485
        %v3612 = vunpack.c.h.b16 %v2485
        %v3613 = vunpack.c.l.b16 %v2486
        %v3614 = vunpack.c.h.b16 %v2486
        %v3615 = vunpack.c.l.b16 %v2487
        %v3616 = vunpack.c.h.b16 %v2487
        %v3617 = vunpack.c.l.b16 %v2488
        %v3618 = vunpack.c.h.b16 %v2488
        %v3619 = vunpack.c.l.b16 %v2489
        %v3620 = vunpack.c.h.b16 %v2489
        %v3621 = vunpack.c.l.b16 %v2490
        %v3622 = vunpack.c.h.b16 %v2490
        %v3623 = vunpack.c.l.b16 %v2491
        %v3624 = vunpack.c.h.b16 %v2491
        %v3625 = vunpack.c.l.b16 %v2492
        %v3626 = vunpack.c.h.b16 %v2492
        %v3627 = vunpack.c.l.b16 %v2493
        %v3628 = vunpack.c.h.b16 %v2493
        %v3629 = vunpack.c.l.b16 %v2494
        %v3630 = vunpack.c.h.b16 %v2494
        %v3631 = vunpack.c.l.b16 %v2495
        %v3632 = vunpack.c.h.b16 %v2495
        %v3633 = vunpack.c.l.b16 %v2496
        %v3634 = vunpack.c.h.b16 %v2496
        %v3635 = vunpack.c.l.b16 %v2497
        %v3636 = vunpack.c.h.b16 %v2497
        %v3637 = vunpack.c.l.b16 %v2498
        %v3638 = vunpack.c.h.b16 %v2498
        %v3639 = vunpack.c.l.b16 %v2499
        %v3640 = vunpack.c.h.b16 %v2499
        %v3641 = vunpack.c.l.b16 %v2500
        %v3642 = vunpack.c.h.b16 %v2500
        %v3643 = vunpack.c.l.b16 %v2501
        %v3644 = vunpack.c.h.b16 %v2501
        %v3645 = vunpack.c.l.b16 %v2502
        %v3646 = vunpack.c.h.b16 %v2502
        %v3647 = vunpack.c.l.b16 %v2503
        %v3648 = vunpack.c.h.b16 %v2503
        %v3649 = vunpack.c.l.b16 %v2504
        %v3650 = vunpack.c.h.b16 %v2504
        %v3651 = vunpack.c.l.b16 %v2505
        %v3652 = vunpack.c.h.b16 %v2505
        %v3653 = vunpack.c.l.b16 %v2506
        %v3654 = vunpack.c.h.b16 %v2506
        %v3655 = vunpack.c.l.b16 %v2507
        %v3656 = vunpack.c.h.b16 %v2507
        %v3657 = vunpack.c.l.b16 %v2508
        %v3658 = vunpack.c.h.b16 %v2508
        %v3659 = vunpack.c.l.b16 %v2509
        %v3660 = vunpack.c.h.b16 %v2509
        %v3661 = vunpack.c.l.b16 %v2510
        %v3662 = vunpack.c.h.b16 %v2510
        %v3663 = vpack.c.b16 %v2899, %v2895
        %v3664 = vpack.c.b16 %v2900, %v2896
        %v3665 = vpack.c.b16 %v2901, %v2897
        %v3666 = vpack.c.b16 %v2902, %v2898
        %v3667 = vpack.c.b16 %v2907, %v2903
        %v3668 = vpack.c.b16 %v2908, %v2904
        %v3669 = vpack.c.b16 %v2909, %v2905
        %v3670 = vpack.c.b16 %v2910, %v2906
        %v3671 = vpack.c.b16 %v2915, %v2911
        %v3672 = vpack.c.b16 %v2916, %v2912
        %v3673 = vpack.c.b16 %v2917, %v2913
        %v3674 = vpack.c.b16 %v2918, %v2914
        %v3675 = vpack.c.b16 %v2923, %v2919
        %v3676 = vpack.c.b16 %v2924, %v2920
        %v3677 = vpack.c.b16 %v2925, %v2921
        %v3678 = vpack.c.b16 %v2926, %v2922
        %v3679 = vpack.c.b16 %v2931, %v2927
        %v3680 = vpack.c.b16 %v2932, %v2928
        %v3681 = vpack.c.b16 %v2933, %v2929
        %v3682 = vpack.c.b16 %v2934, %v2930
        %v3683 = vpack.c.b16 %v2939, %v2935
        %v3684 = vpack.c.b16 %v2940, %v2936
        %v3685 = vpack.c.b16 %v2941, %v2937
        %v3686 = vpack.c.b16 %v2942, %v2938
        %v3687 = vpack.c.b16 %v2947, %v2943
        %v3688 = vpack.c.b16 %v2948, %v2944
        %v3689 = vpack.c.b16 %v2949, %v2945
        %v3690 = vpack.c.b16 %v2950, %v2946
        %v3691 = vpack.c.b16 %v2955, %v2951
        %v3692 = vpack.c.b16 %v2956, %v2952
        %v3693 = vpack.c.b16 %v2957, %v2953
        %v3694 = vpack.c.b16 %v2958, %v2954
        %v3695 = vpack.c.b16 %v2963, %v2959
        %v3696 = vpack.c.b16 %v2964, %v2960
        %v3697 = vpack.c.b16 %v2965, %v2961
        %v3698 = vpack.c.b16 %v2966, %v2962
        %v3699 = vpack.c.b16 %v2971, %v2967
        %v3700 = vpack.c.b16 %v2972, %v2968
        %v3701 = vpack.c.b16 %v2973, %v2969
        %v3702 = vpack.c.b16 %v2974, %v2970
        %v3703 = vpack.c.b16 %v2979, %v2975
        %v3704 = vpack.c.b16 %v2980, %v2976
        %v3705 = vpack.c.b16 %v2981, %v2977
        %v3706 = vpack.c.b16 %v2982, %v2978
        %v3707 = vpack.c.b16 %v2987, %v2983
        %v3708 = vpack.c.b16 %v2988, %v2984
        %v3709 = vpack.c.b16 %v2989, %v2985
        %v3710 = vpack.c.b16 %v2990, %v2986
        %v3711 = vpack.c.b16 %v2995, %v2991
        %v3712 = vpack.c.b16 %v2996, %v2992
        %v3713 = vpack.c.b16 %v2997, %v2993
        %v3714 = vpack.c.b16 %v2998, %v2994
        %v3715 = vpack.c.b16 %v3003, %v2999
        %v3716 = vpack.c.b16 %v3004, %v3000
        %v3717 = vpack.c.b16 %v3005, %v3001
        %v3718 = vpack.c.b16 %v3006, %v3002
        %v3719 = vpack.c.b16 %v3011, %v3007
        %v3720 = vpack.c.b16 %v3012, %v3008
        %v3721 = vpack.c.b16 %v3013, %v3009
        %v3722 = vpack.c.b16 %v3014, %v3010
        %v3723 = vpack.c.b16 %v3019, %v3015
        %v3724 = vpack.c.b16 %v3020, %v3016
        %v3725 = vpack.c.b16 %v3021, %v3017
        %v3726 = vpack.c.b16 %v3022, %v3018
        %v3727 = vpack.c.b16 %v3027, %v3023
        %v3728 = vpack.c.b16 %v3028, %v3024
        %v3729 = vpack.c.b16 %v3029, %v3025
        %v3730 = vpack.c.b16 %v3030, %v3026
        %v3731 = vpack.c.b16 %v3035, %v3031
        %v3732 = vpack.c.b16 %v3036, %v3032
        %v3733 = vpack.c.b16 %v3037, %v3033
        %v3734 = vpack.c.b16 %v3038, %v3034
        %v3735 = vpack.c.b16 %v3043, %v3039
        %v3736 = vpack.c.b16 %v3044, %v3040
        %v3737 = vpack.c.b16 %v3045, %v3041
        %v3738 = vpack.c.b16 %v3046, %v3042
        %v3739 = vpack.c.b16 %v3051, %v3047
        %v3740 = vpack.c.b16 %v3052, %v3048
        %v3741 = vpack.c.b16 %v3053, %v3049
        %v3742 = vpack.c.b16 %v3054, %v3050
        %v3743 = vpack.c.b16 %v3059, %v3055
        %v3744 = vpack.c.b16 %v3060, %v3056
        %v3745 = vpack.c.b16 %v3061, %v3057
        %v3746 = vpack.c.b16 %v3062, %v3058
        %v3747 = vpack.c.b16 %v3067, %v3063
        %v3748 = vpack.c.b16 %v3068, %v3064
        %v3749 = vpack.c.b16 %v3069, %v3065
        %v3750 = vpack.c.b16 %v3070, %v3066
        %v3751 = vpack.c.b16 %v3075, %v3071
        %v3752 = vpack.c.b16 %v3076, %v3072
        %v3753 = vpack.c.b16 %v3077, %v3073
        %v3754 = vpack.c.b16 %v3078, %v3074
        %v3755 = vpack.c.b16 %v3083, %v3079
        %v3756 = vpack.c.b16 %v3084, %v3080
        %v3757 = vpack.c.b16 %v3085, %v3081
        %v3758 = vpack.c.b16 %v3086, %v3082
        %v3759 = vpack.c.b16 %v3091, %v3087
        %v3760 = vpack.c.b16 %v3092, %v3088
        %v3761 = vpack.c.b16 %v3093, %v3089
        %v3762 = vpack.c.b16 %v3094, %v3090
        %v3763 = vpack.c.b16 %v3099, %v3095
        %v3764 = vpack.c.b16 %v3100, %v3096
        %v3765 = vpack.c.b16 %v3101, %v3097
        %v3766 = vpack.c.b16 %v3102, %v3098
        %v3767 = vpack.c.b16 %v3107, %v3103
        %v3768 = vpack.c.b16 %v3108, %v3104
        %v3769 = vpack.c.b16 %v3109, %v3105
        %v3770 = vpack.c.b16 %v3110, %v3106
        %v3771 = vpack.c.b16 %v3115, %v3111
        %v3772 = vpack.c.b16 %v3116, %v3112
        %v3773 = vpack.c.b16 %v3117, %v3113
        %v3774 = vpack.c.b16 %v3118, %v3114
        %v3775 = vpack.c.b16 %v3123, %v3119
        %v3776 = vpack.c.b16 %v3124, %v3120
        %v3777 = vpack.c.b16 %v3125, %v3121
        %v3778 = vpack.c.b16 %v3126, %v3122
        %v3779 = vpack.c.b16 %v3131, %v3127
        %v3780 = vpack.c.b16 %v3132, %v3128
        %v3781 = vpack.c.b16 %v3133, %v3129
        %v3782 = vpack.c.b16 %v3134, %v3130
        %v3783 = vpack.c.b16 %v3139, %v3135
        %v3784 = vpack.c.b16 %v3140, %v3136
        %v3785 = vpack.c.b16 %v3141, %v3137
        %v3786 = vpack.c.b16 %v3142, %v3138
        %v3787 = vpack.c.b16 %v3147, %v3143
        %v3788 = vpack.c.b16 %v3148, %v3144
        %v3789 = vpack.c.b16 %v3149, %v3145
        %v3790 = vpack.c.b16 %v3150, %v3146
        %v3791 = vpack.c.b16 %v3155, %v3151
        %v3792 = vpack.c.b16 %v3156, %v3152
        %v3793 = vpack.c.b16 %v3157, %v3153
        %v3794 = vpack.c.b16 %v3158, %v3154
        %v3795 = vpack.c.b16 %v3163, %v3159
        %v3796 = vpack.c.b16 %v3164, %v3160
        %v3797 = vpack.c.b16 %v3165, %v3161
        %v3798 = vpack.c.b16 %v3166, %v3162
        %v3799 = vpack.c.b16 %v3171, %v3167
        %v3800 = vpack.c.b16 %v3172, %v3168
        %v3801 = vpack.c.b16 %v3173, %v3169
        %v3802 = vpack.c.b16 %v3174, %v3170
        %v3803 = vpack.c.b16 %v3179, %v3175
        %v3804 = vpack.c.b16 %v3180, %v3176
        %v3805 = vpack.c.b16 %v3181, %v3177
        %v3806 = vpack.c.b16 %v3182, %v3178
        %v3807 = vpack.c.b16 %v3187, %v3183
        %v3808 = vpack.c.b16 %v3188, %v3184
        %v3809 = vpack.c.b16 %v3189, %v3185
        %v3810 = vpack.c.b16 %v3190, %v3186
        %v3811 = vpack.c.b16 %v3195, %v3191
        %v3812 = vpack.c.b16 %v3196, %v3192
        %v3813 = vpack.c.b16 %v3197, %v3193
        %v3814 = vpack.c.b16 %v3198, %v3194
        %v3815 = vpack.c.b16 %v3203, %v3199
        %v3816 = vpack.c.b16 %v3204, %v3200
        %v3817 = vpack.c.b16 %v3205, %v3201
        %v3818 = vpack.c.b16 %v3206, %v3202
        %v3819 = vpack.c.b16 %v3211, %v3207
        %v3820 = vpack.c.b16 %v3212, %v3208
        %v3821 = vpack.c.b16 %v3213, %v3209
        %v3822 = vpack.c.b16 %v3214, %v3210
        %v3823 = vpack.c.b16 %v3219, %v3215
        %v3824 = vpack.c.b16 %v3220, %v3216
        %v3825 = vpack.c.b16 %v3221, %v3217
        %v3826 = vpack.c.b16 %v3222, %v3218
        %v3827 = vpack.c.b16 %v3227, %v3223
        %v3828 = vpack.c.b16 %v3228, %v3224
        %v3829 = vpack.c.b16 %v3229, %v3225
        %v3830 = vpack.c.b16 %v3230, %v3226
        %v3831 = vpack.c.b16 %v3235, %v3231
        %v3832 = vpack.c.b16 %v3236, %v3232
        %v3833 = vpack.c.b16 %v3237, %v3233
        %v3834 = vpack.c.b16 %v3238, %v3234
        %v3835 = vpack.c.b16 %v3243, %v3239
        %v3836 = vpack.c.b16 %v3244, %v3240
        %v3837 = vpack.c.b16 %v3245, %v3241
        %v3838 = vpack.c.b16 %v3246, %v3242
        %v3839 = vpack.c.b16 %v3251, %v3247
        %v3840 = vpack.c.b16 %v3252, %v3248
        %v3841 = vpack.c.b16 %v3253, %v3249
        %v3842 = vpack.c.b16 %v3254, %v3250
        %v3843 = vpack.c.b16 %v3259, %v3255
        %v3844 = vpack.c.b16 %v3260, %v3256
        %v3845 = vpack.c.b16 %v3261, %v3257
        %v3846 = vpack.c.b16 %v3262, %v3258
        %v3847 = vpack.c.b16 %v3267, %v3263
        %v3848 = vpack.c.b16 %v3268, %v3264
        %v3849 = vpack.c.b16 %v3269, %v3265
        %v3850 = vpack.c.b16 %v3270, %v3266
        %v3851 = vpack.c.b16 %v3275, %v3271
        %v3852 = vpack.c.b16 %v3276, %v3272
        %v3853 = vpack.c.b16 %v3277, %v3273
        %v3854 = vpack.c.b16 %v3278, %v3274
        %v3855 = vpack.c.b16 %v3283, %v3279
        %v3856 = vpack.c.b16 %v3284, %v3280
        %v3857 = vpack.c.b16 %v3285, %v3281
        %v3858 = vpack.c.b16 %v3286, %v3282
        %v3859 = vpack.c.b16 %v3291, %v3287
        %v3860 = vpack.c.b16 %v3292, %v3288
        %v3861 = vpack.c.b16 %v3293, %v3289
        %v3862 = vpack.c.b16 %v3294, %v3290
        %v3863 = vpack.c.b16 %v3299, %v3295
        %v3864 = vpack.c.b16 %v3300, %v3296
        %v3865 = vpack.c.b16 %v3301, %v3297
        %v3866 = vpack.c.b16 %v3302, %v3298
        %v3867 = vpack.c.b16 %v3307, %v3303
        %v3868 = vpack.c.b16 %v3308, %v3304
        %v3869 = vpack.c.b16 %v3309, %v3305
        %v3870 = vpack.c.b16 %v3310, %v3306
        %v3871 = vpack.c.b16 %v3315, %v3311
        %v3872 = vpack.c.b16 %v3316, %v3312
        %v3873 = vpack.c.b16 %v3317, %v3313
        %v3874 = vpack.c.b16 %v3318, %v3314
        %v3875 = vpack.c.b16 %v3323, %v3319
        %v3876 = vpack.c.b16 %v3324, %v3320
        %v3877 = vpack.c.b16 %v3325, %v3321
        %v3878 = vpack.c.b16 %v3326, %v3322
        %v3879 = vpack.c.b16 %v3331, %v3327
        %v3880 = vpack.c.b16 %v3332, %v3328
        %v3881 = vpack.c.b16 %v3333, %v3329
        %v3882 = vpack.c.b16 %v3334, %v3330
        %v3883 = vpack.c.b16 %v3339, %v3335
        %v3884 = vpack.c.b16 %v3340, %v3336
        %v3885 = vpack.c.b16 %v3341, %v3337
        %v3886 = vpack.c.b16 %v3342, %v3338
        %v3887 = vpack.c.b16 %v3347, %v3343
        %v3888 = vpack.c.b16 %v3348, %v3344
        %v3889 = vpack.c.b16 %v3349, %v3345
        %v3890 = vpack.c.b16 %v3350, %v3346
        %v3891 = vpack.c.b16 %v3355, %v3351
        %v3892 = vpack.c.b16 %v3356, %v3352
        %v3893 = vpack.c.b16 %v3357, %v3353
        %v3894 = vpack.c.b16 %v3358, %v3354
        %v3895 = vpack.c.b16 %v3363, %v3359
        %v3896 = vpack.c.b16 %v3364, %v3360
        %v3897 = vpack.c.b16 %v3365, %v3361
        %v3898 = vpack.c.b16 %v3366, %v3362
        %v3899 = vpack.c.b16 %v3371, %v3367
        %v3900 = vpack.c.b16 %v3372, %v3368
        %v3901 = vpack.c.b16 %v3373, %v3369
        %v3902 = vpack.c.b16 %v3374, %v3370
        %v3903 = vpack.c.b16 %v3379, %v3375
        %v3904 = vpack.c.b16 %v3380, %v3376
        %v3905 = vpack.c.b16 %v3381, %v3377
        %v3906 = vpack.c.b16 %v3382, %v3378
        %v3907 = vpack.c.b16 %v3387, %v3383
        %v3908 = vpack.c.b16 %v3388, %v3384
        %v3909 = vpack.c.b16 %v3389, %v3385
        %v3910 = vpack.c.b16 %v3390, %v3386
        %v3911 = vpack.c.b16 %v3395, %v3391
        %v3912 = vpack.c.b16 %v3396, %v3392
        %v3913 = vpack.c.b16 %v3397, %v3393
        %v3914 = vpack.c.b16 %v3398, %v3394
        %v3915 = vpack.c.b16 %v3403, %v3399
        %v3916 = vpack.c.b16 %v3404, %v3400
        %v3917 = vpack.c.b16 %v3405, %v3401
        %v3918 = vpack.c.b16 %v3406, %v3402
        %v3919 = vpack.c.b16 %v3411, %v3407
        %v3920 = vpack.c.b16 %v3412, %v3408
        %v3921 = vpack.c.b16 %v3413, %v3409
        %v3922 = vpack.c.b16 %v3414, %v3410
        %v3923 = vpack.c.b16 %v3419, %v3415
        %v3924 = vpack.c.b16 %v3420, %v3416
        %v3925 = vpack.c.b16 %v3421, %v3417
        %v3926 = vpack.c.b16 %v3422, %v3418
        %v3927 = vpack.c.b16 %v3427, %v3423
        %v3928 = vpack.c.b16 %v3428, %v3424
        %v3929 = vpack.c.b16 %v3429, %v3425
        %v3930 = vpack.c.b16 %v3430, %v3426
        %v3931 = vpack.c.b16 %v3435, %v3431
        %v3932 = vpack.c.b16 %v3436, %v3432
        %v3933 = vpack.c.b16 %v3437, %v3433
        %v3934 = vpack.c.b16 %v3438, %v3434
        %v3935 = vpack.c.b16 %v3443, %v3439
        %v3936 = vpack.c.b16 %v3444, %v3440
        %v3937 = vpack.c.b16 %v3445, %v3441
        %v3938 = vpack.c.b16 %v3446, %v3442
        %v3939 = vpack.c.b16 %v3451, %v3447
        %v3940 = vpack.c.b16 %v3452, %v3448
        %v3941 = vpack.c.b16 %v3453, %v3449
        %v3942 = vpack.c.b16 %v3454, %v3450
        %v3943 = vpack.c.b16 %v3459, %v3455
        %v3944 = vpack.c.b16 %v3460, %v3456
        %v3945 = vpack.c.b16 %v3461, %v3457
        %v3946 = vpack.c.b16 %v3462, %v3458
        %v3947 = vpack.c.b16 %v3467, %v3463
        %v3948 = vpack.c.b16 %v3468, %v3464
        %v3949 = vpack.c.b16 %v3469, %v3465
        %v3950 = vpack.c.b16 %v3470, %v3466
        %v3951 = vpack.c.b16 %v3475, %v3471
        %v3952 = vpack.c.b16 %v3476, %v3472
        %v3953 = vpack.c.b16 %v3477, %v3473
        %v3954 = vpack.c.b16 %v3478, %v3474
        %v3955 = vpack.c.b16 %v3483, %v3479
        %v3956 = vpack.c.b16 %v3484, %v3480
        %v3957 = vpack.c.b16 %v3485, %v3481
        %v3958 = vpack.c.b16 %v3486, %v3482
        %v3959 = vpack.c.b16 %v3491, %v3487
        %v3960 = vpack.c.b16 %v3492, %v3488
        %v3961 = vpack.c.b16 %v3493, %v3489
        %v3962 = vpack.c.b16 %v3494, %v3490
        %v3963 = vpack.c.b16 %v3499, %v3495
        %v3964 = vpack.c.b16 %v3500, %v3496
        %v3965 = vpack.c.b16 %v3501, %v3497
        %v3966 = vpack.c.b16 %v3502, %v3498
        %v3967 = vpack.c.b16 %v3507, %v3503
        %v3968 = vpack.c.b16 %v3508, %v3504
        %v3969 = vpack.c.b16 %v3509, %v3505
        %v3970 = vpack.c.b16 %v3510, %v3506
        %v3971 = vpack.c.b16 %v3515, %v3511
        %v3972 = vpack.c.b16 %v3516, %v3512
        %v3973 = vpack.c.b16 %v3517, %v3513
        %v3974 = vpack.c.b16 %v3518, %v3514
        %v3975 = vpack.c.b16 %v3523, %v3519
        %v3976 = vpack.c.b16 %v3524, %v3520
        %v3977 = vpack.c.b16 %v3525, %v3521
        %v3978 = vpack.c.b16 %v3526, %v3522
        %v3979 = vpack.c.b16 %v3531, %v3527
        %v3980 = vpack.c.b16 %v3532, %v3528
        %v3981 = vpack.c.b16 %v3533, %v3529
        %v3982 = vpack.c.b16 %v3534, %v3530
        %v3983 = vpack.c.b16 %v3539, %v3535
        %v3984 = vpack.c.b16 %v3540, %v3536
        %v3985 = vpack.c.b16 %v3541, %v3537
        %v3986 = vpack.c.b16 %v3542, %v3538
        %v3987 = vpack.c.b16 %v3547, %v3543
        %v3988 = vpack.c.b16 %v3548, %v3544
        %v3989 = vpack.c.b16 %v3549, %v3545
        %v3990 = vpack.c.b16 %v3550, %v3546
        %v3991 = vpack.c.b16 %v3555, %v3551
        %v3992 = vpack.c.b16 %v3556, %v3552
        %v3993 = vpack.c.b16 %v3557, %v3553
        %v3994 = vpack.c.b16 %v3558, %v3554
        %v3995 = vpack.c.b16 %v3563, %v3559
        %v3996 = vpack.c.b16 %v3564, %v3560
        %v3997 = vpack.c.b16 %v3565, %v3561
        %v3998 = vpack.c.b16 %v3566, %v3562
        %v3999 = vpack.c.b16 %v3571, %v3567
        %v4000 = vpack.c.b16 %v3572, %v3568
        %v4001 = vpack.c.b16 %v3573, %v3569
        %v4002 = vpack.c.b16 %v3574, %v3570
        %v4003 = vpack.c.b16 %v3579, %v3575
        %v4004 = vpack.c.b16 %v3580, %v3576
        %v4005 = vpack.c.b16 %v3581, %v3577
        %v4006 = vpack.c.b16 %v3582, %v3578
        %v4007 = vpack.c.b16 %v3587, %v3583
        %v4008 = vpack.c.b16 %v3588, %v3584
        %v4009 = vpack.c.b16 %v3589, %v3585
        %v4010 = vpack.c.b16 %v3590, %v3586
        %v4011 = vpack.c.b16 %v3595, %v3591
        %v4012 = vpack.c.b16 %v3596, %v3592
        %v4013 = vpack.c.b16 %v3597, %v3593
        %v4014 = vpack.c.b16 %v3598, %v3594
        %v4015 = vpack.c.b16 %v3603, %v3599
        %v4016 = vpack.c.b16 %v3604, %v3600
        %v4017 = vpack.c.b16 %v3605, %v3601
        %v4018 = vpack.c.b16 %v3606, %v3602
        %v4019 = vpack.c.b16 %v3611, %v3607
        %v4020 = vpack.c.b16 %v3612, %v3608
        %v4021 = vpack.c.b16 %v3613, %v3609
        %v4022 = vpack.c.b16 %v3614, %v3610
        %v4023 = vpack.c.b16 %v3619, %v3615
        %v4024 = vpack.c.b16 %v3620, %v3616
        %v4025 = vpack.c.b16 %v3621, %v3617
        %v4026 = vpack.c.b16 %v3622, %v3618
        %v4027 = vpack.c.b16 %v3627, %v3623
        %v4028 = vpack.c.b16 %v3628, %v3624
        %v4029 = vpack.c.b16 %v3629, %v3625
        %v4030 = vpack.c.b16 %v3630, %v3626
        %v4031 = vpack.c.b16 %v3635, %v3631
        %v4032 = vpack.c.b16 %v3636, %v3632
        %v4033 = vpack.c.b16 %v3637, %v3633
        %v4034 = vpack.c.b16 %v3638, %v3634
        %v4035 = vpack.c.b16 %v3643, %v3639
        %v4036 = vpack.c.b16 %v3644, %v3640
        %v4037 = vpack.c.b16 %v3645, %v3641
        %v4038 = vpack.c.b16 %v3646, %v3642
        %v4039 = vpack.c.b16 %v3651, %v3647
        %v4040 = vpack.c.b16 %v3652, %v3648
        %v4041 = vpack.c.b16 %v3653, %v3649
        %v4042 = vpack.c.b16 %v3654, %v3650
        %v4043 = vpack.c.b16 %v3659, %v3655
        %v4044 = vpack.c.b16 %v3660, %v3656
        %v4045 = vpack.c.b16 %v3661, %v3657
        %v4046 = vpack.c.b16 %v3662, %v3658
        %4431 = vmatprep.subr.bf16.mxu0 %v3664
        %4432 = vmatpush1.bf16.msra.mxu0 %v3663
        %4433 = vmatprep.subr.bf16.mxu0 %v3668
        %4434 = vmatpush1.bf16.msra.mxu0 %v3667
        %4435 = vmatprep.subr.bf16.mxu0 %v3672
        %4436 = vmatpush1.bf16.msra.mxu0 %v3671
        %4437 = vmatprep.subr.bf16.mxu0 %v3676
        %4438 = vmatpush1.bf16.msra.mxu0 %v3675
        %4439 = vmatprep.subr.bf16.mxu0 %v3680
        %4440 = vmatpush1.bf16.msra.mxu0 %v3679
        %4441 = vmatprep.subr.bf16.mxu0 %v3684
        %4442 = vmatpush1.bf16.msra.mxu0 %v3683
        %4443 = vmatprep.subr.bf16.mxu0 %v3688
        %4444 = vmatpush1.bf16.msra.mxu0 %v3687
        %4445 = vmatprep.subr.bf16.mxu0 %v3692
        %4446 = vmatpush1.bf16.msra.mxu0 %v3691
        %4447 = vmatprep.subr.bf16.mxu0 %v3696
        %4448 = vmatpush1.bf16.msra.mxu0 %v3695
        %4449 = vmatprep.subr.bf16.mxu0 %v3700
        %4450 = vmatpush1.bf16.msra.mxu0 %v3699
        %4451 = vmatprep.subr.bf16.mxu0 %v3704
        %4452 = vmatpush1.bf16.msra.mxu0 %v3703
        %4453 = vmatprep.subr.bf16.mxu0 %v3708
        %4454 = vmatpush1.bf16.msra.mxu0 %v3707
        %4455 = vmatprep.subr.bf16.mxu0 %v3712
        %4456 = vmatpush1.bf16.msra.mxu0 %v3711
        %4457 = vmatprep.subr.bf16.mxu0 %v3716
        %4458 = vmatpush1.bf16.msra.mxu0 %v3715
        %4459 = vmatprep.subr.bf16.mxu0 %v3720
        %4460 = vmatpush1.bf16.msra.mxu0 %v3719
        %4461 = vmatprep.subr.bf16.mxu0 %v3724
        %4462 = vmatpush1.bf16.msra.mxu0 %v3723
        %4463 = vmatprep.mubr.bf16.mxu0 %v2075
        %4464 = vmatmul.mubr.bf16.gmra.mrb[0].mxu0 %v2074
        %v4465 = vpop.f32.mrb[0].mxu0
        %v4466 = vadd.f32 0.0, %v4465
        %v4467 = vpop.f32.mrb[0].mxu0
        %v4468 = vadd.f32 0.0, %v4467
        %v4469 = vpop.f32.mrb[0].mxu0
        %v4470 = vadd.f32 0.0, %v4469
        %v4471 = vpop.f32.mrb[0].mxu0
        %v4472 = vadd.f32 0.0, %v4471
        %4473 = vmatprep.mubr.bf16.mxu0 %v2077
        %4474 = vmatmul.mubr.bf16.gmra.mrb[0].mxu0 %v2076
        %v4475 = vpop.f32.mrb[0].mxu0
        %v4476 = vadd.f32 0.0, %v4475
        %v4477 = vpop.f32.mrb[0].mxu0
        %v4478 = vadd.f32 0.0, %v4477
        %v4479 = vpop.f32.mrb[0].mxu0
        %v4480 = vadd.f32 0.0, %v4479
        %v4481 = vpop.f32.mrb[0].mxu0
        %v4482 = vadd.f32 0.0, %v4481
        %4483 = vmatprep.mubr.bf16.mxu0 %v2079
        %4484 = vmatmul.mubr.bf16.gmra.mrb[0].mxu0 %v2078
        %v4485 = vpop.f32.mrb[0].mxu0
        %v4486 = vadd.f32 0.0, %v4485
        %v4487 = vpop.f32.mrb[0].mxu0
        %v4488 = vadd.f32 0.0, %v4487
        %v4489 = vpop.f32.mrb[0].mxu0
        %v4490 = vadd.f32 0.0, %v4489
        %v4491 = vpop.f32.mrb[0].mxu0
        %v4492 = vadd.f32 0.0, %v4491
        %4493 = vmatprep.mubr.bf16.mxu0 %v2081
        %4494 = vmatmul.mubr.bf16.gmra.mrb[0].mxu0 %v2080
        %v4495 = vpop.f32.mrb[0].mxu0
        %v4496 = vadd.f32 0.0, %v4495
        %v4497 = vpop.f32.mrb[0].mxu0
        %v4498 = vadd.f32 0.0, %v4497
        %v4499 = vpop.f32.mrb[0].mxu0
        %v4500 = vadd.f32 0.0, %v4499
        %v4501 = vpop.f32.mrb[0].mxu0
        %v4502 = vadd.f32 0.0, %v4501
        %4503 = vdwg.mxu0
        %4504 = vmatprep.subr.bf16.mxu0 %v3728
        %4505 = vmatpush1.bf16.msra.mxu0 %v3727
        %4506 = vmatprep.subr.bf16.mxu0 %v3732
        %4507 = vmatpush1.bf16.msra.mxu0 %v3731
        %4508 = vmatprep.subr.bf16.mxu0 %v3736
        %4509 = vmatpush1.bf16.msra.mxu0 %v3735
        %4510 = vmatprep.subr.bf16.mxu0 %v3740
        %4511 = vmatpush1.bf16.msra.mxu0 %v3739
        %4512 = vmatprep.subr.bf16.mxu0 %v3744
        %4513 = vmatpush1.bf16.msra.mxu0 %v3743
        %4514 = vmatprep.subr.bf16.mxu0 %v3748
        %4515 = vmatpush1.bf16.msra.mxu0 %v3747
        %4516 = vmatprep.subr.bf16.mxu0 %v3752
        %4517 = vmatpush1.bf16.msra.mxu0 %v3751
        %4518 = vmatprep.subr.bf16.mxu0 %v3756
        %4519 = vmatpush1.bf16.msra.mxu0 %v3755
        %4520 = vmatprep.subr.bf16.mxu0 %v3760
        %4521 = vmatpush1.bf16.msra.mxu0 %v3759
        %4522 = vmatprep.subr.bf16.mxu0 %v3764
        %4523 = vmatpush1.bf16.msra.mxu0 %v3763
        %4524 = vmatprep.subr.bf16.mxu0 %v3768
        %4525 = vmatpush1.bf16.msra.mxu0 %v3767
        %4526 = vmatprep.subr.bf16.mxu0 %v3772
        %4527 = vmatpush1.bf16.msra.mxu0 %v3771
        %4528 = vmatprep.subr.bf16.mxu0 %v3776
        %4529 = vmatpush1.bf16.msra.mxu0 %v3775
        %4530 = vmatprep.subr.bf16.mxu0 %v3780
        %4531 = vmatpush1.bf16.msra.mxu0 %v3779
        %4532 = vmatprep.subr.bf16.mxu0 %v3784
        %4533 = vmatpush1.bf16.msra.mxu0 %v3783
        %4534 = vmatprep.subr.bf16.mxu0 %v3788
        %4535 = vmatpush1.bf16.msra.mxu0 %v3787
        %4536 = vmatprep.mubr.bf16.mxu0 %v2084
        %4537 = vmatmul.mubr.bf16.gmra.mrb[0].mxu0 %v2083
        %v4538 = vpop.f32.mrb[0].mxu0
        %v4539 = vadd.f32 %v4466, %v4538
        %v4540 = vpop.f32.mrb[0].mxu0
        %v4541 = vadd.f32 %v4468, %v4540
        %v4542 = vpop.f32.mrb[0].mxu0
        %v4543 = vadd.f32 %v4470, %v4542
        %v4544 = vpop.f32.mrb[0].mxu0
        %v4545 = vadd.f32 %v4472, %v4544
        %4546 = vmatprep.mubr.bf16.mxu0 %v2086
        %4547 = vmatmul.mubr.bf16.gmra.mrb[0].mxu0 %v2085
        %v4548 = vpop.f32.mrb[0].mxu0
        %v4549 = vadd.f32 %v4476, %v4548
        %v4550 = vpop.f32.mrb[0].mxu0
        %v4551 = vadd.f32 %v4478, %v4550
        %v4552 = vpop.f32.mrb[0].mxu0
        %v4553 = vadd.f32 %v4480, %v4552
        %v4554 = vpop.f32.mrb[0].mxu0
        %v4555 = vadd.f32 %v4482, %v4554
        %4556 = vmatprep.mubr.bf16.mxu0 %v2088
        %4557 = vmatmul.mubr.bf16.gmra.mrb[0].mxu0 %v2087
        %v4558 = vpop.f32.mrb[0].mxu0
        %v4559 = vadd.f32 %v4486, %v4558
        %v4560 = vpop.f32.mrb[0].mxu0
        %v4561 = vadd.f32 %v4488, %v4560
        %v4562 = vpop.f32.mrb[0].mxu0
        %v4563 = vadd.f32 %v4490, %v4562
        %v4564 = vpop.f32.mrb[0].mxu0
        %v4565 = vadd.f32 %v4492, %v4564
        %4566 = vmatprep.mubr.bf16.mxu0 %v2090
        %4567 = vmatmul.mubr.bf16.gmra.mrb[0].mxu0 %v2089
        %v4568 = vpop.f32.mrb[0].mxu0
        %v4569 = vadd.f32 %v4496, %v4568
        %v4570 = vpop.f32.mrb[0].mxu0
        %v4571 = vadd.f32 %v4498, %v4570
        %v4572 = vpop.f32.mrb[0].mxu0
        %v4573 = vadd.f32 %v4500, %v4572
        %v4574 = vpop.f32.mrb[0].mxu0
        %v4575 = vadd.f32 %v4502, %v4574
        %4576 = vdwg.mxu0
        %4577 = vmatprep.subr.bf16.mxu0 %v3792
        %4578 = vmatpush1.bf16.msra.mxu0 %v3791
        %4579 = vmatprep.subr.bf16.mxu0 %v3796
        %4580 = vmatpush1.bf16.msra.mxu0 %v3795
        %4581 = vmatprep.subr.bf16.mxu0 %v3800
        %4582 = vmatpush1.bf16.msra.mxu0 %v3799
        %4583 = vmatprep.subr.bf16.mxu0 %v3804
        %4584 = vmatpush1.bf16.msra.mxu0 %v3803
        %4585 = vmatprep.subr.bf16.mxu0 %v3808
        %4586 = vmatpush1.bf16.msra.mxu0 %v3807
        %4587 = vmatprep.subr.bf16.mxu0 %v3812
        %4588 = vmatpush1.bf16.msra.mxu0 %v3811
        %4589 = vmatprep.subr.bf16.mxu0 %v3816
        %4590 = vmatpush1.bf16.msra.mxu0 %v3815
        %4591 = vmatprep.subr.bf16.mxu0 %v3820
        %4592 = vmatpush1.bf16.msra.mxu0 %v3819
        %4593 = vmatprep.subr.bf16.mxu0 %v3824
        %4594 = vmatpush1.bf16.msra.mxu0 %v3823
        %4595 = vmatprep.subr.bf16.mxu0 %v3828
        %4596 = vmatpush1.bf16.msra.mxu0 %v3827
        %4597 = vmatprep.subr.bf16.mxu0 %v3832
        %4598 = vmatpush1.bf16.msra.mxu0 %v3831
        %4599 = vmatprep.subr.bf16.mxu0 %v3836
        %4600 = vmatpush1.bf16.msra.mxu0 %v3835
        %4601 = vmatprep.subr.bf16.mxu0 %v3840
        %4602 = vmatpush1.bf16.msra.mxu0 %v3839
        %4603 = vmatprep.subr.bf16.mxu0 %v3844
        %4604 = vmatpush1.bf16.msra.mxu0 %v3843
        %4605 = vmatprep.subr.bf16.mxu0 %v3848
        %4606 = vmatpush1.bf16.msra.mxu0 %v3847
        %4607 = vmatprep.subr.bf16.mxu0 %v3852
        %4608 = vmatpush1.bf16.msra.mxu0 %v3851
        %4609 = vmatprep.mubr.bf16.mxu0 %v2093
        %4610 = vmatmul.mubr.bf16.gmra.mrb[0].mxu0 %v2092
        %v4611 = vpop.f32.mrb[0].mxu0
        %v4612 = vadd.f32 %v4539, %v4611
        %v4613 = vpop.f32.mrb[0].mxu0
        %v4614 = vadd.f32 %v4541, %v4613
        %v4615 = vpop.f32.mrb[0].mxu0
        %v4616 = vadd.f32 %v4543, %v4615
        %v4617 = vpop.f32.mrb[0].mxu0
        %v4618 = vadd.f32 %v4545, %v4617
        %4619 = vmatprep.mubr.bf16.mxu0 %v2095
        %4620 = vmatmul.mubr.bf16.gmra.mrb[0].mxu0 %v2094
        %v4621 = vpop.f32.mrb[0].mxu0
        %v4622 = vadd.f32 %v4549, %v4621
        %v4623 = vpop.f32.mrb[0].mxu0
        %v4624 = vadd.f32 %v4551, %v4623
        %v4625 = vpop.f32.mrb[0].mxu0
        %v4626 = vadd.f32 %v4553, %v4625
        %v4627 = vpop.f32.mrb[0].mxu0
        %v4628 = vadd.f32 %v4555, %v4627
        %4629 = vmatprep.mubr.bf16.mxu0 %v2097
        %4630 = vmatmul.mubr.bf16.gmra.mrb[0].mxu0 %v2096
        %v4631 = vpop.f32.mrb[0].mxu0
        %v4632 = vadd.f32 %v4559, %v4631
        %v4633 = vpop.f32.mrb[0].mxu0
        %v4634 = vadd.f32 %v4561, %v4633
        %v4635 = vpop.f32.mrb[0].mxu0
        %v4636 = vadd.f32 %v4563, %v4635
        %v4637 = vpop.f32.mrb[0].mxu0
        %v4638 = vadd.f32 %v4565, %v4637
        %4639 = vmatprep.mubr.bf16.mxu0 %v2099
        %4640 = vmatmul.mubr.bf16.gmra.mrb[0].mxu0 %v2098
        %v4641 = vpop.f32.mrb[0].mxu0
        %v4642 = vadd.f32 %v4569, %v4641
        %v4643 = vpop.f32.mrb[0].mxu0
        %v4644 = vadd.f32 %v4571, %v4643
        %v4645 = vpop.f32.mrb[0].mxu0
        %v4646 = vadd.f32 %v4573, %v4645
        %v4647 = vpop.f32.mrb[0].mxu0
        %v4648 = vadd.f32 %v4575, %v4647
        %4649 = vdwg.mxu0
        %4650 = vmatprep.subr.bf16.mxu0 %v3856
        %4651 = vmatpush1.bf16.msra.mxu0 %v3855
        %4652 = vmatprep.subr.bf16.mxu0 %v3860
        %4653 = vmatpush1.bf16.msra.mxu0 %v3859
        %4654 = vmatprep.subr.bf16.mxu0 %v3864
        %4655 = vmatpush1.bf16.msra.mxu0 %v3863
        %4656 = vmatprep.subr.bf16.mxu0 %v3868
        %4657 = vmatpush1.bf16.msra.mxu0 %v3867
        %4658 = vmatprep.subr.bf16.mxu0 %v3872
        %4659 = vmatpush1.bf16.msra.mxu0 %v3871
        %4660 = vmatprep.subr.bf16.mxu0 %v3876
        %4661 = vmatpush1.bf16.msra.mxu0 %v3875
        %4662 = vmatprep.subr.bf16.mxu0 %v3880
        %4663 = vmatpush1.bf16.msra.mxu0 %v3879
        %4664 = vmatprep.subr.bf16.mxu0 %v3884
        %4665 = vmatpush1.bf16.msra.mxu0 %v3883
        %4666 = vmatprep.subr.bf16.mxu0 %v3888
        %4667 = vmatpush1.bf16.msra.mxu0 %v3887
        %4668 = vmatprep.subr.bf16.mxu0 %v3892
        %4669 = vmatpush1.bf16.msra.mxu0 %v3891
        %4670 = vmatprep.subr.bf16.mxu0 %v3896
        %4671 = vmatpush1.bf16.msra.mxu0 %v3895
        %4672 = vmatprep.subr.bf16.mxu0 %v3900
        %4673 = vmatpush1.bf16.msra.mxu0 %v3899
        %4674 = vmatprep.subr.bf16.mxu0 %v3904
        %4675 = vmatpush1.bf16.msra.mxu0 %v3903
        %4676 = vmatprep.subr.bf16.mxu0 %v3908
        %4677 = vmatpush1.bf16.msra.mxu0 %v3907
        %4678 = vmatprep.subr.bf16.mxu0 %v3912
        %4679 = vmatpush1.bf16.msra.mxu0 %v3911
        %4680 = vmatprep.subr.bf16.mxu0 %v3916
        %4681 = vmatpush1.bf16.msra.mxu0 %v3915
        %4682 = vmatprep.mubr.bf16.mxu0 %v2102
        %4683 = vmatmul.mubr.bf16.gmra.mrb[0].mxu0 %v2101
        %v4684 = vpop.f32.mrb[0].mxu0
        %v4685 = vadd.f32 %v4612, %v4684
        %v4686 = vpop.f32.mrb[0].mxu0
        %v4687 = vadd.f32 %v4614, %v4686
        %v4688 = vpop.f32.mrb[0].mxu0
        %v4689 = vadd.f32 %v4616, %v4688
        %v4690 = vpop.f32.mrb[0].mxu0
        %v4691 = vadd.f32 %v4618, %v4690
        %4692 = vmatprep.mubr.bf16.mxu0 %v2104
        %4693 = vmatmul.mubr.bf16.gmra.mrb[0].mxu0 %v2103
        %v4694 = vpop.f32.mrb[0].mxu0
        %v4695 = vadd.f32 %v4622, %v4694
        %v4696 = vpop.f32.mrb[0].mxu0
        %v4697 = vadd.f32 %v4624, %v4696
        %v4698 = vpop.f32.mrb[0].mxu0
        %v4699 = vadd.f32 %v4626, %v4698
        %v4700 = vpop.f32.mrb[0].mxu0
        %v4701 = vadd.f32 %v4628, %v4700
        %4702 = vmatprep.mubr.bf16.mxu0 %v2106
        %4703 = vmatmul.mubr.bf16.gmra.mrb[0].mxu0 %v2105
        %v4704 = vpop.f32.mrb[0].mxu0
        %v4705 = vadd.f32 %v4632, %v4704
        %v4706 = vpop.f32.mrb[0].mxu0
        %v4707 = vadd.f32 %v4634, %v4706
        %v4708 = vpop.f32.mrb[0].mxu0
        %v4709 = vadd.f32 %v4636, %v4708
        %v4710 = vpop.f32.mrb[0].mxu0
        %v4711 = vadd.f32 %v4638, %v4710
        %4712 = vmatprep.mubr.bf16.mxu0 %v2108
        %4713 = vmatmul.mubr.bf16.gmra.mrb[0].mxu0 %v2107
        %v4714 = vpop.f32.mrb[0].mxu0
        %v4715 = vadd.f32 %v4642, %v4714
        %v4716 = vpop.f32.mrb[0].mxu0
        %v4717 = vadd.f32 %v4644, %v4716
        %v4718 = vpop.f32.mrb[0].mxu0
        %v4719 = vadd.f32 %v4646, %v4718
        %v4720 = vpop.f32.mrb[0].mxu0
        %v4721 = vadd.f32 %v4648, %v4720
        %4722 = vdwg.mxu0
        %4723 = vmatprep.subr.bf16.mxu0 %v3920
        %4724 = vmatpush1.bf16.msra.mxu0 %v3919
        %4725 = vmatprep.subr.bf16.mxu0 %v3924
        %4726 = vmatpush1.bf16.msra.mxu0 %v3923
        %4727 = vmatprep.subr.bf16.mxu0 %v3928
        %4728 = vmatpush1.bf16.msra.mxu0 %v3927
        %4729 = vmatprep.subr.bf16.mxu0 %v3932
        %4730 = vmatpush1.bf16.msra.mxu0 %v3931
        %4731 = vmatprep.subr.bf16.mxu0 %v3936
        %4732 = vmatpush1.bf16.msra.mxu0 %v3935
        %4733 = vmatprep.subr.bf16.mxu0 %v3940
        %4734 = vmatpush1.bf16.msra.mxu0 %v3939
        %4735 = vmatprep.subr.bf16.mxu0 %v3944
        %4736 = vmatpush1.bf16.msra.mxu0 %v3943
        %4737 = vmatprep.subr.bf16.mxu0 %v3948
        %4738 = vmatpush1.bf16.msra.mxu0 %v3947
        %4739 = vmatprep.subr.bf16.mxu0 %v3952
        %4740 = vmatpush1.bf16.msra.mxu0 %v3951
        %4741 = vmatprep.subr.bf16.mxu0 %v3956
        %4742 = vmatpush1.bf16.msra.mxu0 %v3955
        %4743 = vmatprep.subr.bf16.mxu0 %v3960
        %4744 = vmatpush1.bf16.msra.mxu0 %v3959
        %4745 = vmatprep.subr.bf16.mxu0 %v3964
        %4746 = vmatpush1.bf16.msra.mxu0 %v3963
        %4747 = vmatprep.subr.bf16.mxu0 %v3968
        %4748 = vmatpush1.bf16.msra.mxu0 %v3967
        %4749 = vmatprep.subr.bf16.mxu0 %v3972
        %4750 = vmatpush1.bf16.msra.mxu0 %v3971
        %4751 = vmatprep.subr.bf16.mxu0 %v3976
        %4752 = vmatpush1.bf16.msra.mxu0 %v3975
        %4753 = vmatprep.subr.bf16.mxu0 %v3980
        %4754 = vmatpush1.bf16.msra.mxu0 %v3979
        %4755 = vmatprep.mubr.bf16.mxu0 %v2111
        %4756 = vmatmul.mubr.bf16.gmra.mrb[0].mxu0 %v2110
        %v4757 = vpop.f32.mrb[0].mxu0
        %v4758 = vadd.f32 %v4685, %v4757
        %v4759 = vpop.f32.mrb[0].mxu0
        %v4760 = vadd.f32 %v4687, %v4759
        %v4761 = vpop.f32.mrb[0].mxu0
        %v4762 = vadd.f32 %v4689, %v4761
        %v4763 = vpop.f32.mrb[0].mxu0
        %v4764 = vadd.f32 %v4691, %v4763
        %4765 = vmatprep.mubr.bf16.mxu0 %v2113
        %4766 = vmatmul.mubr.bf16.gmra.mrb[0].mxu0 %v2112
        %v4767 = vpop.f32.mrb[0].mxu0
        %v4768 = vadd.f32 %v4695, %v4767
        %v4769 = vpop.f32.mrb[0].mxu0
        %v4770 = vadd.f32 %v4697, %v4769
        %v4771 = vpop.f32.mrb[0].mxu0
        %v4772 = vadd.f32 %v4699, %v4771
        %v4773 = vpop.f32.mrb[0].mxu0
        %v4774 = vadd.f32 %v4701, %v4773
        %4775 = vmatprep.mubr.bf16.mxu0 %v2115
        %4776 = vmatmul.mubr.bf16.gmra.mrb[0].mxu0 %v2114
        %v4777 = vpop.f32.mrb[0].mxu0
        %v4778 = vadd.f32 %v4705, %v4777
        %v4779 = vpop.f32.mrb[0].mxu0
        %v4780 = vadd.f32 %v4707, %v4779
        %v4781 = vpop.f32.mrb[0].mxu0
        %v4782 = vadd.f32 %v4709, %v4781
        %v4783 = vpop.f32.mrb[0].mxu0
        %v4784 = vadd.f32 %v4711, %v4783
        %4785 = vmatprep.mubr.bf16.mxu0 %v2117
        %4786 = vmatmul.mubr.bf16.gmra.mrb[0].mxu0 %v2116
        %v4787 = vpop.f32.mrb[0].mxu0
        %v4788 = vadd.f32 %v4715, %v4787
        %v4789 = vpop.f32.mrb[0].mxu0
        %v4790 = vadd.f32 %v4717, %v4789
        %v4791 = vpop.f32.mrb[0].mxu0
        %v4792 = vadd.f32 %v4719, %v4791
        %v4793 = vpop.f32.mrb[0].mxu0
        %v4794 = vadd.f32 %v4721, %v4793
        %4795 = vdwg.mxu0
        %4796 = vmatprep.subr.bf16.mxu0 %v3984
        %4797 = vmatpush1.bf16.msra.mxu0 %v3983
        %4798 = vmatprep.subr.bf16.mxu0 %v3988
        %4799 = vmatpush1.bf16.msra.mxu0 %v3987
        %4800 = vmatprep.subr.bf16.mxu0 %v3992
        %4801 = vmatpush1.bf16.msra.mxu0 %v3991
        %4802 = vmatprep.subr.bf16.mxu0 %v3996
        %4803 = vmatpush1.bf16.msra.mxu0 %v3995
        %4804 = vmatprep.subr.bf16.mxu0 %v4000
        %4805 = vmatpush1.bf16.msra.mxu0 %v3999
        %4806 = vmatprep.subr.bf16.mxu0 %v4004
        %4807 = vmatpush1.bf16.msra.mxu0 %v4003
        %4808 = vmatprep.subr.bf16.mxu0 %v4008
        %4809 = vmatpush1.bf16.msra.mxu0 %v4007
        %4810 = vmatprep.subr.bf16.mxu0 %v4012
        %4811 = vmatpush1.bf16.msra.mxu0 %v4011
        %4812 = vmatprep.subr.bf16.mxu0 %v4016
        %4813 = vmatpush1.bf16.msra.mxu0 %v4015
        %4814 = vmatprep.subr.bf16.mxu0 %v4020
        %4815 = vmatpush1.bf16.msra.mxu0 %v4019
        %4816 = vmatprep.subr.bf16.mxu0 %v4024
        %4817 = vmatpush1.bf16.msra.mxu0 %v4023
        %4818 = vmatprep.subr.bf16.mxu0 %v4028
        %4819 = vmatpush1.bf16.msra.mxu0 %v4027
        %4820 = vmatprep.subr.bf16.mxu0 %v4032
        %4821 = vmatpush1.bf16.msra.mxu0 %v4031
        %4822 = vmatprep.subr.bf16.mxu0 %v4036
        %4823 = vmatpush1.bf16.msra.mxu0 %v4035
        %4824 = vmatprep.subr.bf16.mxu0 %v4040
        %4825 = vmatpush1.bf16.msra.mxu0 %v4039
        %4826 = vmatprep.subr.bf16.mxu0 %v4044
        %4827 = vmatpush1.bf16.msra.mxu0 %v4043
        %4828 = vmatprep.mubr.bf16.mxu0 %v2120
        %4829 = vmatmul.mubr.bf16.gmra.mrb[0].mxu0 %v2119
        %v4830 = vpop.f32.mrb[0].mxu0
        %v4831 = vadd.f32 %v4758, %v4830
        %v4832 = vpop.f32.mrb[0].mxu0
        %v4833 = vadd.f32 %v4760, %v4832
        %v4834 = vpop.f32.mrb[0].mxu0
        %v4835 = vadd.f32 %v4762, %v4834
        %v4836 = vpop.f32.mrb[0].mxu0
        %v4837 = vadd.f32 %v4764, %v4836
        %4838 = vmatprep.mubr.bf16.mxu0 %v2122
        %4839 = vmatmul.mubr.bf16.gmra.mrb[0].mxu0 %v2121
        %v4840 = vpop.f32.mrb[0].mxu0
        %v4841 = vadd.f32 %v4768, %v4840
        %v4842 = vpop.f32.mrb[0].mxu0
        %v4843 = vadd.f32 %v4770, %v4842
        %v4844 = vpop.f32.mrb[0].mxu0
        %v4845 = vadd.f32 %v4772, %v4844
        %v4846 = vpop.f32.mrb[0].mxu0
        %v4847 = vadd.f32 %v4774, %v4846
        %4848 = vmatprep.mubr.bf16.mxu0 %v2124
        %4849 = vmatmul.mubr.bf16.gmra.mrb[0].mxu0 %v2123
        %v4850 = vpop.f32.mrb[0].mxu0
        %v4851 = vadd.f32 %v4778, %v4850
        %v4852 = vpop.f32.mrb[0].mxu0
        %v4853 = vadd.f32 %v4780, %v4852
        %v4854 = vpop.f32.mrb[0].mxu0
        %v4855 = vadd.f32 %v4782, %v4854
        %v4856 = vpop.f32.mrb[0].mxu0
        %v4857 = vadd.f32 %v4784, %v4856
        %4858 = vmatprep.mubr.bf16.mxu0 %v2126
        %4859 = vmatmul.mubr.bf16.gmra.mrb[0].mxu0 %v2125
        %v4860 = vpop.f32.mrb[0].mxu0
        %v4861 = vadd.f32 %v4788, %v4860
        %v4862 = vpop.f32.mrb[0].mxu0
        %v4863 = vadd.f32 %v4790, %v4862
        %v4864 = vpop.f32.mrb[0].mxu0
        %v4865 = vadd.f32 %v4792, %v4864
        %v4866 = vpop.f32.mrb[0].mxu0
        %v4867 = vadd.f32 %v4794, %v4866
        %4868 = vdwg.mxu0
        %4869 = vmatprep.subr.bf16.mxu0 %v3666
        %4870 = vmatpush1.bf16.msra.mxu0 %v3665
        %4871 = vmatprep.subr.bf16.mxu0 %v3670
        %4872 = vmatpush1.bf16.msra.mxu0 %v3669
        %4873 = vmatprep.subr.bf16.mxu0 %v3674
        %4874 = vmatpush1.bf16.msra.mxu0 %v3673
        %4875 = vmatprep.subr.bf16.mxu0 %v3678
        %4876 = vmatpush1.bf16.msra.mxu0 %v3677
        %4877 = vmatprep.subr.bf16.mxu0 %v3682
        %4878 = vmatpush1.bf16.msra.mxu0 %v3681
        %4879 = vmatprep.subr.bf16.mxu0 %v3686
        %4880 = vmatpush1.bf16.msra.mxu0 %v3685
        %4881 = vmatprep.subr.bf16.mxu0 %v3690
        %4882 = vmatpush1.bf16.msra.mxu0 %v3689
        %4883 = vmatprep.subr.bf16.mxu0 %v3694
        %4884 = vmatpush1.bf16.msra.mxu0 %v3693
        %4885 = vmatprep.subr.bf16.mxu0 %v3698
        %4886 = vmatpush1.bf16.msra.mxu0 %v3697
        %4887 = vmatprep.subr.bf16.mxu0 %v3702
        %4888 = vmatpush1.bf16.msra.mxu0 %v3701
        %4889 = vmatprep.subr.bf16.mxu0 %v3706
        %4890 = vmatpush1.bf16.msra.mxu0 %v3705
        %4891 = vmatprep.subr.bf16.mxu0 %v3710
        %4892 = vmatpush1.bf16.msra.mxu0 %v3709
        %4893 = vmatprep.subr.bf16.mxu0 %v3714
        %4894 = vmatpush1.bf16.msra.mxu0 %v3713
        %4895 = vmatprep.subr.bf16.mxu0 %v3718
        %4896 = vmatpush1.bf16.msra.mxu0 %v3717
        %4897 = vmatprep.subr.bf16.mxu0 %v3722
        %4898 = vmatpush1.bf16.msra.mxu0 %v3721
        %4899 = vmatprep.subr.bf16.mxu0 %v3726
        %4900 = vmatpush1.bf16.msra.mxu0 %v3725
        %4901 = vmatprep.mubr.bf16.mxu0 %v2075
        %4902 = vmatmul.mubr.bf16.gmra.mrb[0].mxu0 %v2074
        %v4903 = vpop.f32.mrb[0].mxu0
        %v4904 = vadd.f32 0.0, %v4903
        %v4905 = vpop.f32.mrb[0].mxu0
        %v4906 = vadd.f32 0.0, %v4905
        %v4907 = vpop.f32.mrb[0].mxu0
        %v4908 = vadd.f32 0.0, %v4907
        %v4909 = vpop.f32.mrb[0].mxu0
        %v4910 = vadd.f32 0.0, %v4909
        %4911 = vmatprep.mubr.bf16.mxu0 %v2077
        %4912 = vmatmul.mubr.bf16.gmra.mrb[0].mxu0 %v2076
        %v4913 = vpop.f32.mrb[0].mxu0
        %v4914 = vadd.f32 0.0, %v4913
        %v4915 = vpop.f32.mrb[0].mxu0
        %v4916 = vadd.f32 0.0, %v4915
        %v4917 = vpop.f32.mrb[0].mxu0
        %v4918 = vadd.f32 0.0, %v4917
        %v4919 = vpop.f32.mrb[0].mxu0
        %v4920 = vadd.f32 0.0, %v4919
        %4921 = vmatprep.mubr.bf16.mxu0 %v2079
        %4922 = vmatmul.mubr.bf16.gmra.mrb[0].mxu0 %v2078
        %v4923 = vpop.f32.mrb[0].mxu0
        %v4924 = vadd.f32 0.0, %v4923
        %v4925 = vpop.f32.mrb[0].mxu0
        %v4926 = vadd.f32 0.0, %v4925
        %v4927 = vpop.f32.mrb[0].mxu0
        %v4928 = vadd.f32 0.0, %v4927
        %v4929 = vpop.f32.mrb[0].mxu0
        %v4930 = vadd.f32 0.0, %v4929
        %4931 = vmatprep.mubr.bf16.mxu0 %v2081
        %4932 = vmatmul.mubr.bf16.gmra.mrb[0].mxu0 %v2080
        %v4933 = vpop.f32.mrb[0].mxu0
        %v4934 = vadd.f32 0.0, %v4933
        %v4935 = vpop.f32.mrb[0].mxu0
        %v4936 = vadd.f32 0.0, %v4935
        %v4937 = vpop.f32.mrb[0].mxu0
        %v4938 = vadd.f32 0.0, %v4937
        %v4939 = vpop.f32.mrb[0].mxu0
        %v4940 = vadd.f32 0.0, %v4939
        %4941 = vdwg.mxu0
        %4942 = vmatprep.subr.bf16.mxu0 %v3730
        %4943 = vmatpush1.bf16.msra.mxu0 %v3729
        %4944 = vmatprep.subr.bf16.mxu0 %v3734
        %4945 = vmatpush1.bf16.msra.mxu0 %v3733
        %4946 = vmatprep.subr.bf16.mxu0 %v3738
        %4947 = vmatpush1.bf16.msra.mxu0 %v3737
        %4948 = vmatprep.subr.bf16.mxu0 %v3742
        %4949 = vmatpush1.bf16.msra.mxu0 %v3741
        %4950 = vmatprep.subr.bf16.mxu0 %v3746
        %4951 = vmatpush1.bf16.msra.mxu0 %v3745
        %4952 = vmatprep.subr.bf16.mxu0 %v3750
        %4953 = vmatpush1.bf16.msra.mxu0 %v3749
        %4954 = vmatprep.subr.bf16.mxu0 %v3754
        %4955 = vmatpush1.bf16.msra.mxu0 %v3753
        %4956 = vmatprep.subr.bf16.mxu0 %v3758
        %4957 = vmatpush1.bf16.msra.mxu0 %v3757
        %4958 = vmatprep.subr.bf16.mxu0 %v3762
        %4959 = vmatpush1.bf16.msra.mxu0 %v3761
        %4960 = vmatprep.subr.bf16.mxu0 %v3766
        %4961 = vmatpush1.bf16.msra.mxu0 %v3765
        %4962 = vmatprep.subr.bf16.mxu0 %v3770
        %4963 = vmatpush1.bf16.msra.mxu0 %v3769
        %4964 = vmatprep.subr.bf16.mxu0 %v3774
        %4965 = vmatpush1.bf16.msra.mxu0 %v3773
        %4966 = vmatprep.subr.bf16.mxu0 %v3778
        %4967 = vmatpush1.bf16.msra.mxu0 %v3777
        %4968 = vmatprep.subr.bf16.mxu0 %v3782
        %4969 = vmatpush1.bf16.msra.mxu0 %v3781
        %4970 = vmatprep.subr.bf16.mxu0 %v3786
        %4971 = vmatpush1.bf16.msra.mxu0 %v3785
        %4972 = vmatprep.subr.bf16.mxu0 %v3790
        %4973 = vmatpush1.bf16.msra.mxu0 %v3789
        %4974 = vmatprep.mubr.bf16.mxu0 %v2084
        %4975 = vmatmul.mubr.bf16.gmra.mrb[0].mxu0 %v2083
        %v4976 = vpop.f32.mrb[0].mxu0
        %v4977 = vadd.f32 %v4904, %v4976
        %v4978 = vpop.f32.mrb[0].mxu0
        %v4979 = vadd.f32 %v4906, %v4978
        %v4980 = vpop.f32.mrb[0].mxu0
        %v4981 = vadd.f32 %v4908, %v4980
        %v4982 = vpop.f32.mrb[0].mxu0
        %v4983 = vadd.f32 %v4910, %v4982
        %4984 = vmatprep.mubr.bf16.mxu0 %v2086
        %4985 = vmatmul.mubr.bf16.gmra.mrb[0].mxu0 %v2085
        %v4986 = vpop.f32.mrb[0].mxu0
        %v4987 = vadd.f32 %v4914, %v4986
        %v4988 = vpop.f32.mrb[0].mxu0
        %v4989 = vadd.f32 %v4916, %v4988
        %v4990 = vpop.f32.mrb[0].mxu0
        %v4991 = vadd.f32 %v4918, %v4990
        %v4992 = vpop.f32.mrb[0].mxu0
        %v4993 = vadd.f32 %v4920, %v4992
        %4994 = vmatprep.mubr.bf16.mxu0 %v2088
        %4995 = vmatmul.mubr.bf16.gmra.mrb[0].mxu0 %v2087
        %v4996 = vpop.f32.mrb[0].mxu0
        %v4997 = vadd.f32 %v4924, %v4996
        %v4998 = vpop.f32.mrb[0].mxu0
        %v4999 = vadd.f32 %v4926, %v4998
        %v5000 = vpop.f32.mrb[0].mxu0
        %v5001 = vadd.f32 %v4928, %v5000
        %v5002 = vpop.f32.mrb[0].mxu0
        %v5003 = vadd.f32 %v4930, %v5002
        %5004 = vmatprep.mubr.bf16.mxu0 %v2090
        %5005 = vmatmul.mubr.bf16.gmra.mrb[0].mxu0 %v2089
        %v5006 = vpop.f32.mrb[0].mxu0
        %v5007 = vadd.f32 %v4934, %v5006
        %v5008 = vpop.f32.mrb[0].mxu0
        %v5009 = vadd.f32 %v4936, %v5008
        %v5010 = vpop.f32.mrb[0].mxu0
        %v5011 = vadd.f32 %v4938, %v5010
        %v5012 = vpop.f32.mrb[0].mxu0
        %v5013 = vadd.f32 %v4940, %v5012
        %5014 = vdwg.mxu0
        %5015 = vmatprep.subr.bf16.mxu0 %v3794
        %5016 = vmatpush1.bf16.msra.mxu0 %v3793
        %5017 = vmatprep.subr.bf16.mxu0 %v3798
        %5018 = vmatpush1.bf16.msra.mxu0 %v3797
        %5019 = vmatprep.subr.bf16.mxu0 %v3802
        %5020 = vmatpush1.bf16.msra.mxu0 %v3801
        %5021 = vmatprep.subr.bf16.mxu0 %v3806
        %5022 = vmatpush1.bf16.msra.mxu0 %v3805
        %5023 = vmatprep.subr.bf16.mxu0 %v3810
        %5024 = vmatpush1.bf16.msra.mxu0 %v3809
        %5025 = vmatprep.subr.bf16.mxu0 %v3814
        %5026 = vmatpush1.bf16.msra.mxu0 %v3813
        %5027 = vmatprep.subr.bf16.mxu0 %v3818
        %5028 = vmatpush1.bf16.msra.mxu0 %v3817
        %5029 = vmatprep.subr.bf16.mxu0 %v3822
        %5030 = vmatpush1.bf16.msra.mxu0 %v3821
        %5031 = vmatprep.subr.bf16.mxu0 %v3826
        %5032 = vmatpush1.bf16.msra.mxu0 %v3825
        %5033 = vmatprep.subr.bf16.mxu0 %v3830
        %5034 = vmatpush1.bf16.msra.mxu0 %v3829
        %5035 = vmatprep.subr.bf16.mxu0 %v3834
        %5036 = vmatpush1.bf16.msra.mxu0 %v3833
        %5037 = vmatprep.subr.bf16.mxu0 %v3838
        %5038 = vmatpush1.bf16.msra.mxu0 %v3837
        %5039 = vmatprep.subr.bf16.mxu0 %v3842
        %5040 = vmatpush1.bf16.msra.mxu0 %v3841
        %5041 = vmatprep.subr.bf16.mxu0 %v3846
        %5042 = vmatpush1.bf16.msra.mxu0 %v3845
        %5043 = vmatprep.subr.bf16.mxu0 %v3850
        %5044 = vmatpush1.bf16.msra.mxu0 %v3849
        %5045 = vmatprep.subr.bf16.mxu0 %v3854
        %5046 = vmatpush1.bf16.msra.mxu0 %v3853
        %5047 = vmatprep.mubr.bf16.mxu0 %v2093
        %5048 = vmatmul.mubr.bf16.gmra.mrb[0].mxu0 %v2092
        %v5049 = vpop.f32.mrb[0].mxu0
        %v5050 = vadd.f32 %v4977, %v5049
        %v5051 = vpop.f32.mrb[0].mxu0
        %v5052 = vadd.f32 %v4979, %v5051
        %v5053 = vpop.f32.mrb[0].mxu0
        %v5054 = vadd.f32 %v4981, %v5053
        %v5055 = vpop.f32.mrb[0].mxu0
        %v5056 = vadd.f32 %v4983, %v5055
        %5057 = vmatprep.mubr.bf16.mxu0 %v2095
        %5058 = vmatmul.mubr.bf16.gmra.mrb[0].mxu0 %v2094
        %v5059 = vpop.f32.mrb[0].mxu0
        %v5060 = vadd.f32 %v4987, %v5059
        %v5061 = vpop.f32.mrb[0].mxu0
        %v5062 = vadd.f32 %v4989, %v5061
        %v5063 = vpop.f32.mrb[0].mxu0
        %v5064 = vadd.f32 %v4991, %v5063
        %v5065 = vpop.f32.mrb[0].mxu0
        %v5066 = vadd.f32 %v4993, %v5065
        %5067 = vmatprep.mubr.bf16.mxu0 %v2097
        %5068 = vmatmul.mubr.bf16.gmra.mrb[0].mxu0 %v2096
        %v5069 = vpop.f32.mrb[0].mxu0
        %v5070 = vadd.f32 %v4997, %v5069
        %v5071 = vpop.f32.mrb[0].mxu0
        %v5072 = vadd.f32 %v4999, %v5071
        %v5073 = vpop.f32.mrb[0].mxu0
        %v5074 = vadd.f32 %v5001, %v5073
        %v5075 = vpop.f32.mrb[0].mxu0
        %v5076 = vadd.f32 %v5003, %v5075
        %5077 = vmatprep.mubr.bf16.mxu0 %v2099
        %5078 = vmatmul.mubr.bf16.gmra.mrb[0].mxu0 %v2098
        %v5079 = vpop.f32.mrb[0].mxu0
        %v5080 = vadd.f32 %v5007, %v5079
        %v5081 = vpop.f32.mrb[0].mxu0
        %v5082 = vadd.f32 %v5009, %v5081
        %v5083 = vpop.f32.mrb[0].mxu0
        %v5084 = vadd.f32 %v5011, %v5083
        %v5085 = vpop.f32.mrb[0].mxu0
        %v5086 = vadd.f32 %v5013, %v5085
        %5087 = vdwg.mxu0
        %5088 = vmatprep.subr.bf16.mxu0 %v3858
        %5089 = vmatpush1.bf16.msra.mxu0 %v3857
        %5090 = vmatprep.subr.bf16.mxu0 %v3862
        %5091 = vmatpush1.bf16.msra.mxu0 %v3861
        %5092 = vmatprep.subr.bf16.mxu0 %v3866
        %5093 = vmatpush1.bf16.msra.mxu0 %v3865
        %5094 = vmatprep.subr.bf16.mxu0 %v3870
        %5095 = vmatpush1.bf16.msra.mxu0 %v3869
        %5096 = vmatprep.subr.bf16.mxu0 %v3874
        %5097 = vmatpush1.bf16.msra.mxu0 %v3873
        %5098 = vmatprep.subr.bf16.mxu0 %v3878
        %5099 = vmatpush1.bf16.msra.mxu0 %v3877
        %5100 = vmatprep.subr.bf16.mxu0 %v3882
        %5101 = vmatpush1.bf16.msra.mxu0 %v3881
        %5102 = vmatprep.subr.bf16.mxu0 %v3886
        %5103 = vmatpush1.bf16.msra.mxu0 %v3885
        %5104 = vmatprep.subr.bf16.mxu0 %v3890
        %5105 = vmatpush1.bf16.msra.mxu0 %v3889
        %5106 = vmatprep.subr.bf16.mxu0 %v3894
        %5107 = vmatpush1.bf16.msra.mxu0 %v3893
        %5108 = vmatprep.subr.bf16.mxu0 %v3898
        %5109 = vmatpush1.bf16.msra.mxu0 %v3897
        %5110 = vmatprep.subr.bf16.mxu0 %v3902
        %5111 = vmatpush1.bf16.msra.mxu0 %v3901
        %5112 = vmatprep.subr.bf16.mxu0 %v3906
        %5113 = vmatpush1.bf16.msra.mxu0 %v3905
        %5114 = vmatprep.subr.bf16.mxu0 %v3910
        %5115 = vmatpush1.bf16.msra.mxu0 %v3909
        %5116 = vmatprep.subr.bf16.mxu0 %v3914
        %5117 = vmatpush1.bf16.msra.mxu0 %v3913
        %5118 = vmatprep.subr.bf16.mxu0 %v3918
        %5119 = vmatpush1.bf16.msra.mxu0 %v3917
        %5120 = vmatprep.mubr.bf16.mxu0 %v2102
        %5121 = vmatmul.mubr.bf16.gmra.mrb[0].mxu0 %v2101
        %v5122 = vpop.f32.mrb[0].mxu0
        %v5123 = vadd.f32 %v5050, %v5122
        %v5124 = vpop.f32.mrb[0].mxu0
        %v5125 = vadd.f32 %v5052, %v5124
        %v5126 = vpop.f32.mrb[0].mxu0
        %v5127 = vadd.f32 %v5054, %v5126
        %v5128 = vpop.f32.mrb[0].mxu0
        %v5129 = vadd.f32 %v5056, %v5128
        %5130 = vmatprep.mubr.bf16.mxu0 %v2104
        %5131 = vmatmul.mubr.bf16.gmra.mrb[0].mxu0 %v2103
        %v5132 = vpop.f32.mrb[0].mxu0
        %v5133 = vadd.f32 %v5060, %v5132
        %v5134 = vpop.f32.mrb[0].mxu0
        %v5135 = vadd.f32 %v5062, %v5134
        %v5136 = vpop.f32.mrb[0].mxu0
        %v5137 = vadd.f32 %v5064, %v5136
        %v5138 = vpop.f32.mrb[0].mxu0
        %v5139 = vadd.f32 %v5066, %v5138
        %5140 = vmatprep.mubr.bf16.mxu0 %v2106
        %5141 = vmatmul.mubr.bf16.gmra.mrb[0].mxu0 %v2105
        %v5142 = vpop.f32.mrb[0].mxu0
        %v5143 = vadd.f32 %v5070, %v5142
        %v5144 = vpop.f32.mrb[0].mxu0
        %v5145 = vadd.f32 %v5072, %v5144
        %v5146 = vpop.f32.mrb[0].mxu0
        %v5147 = vadd.f32 %v5074, %v5146
        %v5148 = vpop.f32.mrb[0].mxu0
        %v5149 = vadd.f32 %v5076, %v5148
        %5150 = vmatprep.mubr.bf16.mxu0 %v2108
        %5151 = vmatmul.mubr.bf16.gmra.mrb[0].mxu0 %v2107
        %v5152 = vpop.f32.mrb[0].mxu0
        %v5153 = vadd.f32 %v5080, %v5152
        %v5154 = vpop.f32.mrb[0].mxu0
        %v5155 = vadd.f32 %v5082, %v5154
        %v5156 = vpop.f32.mrb[0].mxu0
        %v5157 = vadd.f32 %v5084, %v5156
        %v5158 = vpop.f32.mrb[0].mxu0
        %v5159 = vadd.f32 %v5086, %v5158
        %5160 = vdwg.mxu0
        %5161 = vmatprep.subr.bf16.mxu0 %v3922
        %5162 = vmatpush1.bf16.msra.mxu0 %v3921
        %5163 = vmatprep.subr.bf16.mxu0 %v3926
        %5164 = vmatpush1.bf16.msra.mxu0 %v3925
        %5165 = vmatprep.subr.bf16.mxu0 %v3930
        %5166 = vmatpush1.bf16.msra.mxu0 %v3929
        %5167 = vmatprep.subr.bf16.mxu0 %v3934
        %5168 = vmatpush1.bf16.msra.mxu0 %v3933
        %5169 = vmatprep.subr.bf16.mxu0 %v3938
        %5170 = vmatpush1.bf16.msra.mxu0 %v3937
        %5171 = vmatprep.subr.bf16.mxu0 %v3942
        %5172 = vmatpush1.bf16.msra.mxu0 %v3941
        %5173 = vmatprep.subr.bf16.mxu0 %v3946
        %5174 = vmatpush1.bf16.msra.mxu0 %v3945
        %5175 = vmatprep.subr.bf16.mxu0 %v3950
        %5176 = vmatpush1.bf16.msra.mxu0 %v3949
        %5177 = vmatprep.subr.bf16.mxu0 %v3954
        %5178 = vmatpush1.bf16.msra.mxu0 %v3953
        %5179 = vmatprep.subr.bf16.mxu0 %v3958
        %5180 = vmatpush1.bf16.msra.mxu0 %v3957
        %5181 = vmatprep.subr.bf16.mxu0 %v3962
        %5182 = vmatpush1.bf16.msra.mxu0 %v3961
        %5183 = vmatprep.subr.bf16.mxu0 %v3966
        %5184 = vmatpush1.bf16.msra.mxu0 %v3965
        %5185 = vmatprep.subr.bf16.mxu0 %v3970
        %5186 = vmatpush1.bf16.msra.mxu0 %v3969
        %5187 = vmatprep.subr.bf16.mxu0 %v3974
        %5188 = vmatpush1.bf16.msra.mxu0 %v3973
        %5189 = vmatprep.subr.bf16.mxu0 %v3978
        %5190 = vmatpush1.bf16.msra.mxu0 %v3977
        %5191 = vmatprep.subr.bf16.mxu0 %v3982
        %5192 = vmatpush1.bf16.msra.mxu0 %v3981
        %5193 = vmatprep.mubr.bf16.mxu0 %v2111
        %5194 = vmatmul.mubr.bf16.gmra.mrb[0].mxu0 %v2110
        %v5195 = vpop.f32.mrb[0].mxu0
        %v5196 = vadd.f32 %v5123, %v5195
        %v5197 = vpop.f32.mrb[0].mxu0
        %v5198 = vadd.f32 %v5125, %v5197
        %v5199 = vpop.f32.mrb[0].mxu0
        %v5200 = vadd.f32 %v5127, %v5199
        %v5201 = vpop.f32.mrb[0].mxu0
        %v5202 = vadd.f32 %v5129, %v5201
        %5203 = vmatprep.mubr.bf16.mxu0 %v2113
        %5204 = vmatmul.mubr.bf16.gmra.mrb[0].mxu0 %v2112
        %v5205 = vpop.f32.mrb[0].mxu0
        %v5206 = vadd.f32 %v5133, %v5205
        %v5207 = vpop.f32.mrb[0].mxu0
        %v5208 = vadd.f32 %v5135, %v5207
        %v5209 = vpop.f32.mrb[0].mxu0
        %v5210 = vadd.f32 %v5137, %v5209
        %v5211 = vpop.f32.mrb[0].mxu0
        %v5212 = vadd.f32 %v5139, %v5211
        %5213 = vmatprep.mubr.bf16.mxu0 %v2115
        %5214 = vmatmul.mubr.bf16.gmra.mrb[0].mxu0 %v2114
        %v5215 = vpop.f32.mrb[0].mxu0
        %v5216 = vadd.f32 %v5143, %v5215
        %v5217 = vpop.f32.mrb[0].mxu0
        %v5218 = vadd.f32 %v5145, %v5217
        %v5219 = vpop.f32.mrb[0].mxu0
        %v5220 = vadd.f32 %v5147, %v5219
        %v5221 = vpop.f32.mrb[0].mxu0
        %v5222 = vadd.f32 %v5149, %v5221
        %5223 = vmatprep.mubr.bf16.mxu0 %v2117
        %5224 = vmatmul.mubr.bf16.gmra.mrb[0].mxu0 %v2116
        %v5225 = vpop.f32.mrb[0].mxu0
        %v5226 = vadd.f32 %v5153, %v5225
        %v5227 = vpop.f32.mrb[0].mxu0
        %v5228 = vadd.f32 %v5155, %v5227
        %v5229 = vpop.f32.mrb[0].mxu0
        %v5230 = vadd.f32 %v5157, %v5229
        %v5231 = vpop.f32.mrb[0].mxu0
        %v5232 = vadd.f32 %v5159, %v5231
        %5233 = vdwg.mxu0
        %5234 = vmatprep.subr.bf16.mxu0 %v3986
        %5235 = vmatpush1.bf16.msra.mxu0 %v3985
        %5236 = vmatprep.subr.bf16.mxu0 %v3990
        %5237 = vmatpush1.bf16.msra.mxu0 %v3989
        %5238 = vmatprep.subr.bf16.mxu0 %v3994
        %5239 = vmatpush1.bf16.msra.mxu0 %v3993
        %5240 = vmatprep.subr.bf16.mxu0 %v3998
        %5241 = vmatpush1.bf16.msra.mxu0 %v3997
        %5242 = vmatprep.subr.bf16.mxu0 %v4002
        %5243 = vmatpush1.bf16.msra.mxu0 %v4001
        %5244 = vmatprep.subr.bf16.mxu0 %v4006
        %5245 = vmatpush1.bf16.msra.mxu0 %v4005
        %5246 = vmatprep.subr.bf16.mxu0 %v4010
        %5247 = vmatpush1.bf16.msra.mxu0 %v4009
        %5248 = vmatprep.subr.bf16.mxu0 %v4014
        %5249 = vmatpush1.bf16.msra.mxu0 %v4013
        %5250 = vmatprep.subr.bf16.mxu0 %v4018
        %5251 = vmatpush1.bf16.msra.mxu0 %v4017
        %5252 = vmatprep.subr.bf16.mxu0 %v4022
        %5253 = vmatpush1.bf16.msra.mxu0 %v4021
        %5254 = vmatprep.subr.bf16.mxu0 %v4026
        %5255 = vmatpush1.bf16.msra.mxu0 %v4025
        %5256 = vmatprep.subr.bf16.mxu0 %v4030
        %5257 = vmatpush1.bf16.msra.mxu0 %v4029
        %5258 = vmatprep.subr.bf16.mxu0 %v4034
        %5259 = vmatpush1.bf16.msra.mxu0 %v4033
        %5260 = vmatprep.subr.bf16.mxu0 %v4038
        %5261 = vmatpush1.bf16.msra.mxu0 %v4037
        %5262 = vmatprep.subr.bf16.mxu0 %v4042
        %5263 = vmatpush1.bf16.msra.mxu0 %v4041
        %5264 = vmatprep.subr.bf16.mxu0 %v4046
        %5265 = vmatpush1.bf16.msra.mxu0 %v4045
        %5266 = vmatprep.mubr.bf16.mxu0 %v2120
        %5267 = vmatmul.mubr.bf16.gmra.mrb[0].mxu0 %v2119
        %v5268 = vpop.f32.mrb[0].mxu0
        %v5269 = vadd.f32 %v5196, %v5268
        %v5270 = vpop.f32.mrb[0].mxu0
        %v5271 = vadd.f32 %v5198, %v5270
        %v5272 = vpop.f32.mrb[0].mxu0
        %v5273 = vadd.f32 %v5200, %v5272
        %v5274 = vpop.f32.mrb[0].mxu0
        %v5275 = vadd.f32 %v5202, %v5274
        %5276 = vmatprep.mubr.bf16.mxu0 %v2122
        %5277 = vmatmul.mubr.bf16.gmra.mrb[0].mxu0 %v2121
        %v5278 = vpop.f32.mrb[0].mxu0
        %v5279 = vadd.f32 %v5206, %v5278
        %v5280 = vpop.f32.mrb[0].mxu0
        %v5281 = vadd.f32 %v5208, %v5280
        %v5282 = vpop.f32.mrb[0].mxu0
        %v5283 = vadd.f32 %v5210, %v5282
        %v5284 = vpop.f32.mrb[0].mxu0
        %v5285 = vadd.f32 %v5212, %v5284
        %5286 = vmatprep.mubr.bf16.mxu0 %v2124
        %5287 = vmatmul.mubr.bf16.gmra.mrb[0].mxu0 %v2123
        %v5288 = vpop.f32.mrb[0].mxu0
        %v5289 = vadd.f32 %v5216, %v5288
        %v5290 = vpop.f32.mrb[0].mxu0
        %v5291 = vadd.f32 %v5218, %v5290
        %v5292 = vpop.f32.mrb[0].mxu0
        %v5293 = vadd.f32 %v5220, %v5292
        %v5294 = vpop.f32.mrb[0].mxu0
        %v5295 = vadd.f32 %v5222, %v5294
        %5296 = vmatprep.mubr.bf16.mxu0 %v2126
        %5297 = vmatmul.mubr.bf16.gmra.mrb[0].mxu0 %v2125
        %v5298 = vpop.f32.mrb[0].mxu0
        %v5299 = vadd.f32 %v5226, %v5298
        %v5300 = vpop.f32.mrb[0].mxu0
        %v5301 = vadd.f32 %v5228, %v5300
        %v5302 = vpop.f32.mrb[0].mxu0
        %v5303 = vadd.f32 %v5230, %v5302
        %v5304 = vpop.f32.mrb[0].mxu0
        %v5305 = vadd.f32 %v5232, %v5304
        %5306 = vdwg.mxu0
        %v5307 = vmax.f32 %v4831, %v4833
        %v5308 = vmax.f32 %v4835, %v4837
        %v5309 = vmax.f32 %v4841, %v4843
        %v5310 = vmax.f32 %v4845, %v4847
        %v5311 = vmax.f32 %v4851, %v4853
        %v5312 = vmax.f32 %v4855, %v4857
        %v5313 = vmax.f32 %v4861, %v4863
        %v5314 = vmax.f32 %v4865, %v4867
        %v5315 = vmax.f32 %v5269, %v5271
        %v5316 = vmax.f32 %v5273, %v5275
        %v5317 = vmax.f32 %v5279, %v5281
        %v5318 = vmax.f32 %v5283, %v5285
        %v5319 = vmax.f32 %v5289, %v5291
        %v5320 = vmax.f32 %v5293, %v5295
        %v5321 = vmax.f32 %v5299, %v5301
        %v5322 = vmax.f32 %v5303, %v5305
        %v5323 = vmax.f32 %v5307, %v5315
        %v5324 = vmax.f32 %v5308, %v5316
        %v5325 = vmax.f32 %v5309, %v5317
        %v5326 = vmax.f32 %v5310, %v5318
        %v5327 = vmax.f32 %v5311, %v5319
        %v5328 = vmax.f32 %v5312, %v5320
        %v5329 = vmax.f32 %v5313, %v5321
        %v5330 = vmax.f32 %v5314, %v5322
        %v5331 = vld [vmem:[%s4] sm:$0x1]
        %v5333 = vlaneseq
        %v5334 = vshrl.u32 %v5333, 7
        %v5335 = vsub.s32 0, %v5334
        %v5336 = vrot.slane %v5331, %v5335
        %v5338 = vadd.f32 %v5323, %v5336
        %v5339 = vadd.f32 %v5324, %v5336
        %v5340 = vadd.f32 %v5325, %v5336
        %v5341 = vadd.f32 %v5326, %v5336
        %v5342 = vadd.f32 %v5327, %v5336
        %v5343 = vadd.f32 %v5328, %v5336
        %v5344 = vadd.f32 %v5329, %v5336
        %v5345 = vadd.f32 %v5330, %v5336
        %v5346 = vmax.f32 %v5338, 0.0
        %v5347 = vmax.f32 %v5339, 0.0
        %v5348 = vmax.f32 %v5340, 0.0
        %v5349 = vmax.f32 %v5341, 0.0
        %v5350 = vmax.f32 %v5342, 0.0
        %v5351 = vmax.f32 %v5343, 0.0
        %v5352 = vmax.f32 %v5344, 0.0
        %v5353 = vmax.f32 %v5345, 0.0
        %v5354 = vpack.c.bf16 %v5347, %v5346
        %v5355 = vpack.c.bf16 %v5349, %v5348
        %v5356 = vpack.c.bf16 %v5351, %v5350
        %v5357 = vpack.c.bf16 %v5353, %v5352
        %v5358 = vld [vmem:[%s5] sm:$0xf]
        %v5359 = vld [vmem:[%s5 + $0x4] sm:$0xf]
        %v5360 = vld [vmem:[%s5 + $0x8] sm:$0xf]
        %v5361 = vld [vmem:[%s5 + $0xc] sm:$0xf]
        %v5362 = vld [vmem:[%s5 + $0x10] sm:$0xf]
        %v5363 = vld [vmem:[%s5 + $0x14] sm:$0xf]
        %v5364 = vld [vmem:[%s5 + $0x18] sm:$0xf]
        %v5365 = vld [vmem:[%s5 + $0x1c] sm:$0xf]
        %v5366 = vld [vmem:[%s5 + $0x20] sm:$0xf]
        %v5367 = vld [vmem:[%s5 + $0x24] sm:$0xf]
        %v5368 = vld [vmem:[%s5 + $0x28] sm:$0xf]
        %v5369 = vld [vmem:[%s5 + $0x2c] sm:$0xf]
        %v5370 = vld [vmem:[%s5 + $0x30] sm:$0xf]
        %v5371 = vld [vmem:[%s5 + $0x34] sm:$0xf]
        %v5372 = vld [vmem:[%s5 + $0x38] sm:$0xf]
        %v5373 = vld [vmem:[%s5 + $0x3c] sm:$0xf]
        %v5374 = vld [vmem:[%s5 + $0x40] sm:$0xf]
        %v5375 = vld [vmem:[%s5 + $0x44] sm:$0xf]
        %v5376 = vld [vmem:[%s5 + $0x48] sm:$0xf]
        %v5377 = vld [vmem:[%s5 + $0x4c] sm:$0xf]
        %v5378 = vld [vmem:[%s5 + $0x50] sm:$0xf]
        %v5379 = vld [vmem:[%s5 + $0x54] sm:$0xf]
        %v5380 = vld [vmem:[%s5 + $0x58] sm:$0xf]
        %v5381 = vld [vmem:[%s5 + $0x5c] sm:$0xf]
        %v5382 = vld [vmem:[%s5 + $0x60] sm:$0xf]
        %v5383 = vld [vmem:[%s5 + $0x64] sm:$0xf]
        %v5384 = vld [vmem:[%s5 + $0x68] sm:$0xf]
        %v5385 = vld [vmem:[%s5 + $0x6c] sm:$0xf]
        %v5386 = vld [vmem:[%s5 + $0x70] sm:$0xf]
        %v5387 = vld [vmem:[%s5 + $0x74] sm:$0xf]
        %v5388 = vld [vmem:[%s5 + $0x78] sm:$0xf]
        %v5389 = vld [vmem:[%s5 + $0x7c] sm:$0xf]
        %v5390 = vld [vmem:[%s5 + $0x80] sm:$0xf]
        %v5391 = vld [vmem:[%s5 + $0x84] sm:$0xf]
        %v5392 = vld [vmem:[%s5 + $0x88] sm:$0xf]
        %v5393 = vld [vmem:[%s5 + $0x8c] sm:$0xf]
        %v5394 = vld [vmem:[%s5 + $0x90] sm:$0xf]
        %v5395 = vld [vmem:[%s5 + $0x94] sm:$0xf]
        %v5396 = vld [vmem:[%s5 + $0x98] sm:$0xf]
        %v5397 = vld [vmem:[%s5 + $0x9c] sm:$0xf]
        %v5398 = vld [vmem:[%s5 + $0xa0] sm:$0xf]
        %v5399 = vld [vmem:[%s5 + $0xa4] sm:$0xf]
        %v5400 = vld [vmem:[%s5 + $0xa8] sm:$0xf]
        %v5401 = vld [vmem:[%s5 + $0xac] sm:$0xf]
        %v5402 = vld [vmem:[%s5 + $0xb0] sm:$0xf]
        %v5403 = vld [vmem:[%s5 + $0xb4] sm:$0xf]
        %v5404 = vld [vmem:[%s5 + $0xb8] sm:$0xf]
        %v5405 = vld [vmem:[%s5 + $0xbc] sm:$0xf]
        %v5406 = vld [vmem:[%s5 + $0xc0] sm:$0xf]
        %v5407 = vld [vmem:[%s5 + $0xc4] sm:$0xf]
        %v5408 = vld [vmem:[%s5 + $0xc8] sm:$0xf]
        %v5409 = vld [vmem:[%s5 + $0xcc] sm:$0xf]
        %v5410 = vld [vmem:[%s5 + $0xd0] sm:$0xf]
        %v5411 = vld [vmem:[%s5 + $0xd4] sm:$0xf]
        %v5412 = vld [vmem:[%s5 + $0xd8] sm:$0xf]
        %v5413 = vld [vmem:[%s5 + $0xdc] sm:$0xf]
        %v5414 = vld [vmem:[%s5 + $0xe0] sm:$0xf]
        %v5415 = vld [vmem:[%s5 + $0xe4] sm:$0xf]
        %v5416 = vld [vmem:[%s5 + $0xe8] sm:$0xf]
        %v5417 = vld [vmem:[%s5 + $0xec] sm:$0xf]
        %v5418 = vld [vmem:[%s5 + $0xf0] sm:$0xf]
        %v5419 = vld [vmem:[%s5 + $0xf4] sm:$0xf]
        %v5420 = vld [vmem:[%s5 + $0xf8] sm:$0xf]
        %v5421 = vld [vmem:[%s5 + $0xfc] sm:$0xf]
        %v5422 = vld [vmem:[%s6] sm:$0x1]
        %v5424 = vlaneseq
        %v5425 = vshrl.u32 %v5424, 7
        %v5426 = vsub.s32 0, %v5425
        %v5427 = vrot.slane %v5422, %v5426
        %v5493 = vunpack.c.l.b16 %v5358
        %v5494 = vunpack.c.l.b16 %v5359
        %v5495 = vunpack.c.l.b16 %v5360
        %v5496 = vunpack.c.l.b16 %v5361
        %v5497 = vunpack.c.l.b16 %v5362
        %v5498 = vunpack.c.l.b16 %v5363
        %v5499 = vunpack.c.l.b16 %v5364
        %v5500 = vunpack.c.l.b16 %v5365
        %v5501 = vunpack.c.l.b16 %v5366
        %v5502 = vunpack.c.l.b16 %v5367
        %v5503 = vunpack.c.l.b16 %v5368
        %v5504 = vunpack.c.l.b16 %v5369
        %v5505 = vunpack.c.l.b16 %v5370
        %v5506 = vunpack.c.l.b16 %v5371
        %v5507 = vunpack.c.l.b16 %v5372
        %v5508 = vunpack.c.l.b16 %v5373
        %v5509 = vunpack.c.l.b16 %v5374
        %v5510 = vunpack.c.l.b16 %v5375
        %v5511 = vunpack.c.l.b16 %v5376
        %v5512 = vunpack.c.l.b16 %v5377
        %v5513 = vunpack.c.l.b16 %v5378
        %v5514 = vunpack.c.l.b16 %v5379
        %v5515 = vunpack.c.l.b16 %v5380
        %v5516 = vunpack.c.l.b16 %v5381
        %v5517 = vunpack.c.l.b16 %v5382
        %v5518 = vunpack.c.l.b16 %v5383
        %v5519 = vunpack.c.l.b16 %v5384
        %v5520 = vunpack.c.l.b16 %v5385
        %v5521 = vunpack.c.l.b16 %v5386
        %v5522 = vunpack.c.l.b16 %v5387
        %v5523 = vunpack.c.l.b16 %v5388
        %v5524 = vunpack.c.l.b16 %v5389
        %v5525 = vunpack.c.l.b16 %v5390
        %v5526 = vunpack.c.l.b16 %v5391
        %v5527 = vunpack.c.l.b16 %v5392
        %v5528 = vunpack.c.l.b16 %v5393
        %v5529 = vunpack.c.l.b16 %v5394
        %v5530 = vunpack.c.l.b16 %v5395
        %v5531 = vunpack.c.l.b16 %v5396
        %v5532 = vunpack.c.l.b16 %v5397
        %v5533 = vunpack.c.l.b16 %v5398
        %v5534 = vunpack.c.l.b16 %v5399
        %v5535 = vunpack.c.l.b16 %v5400
        %v5536 = vunpack.c.l.b16 %v5401
        %v5537 = vunpack.c.l.b16 %v5402
        %v5538 = vunpack.c.l.b16 %v5403
        %v5539 = vunpack.c.l.b16 %v5404
        %v5540 = vunpack.c.l.b16 %v5405
        %v5541 = vunpack.c.l.b16 %v5406
        %v5542 = vunpack.c.l.b16 %v5407
        %v5543 = vunpack.c.l.b16 %v5408
        %v5544 = vunpack.c.l.b16 %v5409
        %v5545 = vunpack.c.l.b16 %v5410
        %v5546 = vunpack.c.l.b16 %v5411
        %v5547 = vunpack.c.l.b16 %v5412
        %v5548 = vunpack.c.l.b16 %v5413
        %v5549 = vunpack.c.l.b16 %v5414
        %v5550 = vunpack.c.l.b16 %v5415
        %v5551 = vunpack.c.l.b16 %v5416
        %v5552 = vunpack.c.l.b16 %v5417
        %v5553 = vunpack.c.l.b16 %v5418
        %v5554 = vunpack.c.l.b16 %v5419
        %v5555 = vunpack.c.l.b16 %v5420
        %v5556 = vunpack.c.l.b16 %v5421
        %v5557 = vpack.c.b16 %v5494, %v5493
        %v5558 = vpack.c.b16 %v5496, %v5495
        %v5559 = vpack.c.b16 %v5498, %v5497
        %v5560 = vpack.c.b16 %v5500, %v5499
        %v5561 = vpack.c.b16 %v5502, %v5501
        %v5562 = vpack.c.b16 %v5504, %v5503
        %v5563 = vpack.c.b16 %v5506, %v5505
        %v5564 = vpack.c.b16 %v5508, %v5507
        %v5565 = vpack.c.b16 %v5510, %v5509
        %v5566 = vpack.c.b16 %v5512, %v5511
        %v5567 = vpack.c.b16 %v5514, %v5513
        %v5568 = vpack.c.b16 %v5516, %v5515
        %v5569 = vpack.c.b16 %v5518, %v5517
        %v5570 = vpack.c.b16 %v5520, %v5519
        %v5571 = vpack.c.b16 %v5522, %v5521
        %v5572 = vpack.c.b16 %v5524, %v5523
        %v5573 = vpack.c.b16 %v5526, %v5525
        %v5574 = vpack.c.b16 %v5528, %v5527
        %v5575 = vpack.c.b16 %v5530, %v5529
        %v5576 = vpack.c.b16 %v5532, %v5531
        %v5577 = vpack.c.b16 %v5534, %v5533
        %v5578 = vpack.c.b16 %v5536, %v5535
        %v5579 = vpack.c.b16 %v5538, %v5537
        %v5580 = vpack.c.b16 %v5540, %v5539
        %v5581 = vpack.c.b16 %v5542, %v5541
        %v5582 = vpack.c.b16 %v5544, %v5543
        %v5583 = vpack.c.b16 %v5546, %v5545
        %v5584 = vpack.c.b16 %v5548, %v5547
        %v5585 = vpack.c.b16 %v5550, %v5549
        %v5586 = vpack.c.b16 %v5552, %v5551
        %v5587 = vpack.c.b16 %v5554, %v5553
        %v5588 = vpack.c.b16 %v5556, %v5555
        %5621 = vmatprep.subr.bf16.mxu0 0
        %5622 = vmatpush1.bf16.msra.mxu0 %v5557
        %5623 = vmatprep.subr.bf16.mxu0 0
        %5624 = vmatpush1.bf16.msra.mxu0 %v5558
        %5625 = vmatprep.subr.bf16.mxu0 0
        %5626 = vmatpush1.bf16.msra.mxu0 %v5559
        %5627 = vmatprep.subr.bf16.mxu0 0
        %5628 = vmatpush1.bf16.msra.mxu0 %v5560
        %5629 = vmatprep.subr.bf16.mxu0 0
        %5630 = vmatpush1.bf16.msra.mxu0 %v5561
        %5631 = vmatprep.subr.bf16.mxu0 0
        %5632 = vmatpush1.bf16.msra.mxu0 %v5562
        %5633 = vmatprep.subr.bf16.mxu0 0
        %5634 = vmatpush1.bf16.msra.mxu0 %v5563
        %5635 = vmatprep.subr.bf16.mxu0 0
        %5636 = vmatpush1.bf16.msra.mxu0 %v5564
        %5637 = vmatprep.subr.bf16.mxu0 0
        %5638 = vmatpush1.bf16.msra.mxu0 %v5565
        %5639 = vmatprep.subr.bf16.mxu0 0
        %5640 = vmatpush1.bf16.msra.mxu0 %v5566
        %5641 = vmatprep.subr.bf16.mxu0 0
        %5642 = vmatpush1.bf16.msra.mxu0 %v5567
        %5643 = vmatprep.subr.bf16.mxu0 0
        %5644 = vmatpush1.bf16.msra.mxu0 %v5568
        %5645 = vmatprep.subr.bf16.mxu0 0
        %5646 = vmatpush1.bf16.msra.mxu0 %v5569
        %5647 = vmatprep.subr.bf16.mxu0 0
        %5648 = vmatpush1.bf16.msra.mxu0 %v5570
        %5649 = vmatprep.subr.bf16.mxu0 0
        %5650 = vmatpush1.bf16.msra.mxu0 %v5571
        %5651 = vmatprep.subr.bf16.mxu0 0
        %5652 = vmatpush1.bf16.msra.mxu0 %v5572
        %5653 = vmatprep.mubr.bf16.mxu0 %v5355
        %5654 = vmatmul.mubr.bf16.gmra.mrb[0].mxu0 %v5354
        %v5655 = vpop.f32.mrb[0].mxu0
        %v5656 = vadd.f32 %v5427, %v5655
        %v5657 = vpop.f32.mrb[0].mxu0
        %v5658 = vpop.f32.mrb[0].mxu0
        %v5659 = vadd.f32 %v5427, %v5658
        %v5660 = vpop.f32.mrb[0].mxu0
        %5661 = vdwg.mxu0
        %5662 = vmatprep.subr.bf16.mxu0 0
        %5663 = vmatpush1.bf16.msra.mxu0 %v5573
        %5664 = vmatprep.subr.bf16.mxu0 0
        %5665 = vmatpush1.bf16.msra.mxu0 %v5574
        %5666 = vmatprep.subr.bf16.mxu0 0
        %5667 = vmatpush1.bf16.msra.mxu0 %v5575
        %5668 = vmatprep.subr.bf16.mxu0 0
        %5669 = vmatpush1.bf16.msra.mxu0 %v5576
        %5670 = vmatprep.subr.bf16.mxu0 0
        %5671 = vmatpush1.bf16.msra.mxu0 %v5577
        %5672 = vmatprep.subr.bf16.mxu0 0
        %5673 = vmatpush1.bf16.msra.mxu0 %v5578
        %5674 = vmatprep.subr.bf16.mxu0 0
        %5675 = vmatpush1.bf16.msra.mxu0 %v5579
        %5676 = vmatprep.subr.bf16.mxu0 0
        %5677 = vmatpush1.bf16.msra.mxu0 %v5580
        %5678 = vmatprep.subr.bf16.mxu0 0
        %5679 = vmatpush1.bf16.msra.mxu0 %v5581
        %5680 = vmatprep.subr.bf16.mxu0 0
        %5681 = vmatpush1.bf16.msra.mxu0 %v5582
        %5682 = vmatprep.subr.bf16.mxu0 0
        %5683 = vmatpush1.bf16.msra.mxu0 %v5583
        %5684 = vmatprep.subr.bf16.mxu0 0
        %5685 = vmatpush1.bf16.msra.mxu0 %v5584
        %5686 = vmatprep.subr.bf16.mxu0 0
        %5687 = vmatpush1.bf16.msra.mxu0 %v5585
        %5688 = vmatprep.subr.bf16.mxu0 0
        %5689 = vmatpush1.bf16.msra.mxu0 %v5586
        %5690 = vmatprep.subr.bf16.mxu0 0
        %5691 = vmatpush1.bf16.msra.mxu0 %v5587
        %5692 = vmatprep.subr.bf16.mxu0 0
        %5693 = vmatpush1.bf16.msra.mxu0 %v5588
        %5694 = vmatprep.mubr.bf16.mxu0 %v5357
        %5695 = vmatmul.mubr.bf16.gmra.mrb[0].mxu0 %v5356
        %v5696 = vpop.f32.mrb[0].mxu0
        %v5697 = vadd.f32 %v5656, %v5696
        %v5698 = vpop.f32.mrb[0].mxu0
        %v5699 = vpop.f32.mrb[0].mxu0
        %v5700 = vadd.f32 %v5659, %v5699
        %v5701 = vpop.f32.mrb[0].mxu0
        %5702 = vdwg.mxu0
        %v5703 = vmax.f32 %v5697, 0.0
        %v5704 = vmax.f32 %v5700, 0.0
        %v5705 = vpack.c.bf16 %v5704, %v5703
        %v5706 = vld [vmem:[%s7] sm:$0xf]
        %v5707 = vld [vmem:[%s7 + $0x4] sm:$0xf]
        %v5708 = vld [vmem:[%s7 + $0x8] sm:$0xf]
        %v5709 = vld [vmem:[%s7 + $0xc] sm:$0xf]
        %v5710 = vld [vmem:[%s7 + $0x10] sm:$0xf]
        %v5711 = vld [vmem:[%s7 + $0x14] sm:$0xf]
        %v5712 = vld [vmem:[%s7 + $0x18] sm:$0xf]
        %v5713 = vld [vmem:[%s7 + $0x1c] sm:$0xf]
        %v5714 = vld [vmem:[%s7 + $0x20] sm:$0xf]
        %v5715 = vld [vmem:[%s7 + $0x24] sm:$0xf]
        %v5716 = vld [vmem:[%s7 + $0x28] sm:$0xf]
        %v5717 = vld [vmem:[%s7 + $0x2c] sm:$0xf]
        %v5718 = vld [vmem:[%s7 + $0x30] sm:$0xf]
        %v5719 = vld [vmem:[%s7 + $0x34] sm:$0xf]
        %v5720 = vld [vmem:[%s7 + $0x38] sm:$0xf]
        %v5721 = vld [vmem:[%s7 + $0x3c] sm:$0xf]
        %v5722 = vld [vmem:[%s8] sm:$0x1]
        %v5724 = vlaneseq
        %v5725 = vshrl.u32 %v5724, 7
        %v5726 = vsub.s32 0, %v5725
        %v5727 = vrot.slane %v5722, %v5726
        %v5745 = vunpack.c.l.b16 %v5706
        %v5746 = vunpack.c.l.b16 %v5707
        %v5747 = vunpack.c.l.b16 %v5708
        %v5748 = vunpack.c.l.b16 %v5709
        %v5749 = vunpack.c.l.b16 %v5710
        %v5750 = vunpack.c.l.b16 %v5711
        %v5751 = vunpack.c.l.b16 %v5712
        %v5752 = vunpack.c.l.b16 %v5713
        %v5753 = vunpack.c.l.b16 %v5714
        %v5754 = vunpack.c.l.b16 %v5715
        %v5755 = vunpack.c.l.b16 %v5716
        %v5756 = vunpack.c.l.b16 %v5717
        %v5757 = vunpack.c.l.b16 %v5718
        %v5758 = vunpack.c.l.b16 %v5719
        %v5759 = vunpack.c.l.b16 %v5720
        %v5760 = vunpack.c.l.b16 %v5721
        %v5761 = vpack.c.b16 %v5746, %v5745
        %v5762 = vpack.c.b16 %v5748, %v5747
        %v5763 = vpack.c.b16 %v5750, %v5749
        %v5764 = vpack.c.b16 %v5752, %v5751
        %v5765 = vpack.c.b16 %v5754, %v5753
        %v5766 = vpack.c.b16 %v5756, %v5755
        %v5767 = vpack.c.b16 %v5758, %v5757
        %v5768 = vpack.c.b16 %v5760, %v5759
        %5777 = vmatprep.subr.bf16.mxu0 0
        %5778 = vmatpush1.bf16.msra.mxu0 %v5761
        %5779 = vmatprep.subr.bf16.mxu0 0
        %5780 = vmatpush1.bf16.msra.mxu0 %v5762
        %5781 = vmatprep.subr.bf16.mxu0 0
        %5782 = vmatpush1.bf16.msra.mxu0 %v5763
        %5783 = vmatprep.subr.bf16.mxu0 0
        %5784 = vmatpush1.bf16.msra.mxu0 %v5764
        %5785 = vmatprep.subr.bf16.mxu0 0
        %5786 = vmatpush1.bf16.msra.mxu0 %v5765
        %5787 = vmatprep.subr.bf16.mxu0 0
        %5788 = vmatpush1.bf16.msra.mxu0 %v5766
        %5789 = vmatprep.subr.bf16.mxu0 0
        %5790 = vmatpush1.bf16.msra.mxu0 %v5767
        %5791 = vmatprep.subr.bf16.mxu0 0
        %5792 = vmatpush1.bf16.msra.mxu0 %v5768
        %5793 = vmatprep.subr.bf16.mxu0 0
        %5794 = vmatpush1.bf16.msra.mxu0 0
        %5795 = vmatprep.subr.bf16.mxu0 0
        %5796 = vmatpush1.bf16.msra.mxu0 0
        %5797 = vmatprep.subr.bf16.mxu0 0
        %5798 = vmatpush1.bf16.msra.mxu0 0
        %5799 = vmatprep.subr.bf16.mxu0 0
        %5800 = vmatpush1.bf16.msra.mxu0 0
        %5801 = vmatprep.subr.bf16.mxu0 0
        %5802 = vmatpush1.bf16.msra.mxu0 0
        %5803 = vmatprep.subr.bf16.mxu0 0
        %5804 = vmatpush1.bf16.msra.mxu0 0
        %5805 = vmatprep.subr.bf16.mxu0 0
        %5806 = vmatpush1.bf16.msra.mxu0 0
        %5807 = vmatprep.subr.bf16.mxu0 0
        %5808 = vmatpush1.bf16.msra.mxu0 0
        %5809 = vmatprep.mubr.bf16.mxu0 0
        %5810 = vmatmul.mubr.bf16.gmra.mrb[0].mxu0 %v5705
        %v5811 = vpop.f32.mrb[0].mxu0
        %v5812 = vadd.f32 %v5727, %v5811
        %v5813 = vpop.f32.mrb[0].mxu0
        %v5814 = vpop.f32.mrb[0].mxu0
        %v5815 = vadd.f32 %v5727, %v5814
        %v5816 = vpop.f32.mrb[0].mxu0
        %5817 = vdwg.mxu0
        %5818 = vst [vmem:[%s461] sm:$0xff] %v5812
        %5819 = vst [vmem:[%s461 + $0x8] sm:$0xff] %v5815
        %s5820 = smul.u32 2, %s20
        %p5821 = scmp.lt.s32.totalorder %s5820, 3
        %s5822 = scalar_select %p5821, %s5820, 3
        %s5823 = smul.addr %s5822, 8
        %s5824 = scalar_lea.vmem %s9, %s5823
        // Predicated region
        $region95: #{forward.1} parent=89 // pred_check
          %p5825 = pneg %p232
        $region96: #{forward.1} parent=89 // pred_check_branch
          %5827 = sbr.rel (%p5825) target = $region98
        $region97: #{forward.1} parent=89 // pred_region
          %s5828 = smul.u32 2, %s20
        $region98: #{forward.1} parent=89 // pred_fallthru
          _
      $region90: #{forward.1} parent=5 // pred_fallthru
        _
      %p5829 = scmp.le.s32.totalorder 2, %s15
      // Predicated region
      $region99: #{forward.1} parent=5 // pred_check
        %p5830 = pneg %p5829
      $region100: #{forward.1} parent=5 // pred_check_branch
        %5832 = sbr.rel (%p5830) target = $region102
      $region101: #{forward.1} parent=5 // pred_region
        %s5833 = ssub.s32 %s15, 2
        // Predicated region
        $region103: #{forward.1} parent=101 // pred_check
          %p5834 = pneg %p238
        $region104: #{forward.1} parent=101 // pred_check_branch
          %5836 = sbr.rel (%p5834) target = $region106
        $region105: #{forward.1} parent=101 // pred_region
          %s5837 = smul.u32 2, %s21
          %p5838 = scmp.lt.s32.totalorder %s5837, 3
          %s5839 = scalar_select %p5838, %s5837, 3
          %s5840 = smul.addr %s5839, 8
          %s5841 = scalar_lea.vmem %s9, %s5840
        $region106: #{forward.1} parent=101 // pred_fallthru
          _
      $region102: #{forward.1} parent=5 // pred_fallthru
        _
    $region6: #{forward.1} parent=1 // loop_footer
      %s19 = sadd.s32 1, %s15
    $region7: #{forward.1} parent=1 // loop_footer_branch
      %14 = sbr.rel target = $region3
    $region8: #{forward.1} parent=1 // loop_exit
      _

</llo_original>
